<compile_context>
chip_gen: v7x
topology: tpu7x:2x2x1
jax: 0.10.0
libtpu: 0.0.40
codegen_flags: <defaults>
</compile_context>

<pallas_src>
import functools
import math

import jax
import jax.numpy as jnp
from jax.experimental import pallas as pl
from jax.experimental.pallas import tpu as pltpu

# ---- small synthetic "bert-base-cased"-like config ----
VOCAB_SIZE = 100
MAX_POS = 16
TYPE_VOCAB = 2
HIDDEN = 32
NUM_LAYERS = 2
NUM_HEADS = 4
HEAD_DIM = HIDDEN // NUM_HEADS
INTERMEDIATE = 64
N_CLASSES = 3
LN_EPS = 1e-12
N_PAD = 128          # lane-padded classifier output width (sliced back to N_CLASSES)


# --------------------------------------------------------------------------
# In-kernel helpers
# --------------------------------------------------------------------------
def _mm(a, w):
    # bf16 MXU inputs, f32 accumulation: full-rate path on v6e/v7x, harmless on v5e.
    return jnp.dot(a.astype(jnp.bfloat16), w.astype(jnp.bfloat16),
                   preferred_element_type=jnp.float32)


def _ln(x, g, b, eps):
    # biased variance, matching torch.nn.LayerNorm; all f32.
    mu = jnp.mean(x, axis=-1, keepdims=True)
    xc = x - mu
    var = jnp.mean(xc * xc, axis=-1, keepdims=True)
    return xc * jax.lax.rsqrt(var + eps) * g + b


# --------------------------------------------------------------------------
# Single fused kernel: embeddings LN -> NUM_LAYERS encoder layers -> pooler -> head
# One grid step per batch element; all intermediates stay in VMEM / vregs.
#
# refs layout (positional):
#   [0] word_e (S,H)  [1] type_e (S,H)  [2] pos_e (S,H)  [3] add_mask (1,S)
#   [4] emb_ln_g (1,H) [5] emb_ln_b (1,H)
#   then num_layers groups of 12:
#     wqkv(H,3H), bqkv(1,3H), wo(H,H), bo(1,H), ln1_g(1,H), ln1_b(1,H),
#     wi(H,I), bi(1,I), wo2(I,H), bo2(1,H), ln2_g(1,H), ln2_b(1,H)
#   then wp(H,H), bp(1,H), wc(H,N_PAD), bc(1,N_PAD)
#   then out_ref (1,N_PAD), ctx_scratch (S,H)
# --------------------------------------------------------------------------
def _fused_forward_kernel(*refs, num_layers, num_heads, head_dim, eps):
    ctx_ref = refs[-1]              # VMEM scratch: per-layer attention context
    out_ref = refs[-2]              # (1, N_PAD) lane-dense logits
    word_ref, type_ref, pos_ref, mask_ref, eg_ref, eb_ref = refs[:6]
    head_base = 6 + 12 * num_layers
    wp, bp, wc, bc = (refs[head_base + i][...] for i in range(4))

    H = num_heads * head_dim
    scale = 1.0 / math.sqrt(head_dim)
    mask = mask_ref[...]                                     # (1, S) additive mask

    # ---- embeddings: sum + LayerNorm ----
    x = _ln(word_ref[...] + type_ref[...] + pos_ref[...], eg_ref[...], eb_ref[...], eps)

    # ---- encoder layers ----
    for l in range(num_layers):
        base = 6 + 12 * l
        (wqkv, bqkv, wo, bo, g1, b1,
         wi, bi, wo2, bo2, g2, b2) = (refs[base + i][...] for i in range(12))

        # fused Q|K|V projection: one MXU call with N = 3H
        qkv = _mm(x, wqkv) + bqkv                            # (S, 3H)

        # per-head attention via static lane slices (no transposes, no extra calls)
        for h in range(num_heads):
            lo, hi = h * head_dim, (h + 1) * head_dim
            q = qkv[:, lo:hi]
            k = qkv[:, H + lo:H + hi]
            v = qkv[:, 2 * H + lo:2 * H + hi]
            s = jnp.dot(q.astype(jnp.bfloat16), k.astype(jnp.bfloat16).T,
                        preferred_element_type=jnp.float32) * scale + mask
            s = s - jnp.max(s, axis=-1, keepdims=True)
            p = jnp.exp(s)
            p = p / jnp.sum(p, axis=-1, keepdims=True)
            ctx_ref[:, lo:hi] = jnp.dot(p.astype(jnp.bfloat16), v.astype(jnp.bfloat16),
                                        preferred_element_type=jnp.float32)

        # attention output projection + residual + LayerNorm
        attn = _mm(ctx_ref[...], wo) + bo
        x = _ln(attn + x, g1, b1, eps)

        # FFN: Linear -> exact erf GELU (matches HF BERT) -> Linear -> residual + LN
        inter = _mm(x, wi) + bi
        inter = 0.5 * inter * (1.0 + jax.lax.erf(inter * (1.0 / math.sqrt(2.0))))
        ffn = _mm(inter, wo2) + bo2
        x = _ln(ffn + x, g2, b2, eps)

    # ---- pooler(tanh) + dropout(identity, eval) + classifier ----
    # Pooler is row-wise; compute over the full (S,H) tile (keeps matmul M=8-aligned)
    # and keep only the [CLS] row. Lane-padded output => full-lane (unmasked) store.
    # TODO(synk): nn.Dropout(p=0.3) is identity in eval mode (inference path); no
    # torch-RNG-matched training-mode dropout is applied.
    pooled = jnp.tanh(_mm(x, wp) + bp)                       # (S, H)
    logits = _mm(pooled, wc) + bc                            # (S, N_PAD)
    out_ref[...] = logits[0:1, :]                            # [CLS] row -> (1, N_PAD)


def pallas_sentiment_forward(params, word_e, type_e, pos_e, add_mask):
    B, S, H = word_e.shape
    I = params["layers"][0]["wi"].shape[1]

    def full2d(r, c):
        return pl.BlockSpec((r, c), lambda b: (0, 0))

    in_specs = [
        pl.BlockSpec((None, S, H), lambda b: (b, 0, 0)),     # word_e
        pl.BlockSpec((None, S, H), lambda b: (b, 0, 0)),     # type_e
        pl.BlockSpec((S, H), lambda b: (0, 0)),              # pos_e
        pl.BlockSpec((None, 1, S), lambda b: (b, 0, 0)),     # additive mask
        full2d(1, H), full2d(1, H),                          # emb LN gamma/beta
    ]
    args = [word_e, type_e, pos_e, add_mask,
            params["emb_ln_g"].reshape(1, H), params["emb_ln_b"].reshape(1, H)]

    for lp in params["layers"]:
        in_specs += [
            full2d(H, 3 * H), full2d(1, 3 * H),              # wqkv, bqkv
            full2d(H, H), full2d(1, H),                      # wo, bo
            full2d(1, H), full2d(1, H),                      # ln1 gamma/beta
            full2d(H, I), full2d(1, I),                      # wi, bi
            full2d(I, H), full2d(1, H),                      # wo2, bo2
            full2d(1, H), full2d(1, H),                      # ln2 gamma/beta
        ]
        args += [
            lp["wqkv"], lp["bqkv"].reshape(1, 3 * H),
            lp["wo"], lp["bo"].reshape(1, H),
            lp["ln1_g"].reshape(1, H), lp["ln1_b"].reshape(1, H),
            lp["wi"], lp["bi"].reshape(1, I),
            lp["wo2"], lp["bo2"].reshape(1, H),
            lp["ln2_g"].reshape(1, H), lp["ln2_b"].reshape(1, H),
        ]

    in_specs += [full2d(H, H), full2d(1, H),                 # pooler wp, bp
                 full2d(H, N_PAD), full2d(1, N_PAD)]         # classifier (lane-padded)
    args += [params["wp"], params["bp"].reshape(1, H),
             params["wc_pad"], params["bc_pad"].reshape(1, N_PAD)]

    logits_pad = pl.pallas_call(
        functools.partial(_fused_forward_kernel,
                          num_layers=len(params["layers"]),
                          num_heads=NUM_HEADS, head_dim=HEAD_DIM, eps=LN_EPS),
        out_shape=jax.ShapeDtypeStruct((B, 1, N_PAD), jnp.float32),
        grid=(B,),
        in_specs=in_specs,
        out_specs=pl.BlockSpec((None, 1, N_PAD), lambda b: (b, 0, 0)),
        scratch_shapes=[pltpu.VMEM((S, H), jnp.float32)],    # attention context buffer
        compiler_params=pltpu.CompilerParams(dimension_semantics=("parallel",)),
    )(*args)
    return logits_pad[:, 0, :N_CLASSES]


# --------------------------------------------------------------------------
# Deterministic synthetic parameters (shapes follow the module's __init__)
# --------------------------------------------------------------------------
def init_params(key):
    keys = iter(jax.random.split(key, 64))

    def w(shape):
        return 0.02 * jax.random.normal(next(keys), shape, jnp.float32)

    def zeros(shape):
        return jnp.zeros(shape, jnp.float32)

    def ones(shape):
        return jnp.ones(shape, jnp.float32)

    # classifier weight/bias stored lane-padded (first N_CLASSES columns are real)
    wc = w((HIDDEN, N_CLASSES))
    wc_pad = jnp.zeros((HIDDEN, N_PAD), jnp.float32).at[:, :N_CLASSES].set(wc)
    bc_pad = jnp.zeros((N_PAD,), jnp.float32)

    params = {
        "word_emb": w((VOCAB_SIZE, HIDDEN)),
        "pos_emb": w((MAX_POS, HIDDEN)),
        "type_emb": w((TYPE_VOCAB, HIDDEN)),
        "emb_ln_g": ones((HIDDEN,)),
        "emb_ln_b": zeros((HIDDEN,)),
        "layers": [],
        "wp": w((HIDDEN, HIDDEN)), "bp": zeros((HIDDEN,)),       # pooler
        "wc_pad": wc_pad, "bc_pad": bc_pad,                      # nn.Linear(H, n_classes)
    }
    for _ in range(NUM_LAYERS):
        # Q|K|V fused: [H, 3H] = concat(wq, wk, wv) along out-features.
        wqkv = jnp.concatenate([w((HIDDEN, HIDDEN)) for _ in range(3)], axis=1)
        params["layers"].append({
            "wqkv": wqkv, "bqkv": zeros((3 * HIDDEN,)),
            "wo": w((HIDDEN, HIDDEN)), "bo": zeros((HIDDEN,)),
            "ln1_g": ones((HIDDEN,)), "ln1_b": zeros((HIDDEN,)),
            "wi": w((HIDDEN, INTERMEDIATE)), "bi": zeros((INTERMEDIATE,)),
            "wo2": w((INTERMEDIATE, HIDDEN)), "bo2": zeros((HIDDEN,)),
            "ln2_g": ones((HIDDEN,)), "ln2_b": zeros((HIDDEN,)),
        })
    return params


# --------------------------------------------------------------------------
# Forward pass:  _, pooled = bert(input_ids, attention_mask); out(drop(pooled))
# --------------------------------------------------------------------------
def sentiment_classifier_forward(params, input_ids, attention_mask):
    B, S = input_ids.shape

    # --- embedding gathers stay in JAX (data-dependent glue); everything else Pallas ---
    token_type_ids = jnp.zeros((B, S), jnp.int32)
    word_e = params["word_emb"][input_ids]                   # (B, S, H)
    type_e = params["type_emb"][token_type_ids]              # (B, S, H)
    pos_e = params["pos_emb"][:S]                            # (S, H)

    # extended attention mask: (1 - mask) * -10000, shape [B, 1, S]
    add_mask = ((1.0 - attention_mask.astype(jnp.float32)) * -10000.0).reshape(B, 1, S)

    # BERT-internal dropouts are identity in eval mode; omitted.
    return pallas_sentiment_forward(params, word_e, type_e, pos_e, add_mask)


if __name__ == "__main__":
    key = jax.random.PRNGKey(0)
    pkey, ikey = jax.random.split(key)

    params = init_params(pkey)

    B, S = 2, 8
    input_ids = jax.random.randint(ikey, (B, S), 0, VOCAB_SIZE, dtype=jnp.int32)
    attention_mask = jnp.array([[1, 1, 1, 1, 1, 1, 1, 1],
                                [1, 1, 1, 1, 1, 1, 0, 0]], dtype=jnp.int32)

    logits = sentiment_classifier_forward(params, input_ids, attention_mask)
    jax.block_until_ready(logits)
    assert logits.shape == (B, N_CLASSES)
    print("KERNEL_OK")
</pallas_src>

<mosaic_0001>
module attributes {stable_mosaic.version = 11 : i64} {
  func.func @_fused_forward_kernel(%arg0: i32, %arg1: memref<1x8x32xf32, #tpu.memory_space<vmem>>, %arg2: memref<1x8x32xf32, #tpu.memory_space<vmem>>, %arg3: memref<8x32xf32, #tpu.memory_space<vmem>>, %arg4: memref<1x1x8xf32, #tpu.memory_space<vmem>>, %arg5: memref<1x32xf32, #tpu.memory_space<vmem>>, %arg6: memref<1x32xf32, #tpu.memory_space<vmem>>, %arg7: memref<32x96xf32, #tpu.memory_space<vmem>>, %arg8: memref<1x96xf32, #tpu.memory_space<vmem>>, %arg9: memref<32x32xf32, #tpu.memory_space<vmem>>, %arg10: memref<1x32xf32, #tpu.memory_space<vmem>>, %arg11: memref<1x32xf32, #tpu.memory_space<vmem>>, %arg12: memref<1x32xf32, #tpu.memory_space<vmem>>, %arg13: memref<32x64xf32, #tpu.memory_space<vmem>>, %arg14: memref<1x64xf32, #tpu.memory_space<vmem>>, %arg15: memref<64x32xf32, #tpu.memory_space<vmem>>, %arg16: memref<1x32xf32, #tpu.memory_space<vmem>>, %arg17: memref<1x32xf32, #tpu.memory_space<vmem>>, %arg18: memref<1x32xf32, #tpu.memory_space<vmem>>, %arg19: memref<32x96xf32, #tpu.memory_space<vmem>>, %arg20: memref<1x96xf32, #tpu.memory_space<vmem>>, %arg21: memref<32x32xf32, #tpu.memory_space<vmem>>, %arg22: memref<1x32xf32, #tpu.memory_space<vmem>>, %arg23: memref<1x32xf32, #tpu.memory_space<vmem>>, %arg24: memref<1x32xf32, #tpu.memory_space<vmem>>, %arg25: memref<32x64xf32, #tpu.memory_space<vmem>>, %arg26: memref<1x64xf32, #tpu.memory_space<vmem>>, %arg27: memref<64x32xf32, #tpu.memory_space<vmem>>, %arg28: memref<1x32xf32, #tpu.memory_space<vmem>>, %arg29: memref<1x32xf32, #tpu.memory_space<vmem>>, %arg30: memref<1x32xf32, #tpu.memory_space<vmem>>, %arg31: memref<32x32xf32, #tpu.memory_space<vmem>>, %arg32: memref<1x32xf32, #tpu.memory_space<vmem>>, %arg33: memref<32x128xf32, #tpu.memory_space<vmem>>, %arg34: memref<1x128xf32, #tpu.memory_space<vmem>>, %arg35: memref<1x1x128xf32, #tpu.memory_space<vmem>>, %arg36: memref<8x32xf32, #tpu.memory_space<vmem>>) attributes {dimension_semantics = [#tpu.dimension_semantics<parallel>], iteration_bounds = array<i64: 2>, scalar_prefetch = 0 : i64, scratch_operands = 1 : i64, tpu.core_type = #tpu.core_type<tc>, window_params = [{transform_indices = @transform_0, window_bounds = array<i64: 1, 8, 32>}, {transform_indices = @transform_1, window_bounds = array<i64: 1, 8, 32>}, {pipeline_mode = #tpu.pipeline_mode<synchronous>, transform_indices = @transform_2, window_bounds = array<i64: 8, 32>}, {transform_indices = @transform_3, window_bounds = array<i64: 1, 1, 8>}, {pipeline_mode = #tpu.pipeline_mode<synchronous>, transform_indices = @transform_4, window_bounds = array<i64: 1, 32>}, {pipeline_mode = #tpu.pipeline_mode<synchronous>, transform_indices = @transform_5, window_bounds = array<i64: 1, 32>}, {pipeline_mode = #tpu.pipeline_mode<synchronous>, transform_indices = @transform_6, window_bounds = array<i64: 32, 96>}, {pipeline_mode = #tpu.pipeline_mode<synchronous>, transform_indices = @transform_7, window_bounds = array<i64: 1, 96>}, {pipeline_mode = #tpu.pipeline_mode<synchronous>, transform_indices = @transform_8, window_bounds = array<i64: 32, 32>}, {pipeline_mode = #tpu.pipeline_mode<synchronous>, transform_indices = @transform_9, window_bounds = array<i64: 1, 32>}, {pipeline_mode = #tpu.pipeline_mode<synchronous>, transform_indices = @transform_10, window_bounds = array<i64: 1, 32>}, {pipeline_mode = #tpu.pipeline_mode<synchronous>, transform_indices = @transform_11, window_bounds = array<i64: 1, 32>}, {pipeline_mode = #tpu.pipeline_mode<synchronous>, transform_indices = @transform_12, window_bounds = array<i64: 32, 64>}, {pipeline_mode = #tpu.pipeline_mode<synchronous>, transform_indices = @transform_13, window_bounds = array<i64: 1, 64>}, {pipeline_mode = #tpu.pipeline_mode<synchronous>, transform_indices = @transform_14, window_bounds = array<i64: 64, 32>}, {pipeline_mode = #tpu.pipeline_mode<synchronous>, transform_indices = @transform_15, window_bounds = array<i64: 1, 32>}, {pipeline_mode = #tpu.pipeline_mode<synchronous>, transform_indices = @transform_16, window_bounds = array<i64: 1, 32>}, {pipeline_mode = #tpu.pipeline_mode<synchronous>, transform_indices = @transform_17, window_bounds = array<i64: 1, 32>}, {pipeline_mode = #tpu.pipeline_mode<synchronous>, transform_indices = @transform_18, window_bounds = array<i64: 32, 96>}, {pipeline_mode = #tpu.pipeline_mode<synchronous>, transform_indices = @transform_19, window_bounds = array<i64: 1, 96>}, {pipeline_mode = #tpu.pipeline_mode<synchronous>, transform_indices = @transform_20, window_bounds = array<i64: 32, 32>}, {pipeline_mode = #tpu.pipeline_mode<synchronous>, transform_indices = @transform_21, window_bounds = array<i64: 1, 32>}, {pipeline_mode = #tpu.pipeline_mode<synchronous>, transform_indices = @transform_22, window_bounds = array<i64: 1, 32>}, {pipeline_mode = #tpu.pipeline_mode<synchronous>, transform_indices = @transform_23, window_bounds = array<i64: 1, 32>}, {pipeline_mode = #tpu.pipeline_mode<synchronous>, transform_indices = @transform_24, window_bounds = array<i64: 32, 64>}, {pipeline_mode = #tpu.pipeline_mode<synchronous>, transform_indices = @transform_25, window_bounds = array<i64: 1, 64>}, {pipeline_mode = #tpu.pipeline_mode<synchronous>, transform_indices = @transform_26, window_bounds = array<i64: 64, 32>}, {pipeline_mode = #tpu.pipeline_mode<synchronous>, transform_indices = @transform_27, window_bounds = array<i64: 1, 32>}, {pipeline_mode = #tpu.pipeline_mode<synchronous>, transform_indices = @transform_28, window_bounds = array<i64: 1, 32>}, {pipeline_mode = #tpu.pipeline_mode<synchronous>, transform_indices = @transform_29, window_bounds = array<i64: 1, 32>}, {pipeline_mode = #tpu.pipeline_mode<synchronous>, transform_indices = @transform_30, window_bounds = array<i64: 32, 32>}, {pipeline_mode = #tpu.pipeline_mode<synchronous>, transform_indices = @transform_31, window_bounds = array<i64: 1, 32>}, {pipeline_mode = #tpu.pipeline_mode<synchronous>, transform_indices = @transform_32, window_bounds = array<i64: 32, 128>}, {pipeline_mode = #tpu.pipeline_mode<synchronous>, transform_indices = @transform_33, window_bounds = array<i64: 1, 128>}, {transform_indices = @transform_34, window_bounds = array<i64: 1, 1, 128>}]} {
    %c0 = arith.constant 0 : index
    %c0_0 = arith.constant 0 : index
    %0 = vector.load %arg31[%c0, %c0_0] : memref<32x32xf32, #tpu.memory_space<vmem>>, vector<32x32xf32>
    %c0_1 = arith.constant 0 : index
    %c0_2 = arith.constant 0 : index
    %1 = vector.load %arg32[%c0_1, %c0_2] : memref<1x32xf32, #tpu.memory_space<vmem>>, vector<1x32xf32>
    %c0_3 = arith.constant 0 : index
    %c0_4 = arith.constant 0 : index
    %2 = vector.load %arg33[%c0_3, %c0_4] : memref<32x128xf32, #tpu.memory_space<vmem>>, vector<32x128xf32>
    %c0_5 = arith.constant 0 : index
    %c0_6 = arith.constant 0 : index
    %3 = vector.load %arg34[%c0_5, %c0_6] : memref<1x128xf32, #tpu.memory_space<vmem>>, vector<1x128xf32>
    %c0_7 = arith.constant 0 : index
    %c0_8 = arith.constant 0 : index
    %c0_9 = arith.constant 0 : index
    %4 = vector.load %arg4[%c0_7, %c0_8, %c0_9] : memref<1x1x8xf32, #tpu.memory_space<vmem>>, vector<1x1x8xf32>
    %5 = vector.shape_cast %4 : vector<1x1x8xf32> to vector<1x8xf32>
    %c0_10 = arith.constant 0 : index
    %c0_11 = arith.constant 0 : index
    %c0_12 = arith.constant 0 : index
    %6 = vector.load %arg1[%c0_10, %c0_11, %c0_12] : memref<1x8x32xf32, #tpu.memory_space<vmem>>, vector<1x8x32xf32>
    %7 = vector.shape_cast %6 : vector<1x8x32xf32> to vector<8x32xf32>
    %c0_13 = arith.constant 0 : index
    %c0_14 = arith.constant 0 : index
    %c0_15 = arith.constant 0 : index
    %8 = vector.load %arg2[%c0_13, %c0_14, %c0_15] : memref<1x8x32xf32, #tpu.memory_space<vmem>>, vector<1x8x32xf32>
    %9 = vector.shape_cast %8 : vector<1x8x32xf32> to vector<8x32xf32>
    %10 = arith.addf %7, %9 : vector<8x32xf32>
    %c0_16 = arith.constant 0 : index
    %c0_17 = arith.constant 0 : index
    %11 = vector.load %arg3[%c0_16, %c0_17] : memref<8x32xf32, #tpu.memory_space<vmem>>, vector<8x32xf32>
    %12 = arith.addf %10, %11 : vector<8x32xf32>
    %c0_18 = arith.constant 0 : index
    %c0_19 = arith.constant 0 : index
    %13 = vector.load %arg5[%c0_18, %c0_19] : memref<1x32xf32, #tpu.memory_space<vmem>>, vector<1x32xf32>
    %c0_20 = arith.constant 0 : index
    %c0_21 = arith.constant 0 : index
    %14 = vector.load %arg6[%c0_20, %c0_21] : memref<1x32xf32, #tpu.memory_space<vmem>>, vector<1x32xf32>
    %cst = arith.constant dense<0.000000e+00> : vector<8xf32>
    %15 = vector.multi_reduction <add>, %12, %cst [1] : vector<8x32xf32> to vector<8xf32>
    %16 = vector.shape_cast %15 : vector<8xf32> to vector<8x1xf32>
    %cst_22 = arith.constant 3.200000e+01 : f32
    %17 = vector.broadcast %cst_22 : f32 to vector<8x1xf32>
    %18 = arith.divf %16, %17 : vector<8x1xf32>
    %19 = vector.broadcast %18 : vector<8x1xf32> to vector<8x32xf32>
    %20 = arith.subf %12, %19 : vector<8x32xf32>
    %21 = arith.mulf %20, %20 : vector<8x32xf32>
    %cst_23 = arith.constant dense<0.000000e+00> : vector<8xf32>
    %22 = vector.multi_reduction <add>, %21, %cst_23 [1] : vector<8x32xf32> to vector<8xf32>
    %23 = vector.shape_cast %22 : vector<8xf32> to vector<8x1xf32>
    %cst_24 = arith.constant 3.200000e+01 : f32
    %24 = vector.broadcast %cst_24 : f32 to vector<8x1xf32>
    %25 = arith.divf %23, %24 : vector<8x1xf32>
    %cst_25 = arith.constant 9.99999996E-13 : f32
    %26 = vector.broadcast %cst_25 : f32 to vector<8x1xf32>
    %27 = arith.addf %25, %26 : vector<8x1xf32>
    %28 = math.rsqrt %27 : vector<8x1xf32>
    %29 = vector.broadcast %28 : vector<8x1xf32> to vector<8x32xf32>
    %30 = arith.mulf %20, %29 : vector<8x32xf32>
    %31 = vector.broadcast %13 : vector<1x32xf32> to vector<8x32xf32>
    %32 = arith.mulf %30, %31 : vector<8x32xf32>
    %33 = vector.broadcast %14 : vector<1x32xf32> to vector<8x32xf32>
    %34 = arith.addf %32, %33 : vector<8x32xf32>
    %c0_26 = arith.constant 0 : index
    %c0_27 = arith.constant 0 : index
    %35 = vector.load %arg7[%c0_26, %c0_27] : memref<32x96xf32, #tpu.memory_space<vmem>>, vector<32x96xf32>
    %c0_28 = arith.constant 0 : index
    %c0_29 = arith.constant 0 : index
    %36 = vector.load %arg8[%c0_28, %c0_29] : memref<1x96xf32, #tpu.memory_space<vmem>>, vector<1x96xf32>
    %c0_30 = arith.constant 0 : index
    %c0_31 = arith.constant 0 : index
    %37 = vector.load %arg9[%c0_30, %c0_31] : memref<32x32xf32, #tpu.memory_space<vmem>>, vector<32x32xf32>
    %c0_32 = arith.constant 0 : index
    %c0_33 = arith.constant 0 : index
    %38 = vector.load %arg10[%c0_32, %c0_33] : memref<1x32xf32, #tpu.memory_space<vmem>>, vector<1x32xf32>
    %c0_34 = arith.constant 0 : index
    %c0_35 = arith.constant 0 : index
    %39 = vector.load %arg11[%c0_34, %c0_35] : memref<1x32xf32, #tpu.memory_space<vmem>>, vector<1x32xf32>
    %c0_36 = arith.constant 0 : index
    %c0_37 = arith.constant 0 : index
    %40 = vector.load %arg12[%c0_36, %c0_37] : memref<1x32xf32, #tpu.memory_space<vmem>>, vector<1x32xf32>
    %c0_38 = arith.constant 0 : index
    %c0_39 = arith.constant 0 : index
    %41 = vector.load %arg13[%c0_38, %c0_39] : memref<32x64xf32, #tpu.memory_space<vmem>>, vector<32x64xf32>
    %c0_40 = arith.constant 0 : index
    %c0_41 = arith.constant 0 : index
    %42 = vector.load %arg14[%c0_40, %c0_41] : memref<1x64xf32, #tpu.memory_space<vmem>>, vector<1x64xf32>
    %c0_42 = arith.constant 0 : index
    %c0_43 = arith.constant 0 : index
    %43 = vector.load %arg15[%c0_42, %c0_43] : memref<64x32xf32, #tpu.memory_space<vmem>>, vector<64x32xf32>
    %c0_44 = arith.constant 0 : index
    %c0_45 = arith.constant 0 : index
    %44 = vector.load %arg16[%c0_44, %c0_45] : memref<1x32xf32, #tpu.memory_space<vmem>>, vector<1x32xf32>
    %c0_46 = arith.constant 0 : index
    %c0_47 = arith.constant 0 : index
    %45 = vector.load %arg17[%c0_46, %c0_47] : memref<1x32xf32, #tpu.memory_space<vmem>>, vector<1x32xf32>
    %c0_48 = arith.constant 0 : index
    %c0_49 = arith.constant 0 : index
    %46 = vector.load %arg18[%c0_48, %c0_49] : memref<1x32xf32, #tpu.memory_space<vmem>>, vector<1x32xf32>
    %47 = arith.truncf %34 : vector<8x32xf32> to vector<8x32xbf16>
    %48 = arith.truncf %35 : vector<32x96xf32> to vector<32x96xbf16>
    %cst_50 = arith.constant dense<0.000000e+00> : vector<8x96xf32>
    %49 = tpu.matmul %47, %48, %cst_50 {dimension_numbers = #tpu.dot_dimension_numbers<[1], [0], [0], [1], [0, 0, 1, 1], [], []>} : vector<8x32xbf16>, vector<32x96xbf16>, vector<8x96xf32> -> vector<8x96xf32>
    %50 = vector.broadcast %36 : vector<1x96xf32> to vector<8x96xf32>
    %51 = arith.addf %49, %50 : vector<8x96xf32>
    %52 = vector.extract_strided_slice %51 {offsets = [0, 0], sizes = [8, 8], strides = [1, 1]} : vector<8x96xf32> to vector<8x8xf32>
    %53 = vector.extract_strided_slice %51 {offsets = [0, 32], sizes = [8, 8], strides = [1, 1]} : vector<8x96xf32> to vector<8x8xf32>
    %54 = vector.extract_strided_slice %51 {offsets = [0, 64], sizes = [8, 8], strides = [1, 1]} : vector<8x96xf32> to vector<8x8xf32>
    %55 = arith.truncf %52 : vector<8x8xf32> to vector<8x8xbf16>
    %56 = arith.truncf %53 : vector<8x8xf32> to vector<8x8xbf16>
    %57 = tpu.transpose %56, [1, 0] : vector<8x8xbf16> -> vector<8x8xbf16>
    %cst_51 = arith.constant dense<0.000000e+00> : vector<8x8xf32>
    %58 = tpu.matmul %55, %57, %cst_51 {dimension_numbers = #tpu.dot_dimension_numbers<[1], [0], [0], [1], [0, 0, 1, 1], [], []>} : vector<8x8xbf16>, vector<8x8xbf16>, vector<8x8xf32> -> vector<8x8xf32>
    %cst_52 = arith.constant 0.353553385 : f32
    %59 = vector.broadcast %cst_52 : f32 to vector<8x8xf32>
    %60 = arith.mulf %58, %59 : vector<8x8xf32>
    %61 = vector.broadcast %5 : vector<1x8xf32> to vector<8x8xf32>
    %62 = arith.addf %60, %61 : vector<8x8xf32>
    %cst_53 = arith.constant dense<0xFF800000> : vector<8xf32>
    %63 = vector.multi_reduction <maximumf>, %62, %cst_53 [1] : vector<8x8xf32> to vector<8xf32>
    %64 = vector.shape_cast %63 : vector<8xf32> to vector<8x1xf32>
    %65 = vector.broadcast %64 : vector<8x1xf32> to vector<8x8xf32>
    %66 = arith.subf %62, %65 : vector<8x8xf32>
    %67 = math.exp %66 : vector<8x8xf32>
    %cst_54 = arith.constant dense<0.000000e+00> : vector<8xf32>
    %68 = vector.multi_reduction <add>, %67, %cst_54 [1] : vector<8x8xf32> to vector<8xf32>
    %69 = vector.shape_cast %68 : vector<8xf32> to vector<8x1xf32>
    %70 = vector.broadcast %69 : vector<8x1xf32> to vector<8x8xf32>
    %71 = arith.divf %67, %70 : vector<8x8xf32>
    %72 = arith.truncf %71 : vector<8x8xf32> to vector<8x8xbf16>
    %73 = arith.truncf %54 : vector<8x8xf32> to vector<8x8xbf16>
    %cst_55 = arith.constant dense<0.000000e+00> : vector<8x8xf32>
    %74 = tpu.matmul %72, %73, %cst_55 {dimension_numbers = #tpu.dot_dimension_numbers<[1], [0], [0], [1], [0, 0, 1, 1], [], []>} : vector<8x8xbf16>, vector<8x8xbf16>, vector<8x8xf32> -> vector<8x8xf32>
    %c0_56 = arith.constant 0 : index
    %c0_57 = arith.constant 0 : index
    %75 = vector.load %arg36[%c0_56, %c0_57] : memref<8x32xf32, #tpu.memory_space<vmem>>, vector<8x8xf32>
    tpu.vector_store %arg36[%c0_56, %c0_57], %74 {strides = array<i32>} : memref<8x32xf32, #tpu.memory_space<vmem>>, vector<8x8xf32>,
    %76 = vector.extract_strided_slice %51 {offsets = [0, 8], sizes = [8, 8], strides = [1, 1]} : vector<8x96xf32> to vector<8x8xf32>
    %77 = vector.extract_strided_slice %51 {offsets = [0, 40], sizes = [8, 8], strides = [1, 1]} : vector<8x96xf32> to vector<8x8xf32>
    %78 = vector.extract_strided_slice %51 {offsets = [0, 72], sizes = [8, 8], strides = [1, 1]} : vector<8x96xf32> to vector<8x8xf32>
    %79 = arith.truncf %76 : vector<8x8xf32> to vector<8x8xbf16>
    %80 = arith.truncf %77 : vector<8x8xf32> to vector<8x8xbf16>
    %81 = tpu.transpose %80, [1, 0] : vector<8x8xbf16> -> vector<8x8xbf16>
    %cst_58 = arith.constant dense<0.000000e+00> : vector<8x8xf32>
    %82 = tpu.matmul %79, %81, %cst_58 {dimension_numbers = #tpu.dot_dimension_numbers<[1], [0], [0], [1], [0, 0, 1, 1], [], []>} : vector<8x8xbf16>, vector<8x8xbf16>, vector<8x8xf32> -> vector<8x8xf32>
    %cst_59 = arith.constant 0.353553385 : f32
    %83 = vector.broadcast %cst_59 : f32 to vector<8x8xf32>
    %84 = arith.mulf %82, %83 : vector<8x8xf32>
    %85 = vector.broadcast %5 : vector<1x8xf32> to vector<8x8xf32>
    %86 = arith.addf %84, %85 : vector<8x8xf32>
    %cst_60 = arith.constant dense<0xFF800000> : vector<8xf32>
    %87 = vector.multi_reduction <maximumf>, %86, %cst_60 [1] : vector<8x8xf32> to vector<8xf32>
    %88 = vector.shape_cast %87 : vector<8xf32> to vector<8x1xf32>
    %89 = vector.broadcast %88 : vector<8x1xf32> to vector<8x8xf32>
    %90 = arith.subf %86, %89 : vector<8x8xf32>
    %91 = math.exp %90 : vector<8x8xf32>
    %cst_61 = arith.constant dense<0.000000e+00> : vector<8xf32>
    %92 = vector.multi_reduction <add>, %91, %cst_61 [1] : vector<8x8xf32> to vector<8xf32>
    %93 = vector.shape_cast %92 : vector<8xf32> to vector<8x1xf32>
    %94 = vector.broadcast %93 : vector<8x1xf32> to vector<8x8xf32>
    %95 = arith.divf %91, %94 : vector<8x8xf32>
    %96 = arith.truncf %95 : vector<8x8xf32> to vector<8x8xbf16>
    %97 = arith.truncf %78 : vector<8x8xf32> to vector<8x8xbf16>
    %cst_62 = arith.constant dense<0.000000e+00> : vector<8x8xf32>
    %98 = tpu.matmul %96, %97, %cst_62 {dimension_numbers = #tpu.dot_dimension_numbers<[1], [0], [0], [1], [0, 0, 1, 1], [], []>} : vector<8x8xbf16>, vector<8x8xbf16>, vector<8x8xf32> -> vector<8x8xf32>
    %c0_63 = arith.constant 0 : index
    %c8 = arith.constant 8 : index
    %99 = vector.load %arg36[%c0_63, %c8] : memref<8x32xf32, #tpu.memory_space<vmem>>, vector<8x8xf32>
    tpu.vector_store %arg36[%c0_63, %c8], %98 {strides = array<i32>} : memref<8x32xf32, #tpu.memory_space<vmem>>, vector<8x8xf32>,
    %100 = vector.extract_strided_slice %51 {offsets = [0, 16], sizes = [8, 8], strides = [1, 1]} : vector<8x96xf32> to vector<8x8xf32>
    %101 = vector.extract_strided_slice %51 {offsets = [0, 48], sizes = [8, 8], strides = [1, 1]} : vector<8x96xf32> to vector<8x8xf32>
    %102 = vector.extract_strided_slice %51 {offsets = [0, 80], sizes = [8, 8], strides = [1, 1]} : vector<8x96xf32> to vector<8x8xf32>
    %103 = arith.truncf %100 : vector<8x8xf32> to vector<8x8xbf16>
    %104 = arith.truncf %101 : vector<8x8xf32> to vector<8x8xbf16>
    %105 = tpu.transpose %104, [1, 0] : vector<8x8xbf16> -> vector<8x8xbf16>
    %cst_64 = arith.constant dense<0.000000e+00> : vector<8x8xf32>
    %106 = tpu.matmul %103, %105, %cst_64 {dimension_numbers = #tpu.dot_dimension_numbers<[1], [0], [0], [1], [0, 0, 1, 1], [], []>} : vector<8x8xbf16>, vector<8x8xbf16>, vector<8x8xf32> -> vector<8x8xf32>
    %cst_65 = arith.constant 0.353553385 : f32
    %107 = vector.broadcast %cst_65 : f32 to vector<8x8xf32>
    %108 = arith.mulf %106, %107 : vector<8x8xf32>
    %109 = vector.broadcast %5 : vector<1x8xf32> to vector<8x8xf32>
    %110 = arith.addf %108, %109 : vector<8x8xf32>
    %cst_66 = arith.constant dense<0xFF800000> : vector<8xf32>
    %111 = vector.multi_reduction <maximumf>, %110, %cst_66 [1] : vector<8x8xf32> to vector<8xf32>
    %112 = vector.shape_cast %111 : vector<8xf32> to vector<8x1xf32>
    %113 = vector.broadcast %112 : vector<8x1xf32> to vector<8x8xf32>
    %114 = arith.subf %110, %113 : vector<8x8xf32>
    %115 = math.exp %114 : vector<8x8xf32>
    %cst_67 = arith.constant dense<0.000000e+00> : vector<8xf32>
    %116 = vector.multi_reduction <add>, %115, %cst_67 [1] : vector<8x8xf32> to vector<8xf32>
    %117 = vector.shape_cast %116 : vector<8xf32> to vector<8x1xf32>
    %118 = vector.broadcast %117 : vector<8x1xf32> to vector<8x8xf32>
    %119 = arith.divf %115, %118 : vector<8x8xf32>
    %120 = arith.truncf %119 : vector<8x8xf32> to vector<8x8xbf16>
    %121 = arith.truncf %102 : vector<8x8xf32> to vector<8x8xbf16>
    %cst_68 = arith.constant dense<0.000000e+00> : vector<8x8xf32>
    %122 = tpu.matmul %120, %121, %cst_68 {dimension_numbers = #tpu.dot_dimension_numbers<[1], [0], [0], [1], [0, 0, 1, 1], [], []>} : vector<8x8xbf16>, vector<8x8xbf16>, vector<8x8xf32> -> vector<8x8xf32>
    %c0_69 = arith.constant 0 : index
    %c16 = arith.constant 16 : index
    %123 = vector.load %arg36[%c0_69, %c16] : memref<8x32xf32, #tpu.memory_space<vmem>>, vector<8x8xf32>
    tpu.vector_store %arg36[%c0_69, %c16], %122 {strides = array<i32>} : memref<8x32xf32, #tpu.memory_space<vmem>>, vector<8x8xf32>,
    %124 = vector.extract_strided_slice %51 {offsets = [0, 24], sizes = [8, 8], strides = [1, 1]} : vector<8x96xf32> to vector<8x8xf32>
    %125 = vector.extract_strided_slice %51 {offsets = [0, 56], sizes = [8, 8], strides = [1, 1]} : vector<8x96xf32> to vector<8x8xf32>
    %126 = vector.extract_strided_slice %51 {offsets = [0, 88], sizes = [8, 8], strides = [1, 1]} : vector<8x96xf32> to vector<8x8xf32>
    %127 = arith.truncf %124 : vector<8x8xf32> to vector<8x8xbf16>
    %128 = arith.truncf %125 : vector<8x8xf32> to vector<8x8xbf16>
    %129 = tpu.transpose %128, [1, 0] : vector<8x8xbf16> -> vector<8x8xbf16>
    %cst_70 = arith.constant dense<0.000000e+00> : vector<8x8xf32>
    %130 = tpu.matmul %127, %129, %cst_70 {dimension_numbers = #tpu.dot_dimension_numbers<[1], [0], [0], [1], [0, 0, 1, 1], [], []>} : vector<8x8xbf16>, vector<8x8xbf16>, vector<8x8xf32> -> vector<8x8xf32>
    %cst_71 = arith.constant 0.353553385 : f32
    %131 = vector.broadcast %cst_71 : f32 to vector<8x8xf32>
    %132 = arith.mulf %130, %131 : vector<8x8xf32>
    %133 = vector.broadcast %5 : vector<1x8xf32> to vector<8x8xf32>
    %134 = arith.addf %132, %133 : vector<8x8xf32>
    %cst_72 = arith.constant dense<0xFF800000> : vector<8xf32>
    %135 = vector.multi_reduction <maximumf>, %134, %cst_72 [1] : vector<8x8xf32> to vector<8xf32>
    %136 = vector.shape_cast %135 : vector<8xf32> to vector<8x1xf32>
    %137 = vector.broadcast %136 : vector<8x1xf32> to vector<8x8xf32>
    %138 = arith.subf %134, %137 : vector<8x8xf32>
    %139 = math.exp %138 : vector<8x8xf32>
    %cst_73 = arith.constant dense<0.000000e+00> : vector<8xf32>
    %140 = vector.multi_reduction <add>, %139, %cst_73 [1] : vector<8x8xf32> to vector<8xf32>
    %141 = vector.shape_cast %140 : vector<8xf32> to vector<8x1xf32>
    %142 = vector.broadcast %141 : vector<8x1xf32> to vector<8x8xf32>
    %143 = arith.divf %139, %142 : vector<8x8xf32>
    %144 = arith.truncf %143 : vector<8x8xf32> to vector<8x8xbf16>
    %145 = arith.truncf %126 : vector<8x8xf32> to vector<8x8xbf16>
    %cst_74 = arith.constant dense<0.000000e+00> : vector<8x8xf32>
    %146 = tpu.matmul %144, %145, %cst_74 {dimension_numbers = #tpu.dot_dimension_numbers<[1], [0], [0], [1], [0, 0, 1, 1], [], []>} : vector<8x8xbf16>, vector<8x8xbf16>, vector<8x8xf32> -> vector<8x8xf32>
    %c0_75 = arith.constant 0 : index
    %c24 = arith.constant 24 : index
    %147 = vector.load %arg36[%c0_75, %c24] : memref<8x32xf32, #tpu.memory_space<vmem>>, vector<8x8xf32>
    tpu.vector_store %arg36[%c0_75, %c24], %146 {strides = array<i32>} : memref<8x32xf32, #tpu.memory_space<vmem>>, vector<8x8xf32>,
    %c0_76 = arith.constant 0 : index
    %c0_77 = arith.constant 0 : index
    %148 = vector.load %arg36[%c0_76, %c0_77] : memref<8x32xf32, #tpu.memory_space<vmem>>, vector<8x32xf32>
    %149 = arith.truncf %148 : vector<8x32xf32> to vector<8x32xbf16>
    %150 = arith.truncf %37 : vector<32x32xf32> to vector<32x32xbf16>
    %cst_78 = arith.constant dense<0.000000e+00> : vector<8x32xf32>
    %151 = tpu.matmul %149, %150, %cst_78 {dimension_numbers = #tpu.dot_dimension_numbers<[1], [0], [0], [1], [0, 0, 1, 1], [], []>} : vector<8x32xbf16>, vector<32x32xbf16>, vector<8x32xf32> -> vector<8x32xf32>
    %152 = vector.broadcast %38 : vector<1x32xf32> to vector<8x32xf32>
    %153 = arith.addf %151, %152 : vector<8x32xf32>
    %154 = arith.addf %153, %34 : vector<8x32xf32>
    %cst_79 = arith.constant dense<0.000000e+00> : vector<8xf32>
    %155 = vector.multi_reduction <add>, %154, %cst_79 [1] : vector<8x32xf32> to vector<8xf32>
    %156 = vector.shape_cast %155 : vector<8xf32> to vector<8x1xf32>
    %cst_80 = arith.constant 3.200000e+01 : f32
    %157 = vector.broadcast %cst_80 : f32 to vector<8x1xf32>
    %158 = arith.divf %156, %157 : vector<8x1xf32>
    %159 = vector.broadcast %158 : vector<8x1xf32> to vector<8x32xf32>
    %160 = arith.subf %154, %159 : vector<8x32xf32>
    %161 = arith.mulf %160, %160 : vector<8x32xf32>
    %cst_81 = arith.constant dense<0.000000e+00> : vector<8xf32>
    %162 = vector.multi_reduction <add>, %161, %cst_81 [1] : vector<8x32xf32> to vector<8xf32>
    %163 = vector.shape_cast %162 : vector<8xf32> to vector<8x1xf32>
    %cst_82 = arith.constant 3.200000e+01 : f32
    %164 = vector.broadcast %cst_82 : f32 to vector<8x1xf32>
    %165 = arith.divf %163, %164 : vector<8x1xf32>
    %cst_83 = arith.constant 9.99999996E-13 : f32
    %166 = vector.broadcast %cst_83 : f32 to vector<8x1xf32>
    %167 = arith.addf %165, %166 : vector<8x1xf32>
    %168 = math.rsqrt %167 : vector<8x1xf32>
    %169 = vector.broadcast %168 : vector<8x1xf32> to vector<8x32xf32>
    %170 = arith.mulf %160, %169 : vector<8x32xf32>
    %171 = vector.broadcast %39 : vector<1x32xf32> to vector<8x32xf32>
    %172 = arith.mulf %170, %171 : vector<8x32xf32>
    %173 = vector.broadcast %40 : vector<1x32xf32> to vector<8x32xf32>
    %174 = arith.addf %172, %173 : vector<8x32xf32>
    %175 = arith.truncf %174 : vector<8x32xf32> to vector<8x32xbf16>
    %176 = arith.truncf %41 : vector<32x64xf32> to vector<32x64xbf16>
    %cst_84 = arith.constant dense<0.000000e+00> : vector<8x64xf32>
    %177 = tpu.matmul %175, %176, %cst_84 {dimension_numbers = #tpu.dot_dimension_numbers<[1], [0], [0], [1], [0, 0, 1, 1], [], []>} : vector<8x32xbf16>, vector<32x64xbf16>, vector<8x64xf32> -> vector<8x64xf32>
    %178 = vector.broadcast %42 : vector<1x64xf32> to vector<8x64xf32>
    %179 = arith.addf %177, %178 : vector<8x64xf32>
    %cst_85 = arith.constant 5.000000e-01 : f32
    %180 = vector.broadcast %cst_85 : f32 to vector<8x64xf32>
    %181 = arith.mulf %180, %179 : vector<8x64xf32>
    %cst_86 = arith.constant 0.707106769 : f32
    %182 = vector.broadcast %cst_86 : f32 to vector<8x64xf32>
    %183 = arith.mulf %179, %182 : vector<8x64xf32>
    %184 = math.erf %183 : vector<8x64xf32>
    %cst_87 = arith.constant 1.000000e+00 : f32
    %185 = vector.broadcast %cst_87 : f32 to vector<8x64xf32>
    %186 = arith.addf %185, %184 : vector<8x64xf32>
    %187 = arith.mulf %181, %186 : vector<8x64xf32>
    %188 = arith.truncf %187 : vector<8x64xf32> to vector<8x64xbf16>
    %189 = arith.truncf %43 : vector<64x32xf32> to vector<64x32xbf16>
    %cst_88 = arith.constant dense<0.000000e+00> : vector<8x32xf32>
    %190 = tpu.matmul %188, %189, %cst_88 {dimension_numbers = #tpu.dot_dimension_numbers<[1], [0], [0], [1], [0, 0, 1, 1], [], []>} : vector<8x64xbf16>, vector<64x32xbf16>, vector<8x32xf32> -> vector<8x32xf32>
    %191 = vector.broadcast %44 : vector<1x32xf32> to vector<8x32xf32>
    %192 = arith.addf %190, %191 : vector<8x32xf32>
    %193 = arith.addf %192, %174 : vector<8x32xf32>
    %cst_89 = arith.constant dense<0.000000e+00> : vector<8xf32>
    %194 = vector.multi_reduction <add>, %193, %cst_89 [1] : vector<8x32xf32> to vector<8xf32>
    %195 = vector.shape_cast %194 : vector<8xf32> to vector<8x1xf32>
    %cst_90 = arith.constant 3.200000e+01 : f32
    %196 = vector.broadcast %cst_90 : f32 to vector<8x1xf32>
    %197 = arith.divf %195, %196 : vector<8x1xf32>
    %198 = vector.broadcast %197 : vector<8x1xf32> to vector<8x32xf32>
    %199 = arith.subf %193, %198 : vector<8x32xf32>
    %200 = arith.mulf %199, %199 : vector<8x32xf32>
    %cst_91 = arith.constant dense<0.000000e+00> : vector<8xf32>
    %201 = vector.multi_reduction <add>, %200, %cst_91 [1] : vector<8x32xf32> to vector<8xf32>
    %202 = vector.shape_cast %201 : vector<8xf32> to vector<8x1xf32>
    %cst_92 = arith.constant 3.200000e+01 : f32
    %203 = vector.broadcast %cst_92 : f32 to vector<8x1xf32>
    %204 = arith.divf %202, %203 : vector<8x1xf32>
    %cst_93 = arith.constant 9.99999996E-13 : f32
    %205 = vector.broadcast %cst_93 : f32 to vector<8x1xf32>
    %206 = arith.addf %204, %205 : vector<8x1xf32>
    %207 = math.rsqrt %206 : vector<8x1xf32>
    %208 = vector.broadcast %207 : vector<8x1xf32> to vector<8x32xf32>
    %209 = arith.mulf %199, %208 : vector<8x32xf32>
    %210 = vector.broadcast %45 : vector<1x32xf32> to vector<8x32xf32>
    %211 = arith.mulf %209, %210 : vector<8x32xf32>
    %212 = vector.broadcast %46 : vector<1x32xf32> to vector<8x32xf32>
    %213 = arith.addf %211, %212 : vector<8x32xf32>
    %c0_94 = arith.constant 0 : index
    %c0_95 = arith.constant 0 : index
    %214 = vector.load %arg19[%c0_94, %c0_95] : memref<32x96xf32, #tpu.memory_space<vmem>>, vector<32x96xf32>
    %c0_96 = arith.constant 0 : index
    %c0_97 = arith.constant 0 : index
    %215 = vector.load %arg20[%c0_96, %c0_97] : memref<1x96xf32, #tpu.memory_space<vmem>>, vector<1x96xf32>
    %c0_98 = arith.constant 0 : index
    %c0_99 = arith.constant 0 : index
    %216 = vector.load %arg21[%c0_98, %c0_99] : memref<32x32xf32, #tpu.memory_space<vmem>>, vector<32x32xf32>
    %c0_100 = arith.constant 0 : index
    %c0_101 = arith.constant 0 : index
    %217 = vector.load %arg22[%c0_100, %c0_101] : memref<1x32xf32, #tpu.memory_space<vmem>>, vector<1x32xf32>
    %c0_102 = arith.constant 0 : index
    %c0_103 = arith.constant 0 : index
    %218 = vector.load %arg23[%c0_102, %c0_103] : memref<1x32xf32, #tpu.memory_space<vmem>>, vector<1x32xf32>
    %c0_104 = arith.constant 0 : index
    %c0_105 = arith.constant 0 : index
    %219 = vector.load %arg24[%c0_104, %c0_105] : memref<1x32xf32, #tpu.memory_space<vmem>>, vector<1x32xf32>
    %c0_106 = arith.constant 0 : index
    %c0_107 = arith.constant 0 : index
    %220 = vector.load %arg25[%c0_106, %c0_107] : memref<32x64xf32, #tpu.memory_space<vmem>>, vector<32x64xf32>
    %c0_108 = arith.constant 0 : index
    %c0_109 = arith.constant 0 : index
    %221 = vector.load %arg26[%c0_108, %c0_109] : memref<1x64xf32, #tpu.memory_space<vmem>>, vector<1x64xf32>
    %c0_110 = arith.constant 0 : index
    %c0_111 = arith.constant 0 : index
    %222 = vector.load %arg27[%c0_110, %c0_111] : memref<64x32xf32, #tpu.memory_space<vmem>>, vector<64x32xf32>
    %c0_112 = arith.constant 0 : index
    %c0_113 = arith.constant 0 : index
    %223 = vector.load %arg28[%c0_112, %c0_113] : memref<1x32xf32, #tpu.memory_space<vmem>>, vector<1x32xf32>
    %c0_114 = arith.constant 0 : index
    %c0_115 = arith.constant 0 : index
    %224 = vector.load %arg29[%c0_114, %c0_115] : memref<1x32xf32, #tpu.memory_space<vmem>>, vector<1x32xf32>
    %c0_116 = arith.constant 0 : index
    %c0_117 = arith.constant 0 : index
    %225 = vector.load %arg30[%c0_116, %c0_117] : memref<1x32xf32, #tpu.memory_space<vmem>>, vector<1x32xf32>
    %226 = arith.truncf %213 : vector<8x32xf32> to vector<8x32xbf16>
    %227 = arith.truncf %214 : vector<32x96xf32> to vector<32x96xbf16>
    %cst_118 = arith.constant dense<0.000000e+00> : vector<8x96xf32>
    %228 = tpu.matmul %226, %227, %cst_118 {dimension_numbers = #tpu.dot_dimension_numbers<[1], [0], [0], [1], [0, 0, 1, 1], [], []>} : vector<8x32xbf16>, vector<32x96xbf16>, vector<8x96xf32> -> vector<8x96xf32>
    %229 = vector.broadcast %215 : vector<1x96xf32> to vector<8x96xf32>
    %230 = arith.addf %228, %229 : vector<8x96xf32>
    %231 = vector.extract_strided_slice %230 {offsets = [0, 0], sizes = [8, 8], strides = [1, 1]} : vector<8x96xf32> to vector<8x8xf32>
    %232 = vector.extract_strided_slice %230 {offsets = [0, 32], sizes = [8, 8], strides = [1, 1]} : vector<8x96xf32> to vector<8x8xf32>
    %233 = vector.extract_strided_slice %230 {offsets = [0, 64], sizes = [8, 8], strides = [1, 1]} : vector<8x96xf32> to vector<8x8xf32>
    %234 = arith.truncf %231 : vector<8x8xf32> to vector<8x8xbf16>
    %235 = arith.truncf %232 : vector<8x8xf32> to vector<8x8xbf16>
    %236 = tpu.transpose %235, [1, 0] : vector<8x8xbf16> -> vector<8x8xbf16>
    %cst_119 = arith.constant dense<0.000000e+00> : vector<8x8xf32>
    %237 = tpu.matmul %234, %236, %cst_119 {dimension_numbers = #tpu.dot_dimension_numbers<[1], [0], [0], [1], [0, 0, 1, 1], [], []>} : vector<8x8xbf16>, vector<8x8xbf16>, vector<8x8xf32> -> vector<8x8xf32>
    %cst_120 = arith.constant 0.353553385 : f32
    %238 = vector.broadcast %cst_120 : f32 to vector<8x8xf32>
    %239 = arith.mulf %237, %238 : vector<8x8xf32>
    %240 = vector.broadcast %5 : vector<1x8xf32> to vector<8x8xf32>
    %241 = arith.addf %239, %240 : vector<8x8xf32>
    %cst_121 = arith.constant dense<0xFF800000> : vector<8xf32>
    %242 = vector.multi_reduction <maximumf>, %241, %cst_121 [1] : vector<8x8xf32> to vector<8xf32>
    %243 = vector.shape_cast %242 : vector<8xf32> to vector<8x1xf32>
    %244 = vector.broadcast %243 : vector<8x1xf32> to vector<8x8xf32>
    %245 = arith.subf %241, %244 : vector<8x8xf32>
    %246 = math.exp %245 : vector<8x8xf32>
    %cst_122 = arith.constant dense<0.000000e+00> : vector<8xf32>
    %247 = vector.multi_reduction <add>, %246, %cst_122 [1] : vector<8x8xf32> to vector<8xf32>
    %248 = vector.shape_cast %247 : vector<8xf32> to vector<8x1xf32>
    %249 = vector.broadcast %248 : vector<8x1xf32> to vector<8x8xf32>
    %250 = arith.divf %246, %249 : vector<8x8xf32>
    %251 = arith.truncf %250 : vector<8x8xf32> to vector<8x8xbf16>
    %252 = arith.truncf %233 : vector<8x8xf32> to vector<8x8xbf16>
    %cst_123 = arith.constant dense<0.000000e+00> : vector<8x8xf32>
    %253 = tpu.matmul %251, %252, %cst_123 {dimension_numbers = #tpu.dot_dimension_numbers<[1], [0], [0], [1], [0, 0, 1, 1], [], []>} : vector<8x8xbf16>, vector<8x8xbf16>, vector<8x8xf32> -> vector<8x8xf32>
    %c0_124 = arith.constant 0 : index
    %c0_125 = arith.constant 0 : index
    %254 = vector.load %arg36[%c0_124, %c0_125] : memref<8x32xf32, #tpu.memory_space<vmem>>, vector<8x8xf32>
    tpu.vector_store %arg36[%c0_124, %c0_125], %253 {strides = array<i32>} : memref<8x32xf32, #tpu.memory_space<vmem>>, vector<8x8xf32>,
    %255 = vector.extract_strided_slice %230 {offsets = [0, 8], sizes = [8, 8], strides = [1, 1]} : vector<8x96xf32> to vector<8x8xf32>
    %256 = vector.extract_strided_slice %230 {offsets = [0, 40], sizes = [8, 8], strides = [1, 1]} : vector<8x96xf32> to vector<8x8xf32>
    %257 = vector.extract_strided_slice %230 {offsets = [0, 72], sizes = [8, 8], strides = [1, 1]} : vector<8x96xf32> to vector<8x8xf32>
    %258 = arith.truncf %255 : vector<8x8xf32> to vector<8x8xbf16>
    %259 = arith.truncf %256 : vector<8x8xf32> to vector<8x8xbf16>
    %260 = tpu.transpose %259, [1, 0] : vector<8x8xbf16> -> vector<8x8xbf16>
    %cst_126 = arith.constant dense<0.000000e+00> : vector<8x8xf32>
    %261 = tpu.matmul %258, %260, %cst_126 {dimension_numbers = #tpu.dot_dimension_numbers<[1], [0], [0], [1], [0, 0, 1, 1], [], []>} : vector<8x8xbf16>, vector<8x8xbf16>, vector<8x8xf32> -> vector<8x8xf32>
    %cst_127 = arith.constant 0.353553385 : f32
    %262 = vector.broadcast %cst_127 : f32 to vector<8x8xf32>
    %263 = arith.mulf %261, %262 : vector<8x8xf32>
    %264 = vector.broadcast %5 : vector<1x8xf32> to vector<8x8xf32>
    %265 = arith.addf %263, %264 : vector<8x8xf32>
    %cst_128 = arith.constant dense<0xFF800000> : vector<8xf32>
    %266 = vector.multi_reduction <maximumf>, %265, %cst_128 [1] : vector<8x8xf32> to vector<8xf32>
    %267 = vector.shape_cast %266 : vector<8xf32> to vector<8x1xf32>
    %268 = vector.broadcast %267 : vector<8x1xf32> to vector<8x8xf32>
    %269 = arith.subf %265, %268 : vector<8x8xf32>
    %270 = math.exp %269 : vector<8x8xf32>
    %cst_129 = arith.constant dense<0.000000e+00> : vector<8xf32>
    %271 = vector.multi_reduction <add>, %270, %cst_129 [1] : vector<8x8xf32> to vector<8xf32>
    %272 = vector.shape_cast %271 : vector<8xf32> to vector<8x1xf32>
    %273 = vector.broadcast %272 : vector<8x1xf32> to vector<8x8xf32>
    %274 = arith.divf %270, %273 : vector<8x8xf32>
    %275 = arith.truncf %274 : vector<8x8xf32> to vector<8x8xbf16>
    %276 = arith.truncf %257 : vector<8x8xf32> to vector<8x8xbf16>
    %cst_130 = arith.constant dense<0.000000e+00> : vector<8x8xf32>
    %277 = tpu.matmul %275, %276, %cst_130 {dimension_numbers = #tpu.dot_dimension_numbers<[1], [0], [0], [1], [0, 0, 1, 1], [], []>} : vector<8x8xbf16>, vector<8x8xbf16>, vector<8x8xf32> -> vector<8x8xf32>
    %c0_131 = arith.constant 0 : index
    %c8_132 = arith.constant 8 : index
    %278 = vector.load %arg36[%c0_131, %c8_132] : memref<8x32xf32, #tpu.memory_space<vmem>>, vector<8x8xf32>
    tpu.vector_store %arg36[%c0_131, %c8_132], %277 {strides = array<i32>} : memref<8x32xf32, #tpu.memory_space<vmem>>, vector<8x8xf32>,
    %279 = vector.extract_strided_slice %230 {offsets = [0, 16], sizes = [8, 8], strides = [1, 1]} : vector<8x96xf32> to vector<8x8xf32>
    %280 = vector.extract_strided_slice %230 {offsets = [0, 48], sizes = [8, 8], strides = [1, 1]} : vector<8x96xf32> to vector<8x8xf32>
    %281 = vector.extract_strided_slice %230 {offsets = [0, 80], sizes = [8, 8], strides = [1, 1]} : vector<8x96xf32> to vector<8x8xf32>
    %282 = arith.truncf %279 : vector<8x8xf32> to vector<8x8xbf16>
    %283 = arith.truncf %280 : vector<8x8xf32> to vector<8x8xbf16>
    %284 = tpu.transpose %283, [1, 0] : vector<8x8xbf16> -> vector<8x8xbf16>
    %cst_133 = arith.constant dense<0.000000e+00> : vector<8x8xf32>
    %285 = tpu.matmul %282, %284, %cst_133 {dimension_numbers = #tpu.dot_dimension_numbers<[1], [0], [0], [1], [0, 0, 1, 1], [], []>} : vector<8x8xbf16>, vector<8x8xbf16>, vector<8x8xf32> -> vector<8x8xf32>
    %cst_134 = arith.constant 0.353553385 : f32
    %286 = vector.broadcast %cst_134 : f32 to vector<8x8xf32>
    %287 = arith.mulf %285, %286 : vector<8x8xf32>
    %288 = vector.broadcast %5 : vector<1x8xf32> to vector<8x8xf32>
    %289 = arith.addf %287, %288 : vector<8x8xf32>
    %cst_135 = arith.constant dense<0xFF800000> : vector<8xf32>
    %290 = vector.multi_reduction <maximumf>, %289, %cst_135 [1] : vector<8x8xf32> to vector<8xf32>
    %291 = vector.shape_cast %290 : vector<8xf32> to vector<8x1xf32>
    %292 = vector.broadcast %291 : vector<8x1xf32> to vector<8x8xf32>
    %293 = arith.subf %289, %292 : vector<8x8xf32>
    %294 = math.exp %293 : vector<8x8xf32>
    %cst_136 = arith.constant dense<0.000000e+00> : vector<8xf32>
    %295 = vector.multi_reduction <add>, %294, %cst_136 [1] : vector<8x8xf32> to vector<8xf32>
    %296 = vector.shape_cast %295 : vector<8xf32> to vector<8x1xf32>
    %297 = vector.broadcast %296 : vector<8x1xf32> to vector<8x8xf32>
    %298 = arith.divf %294, %297 : vector<8x8xf32>
    %299 = arith.truncf %298 : vector<8x8xf32> to vector<8x8xbf16>
    %300 = arith.truncf %281 : vector<8x8xf32> to vector<8x8xbf16>
    %cst_137 = arith.constant dense<0.000000e+00> : vector<8x8xf32>
    %301 = tpu.matmul %299, %300, %cst_137 {dimension_numbers = #tpu.dot_dimension_numbers<[1], [0], [0], [1], [0, 0, 1, 1], [], []>} : vector<8x8xbf16>, vector<8x8xbf16>, vector<8x8xf32> -> vector<8x8xf32>
    %c0_138 = arith.constant 0 : index
    %c16_139 = arith.constant 16 : index
    %302 = vector.load %arg36[%c0_138, %c16_139] : memref<8x32xf32, #tpu.memory_space<vmem>>, vector<8x8xf32>
    tpu.vector_store %arg36[%c0_138, %c16_139], %301 {strides = array<i32>} : memref<8x32xf32, #tpu.memory_space<vmem>>, vector<8x8xf32>,
    %303 = vector.extract_strided_slice %230 {offsets = [0, 24], sizes = [8, 8], strides = [1, 1]} : vector<8x96xf32> to vector<8x8xf32>
    %304 = vector.extract_strided_slice %230 {offsets = [0, 56], sizes = [8, 8], strides = [1, 1]} : vector<8x96xf32> to vector<8x8xf32>
    %305 = vector.extract_strided_slice %230 {offsets = [0, 88], sizes = [8, 8], strides = [1, 1]} : vector<8x96xf32> to vector<8x8xf32>
    %306 = arith.truncf %303 : vector<8x8xf32> to vector<8x8xbf16>
    %307 = arith.truncf %304 : vector<8x8xf32> to vector<8x8xbf16>
    %308 = tpu.transpose %307, [1, 0] : vector<8x8xbf16> -> vector<8x8xbf16>
    %cst_140 = arith.constant dense<0.000000e+00> : vector<8x8xf32>
    %309 = tpu.matmul %306, %308, %cst_140 {dimension_numbers = #tpu.dot_dimension_numbers<[1], [0], [0], [1], [0, 0, 1, 1], [], []>} : vector<8x8xbf16>, vector<8x8xbf16>, vector<8x8xf32> -> vector<8x8xf32>
    %cst_141 = arith.constant 0.353553385 : f32
    %310 = vector.broadcast %cst_141 : f32 to vector<8x8xf32>
    %311 = arith.mulf %309, %310 : vector<8x8xf32>
    %312 = vector.broadcast %5 : vector<1x8xf32> to vector<8x8xf32>
    %313 = arith.addf %311, %312 : vector<8x8xf32>
    %cst_142 = arith.constant dense<0xFF800000> : vector<8xf32>
    %314 = vector.multi_reduction <maximumf>, %313, %cst_142 [1] : vector<8x8xf32> to vector<8xf32>
    %315 = vector.shape_cast %314 : vector<8xf32> to vector<8x1xf32>
    %316 = vector.broadcast %315 : vector<8x1xf32> to vector<8x8xf32>
    %317 = arith.subf %313, %316 : vector<8x8xf32>
    %318 = math.exp %317 : vector<8x8xf32>
    %cst_143 = arith.constant dense<0.000000e+00> : vector<8xf32>
    %319 = vector.multi_reduction <add>, %318, %cst_143 [1] : vector<8x8xf32> to vector<8xf32>
    %320 = vector.shape_cast %319 : vector<8xf32> to vector<8x1xf32>
    %321 = vector.broadcast %320 : vector<8x1xf32> to vector<8x8xf32>
    %322 = arith.divf %318, %321 : vector<8x8xf32>
    %323 = arith.truncf %322 : vector<8x8xf32> to vector<8x8xbf16>
    %324 = arith.truncf %305 : vector<8x8xf32> to vector<8x8xbf16>
    %cst_144 = arith.constant dense<0.000000e+00> : vector<8x8xf32>
    %325 = tpu.matmul %323, %324, %cst_144 {dimension_numbers = #tpu.dot_dimension_numbers<[1], [0], [0], [1], [0, 0, 1, 1], [], []>} : vector<8x8xbf16>, vector<8x8xbf16>, vector<8x8xf32> -> vector<8x8xf32>
    %c0_145 = arith.constant 0 : index
    %c24_146 = arith.constant 24 : index
    %326 = vector.load %arg36[%c0_145, %c24_146] : memref<8x32xf32, #tpu.memory_space<vmem>>, vector<8x8xf32>
    tpu.vector_store %arg36[%c0_145, %c24_146], %325 {strides = array<i32>} : memref<8x32xf32, #tpu.memory_space<vmem>>, vector<8x8xf32>,
    %c0_147 = arith.constant 0 : index
    %c0_148 = arith.constant 0 : index
    %327 = vector.load %arg36[%c0_147, %c0_148] : memref<8x32xf32, #tpu.memory_space<vmem>>, vector<8x32xf32>
    %328 = arith.truncf %327 : vector<8x32xf32> to vector<8x32xbf16>
    %329 = arith.truncf %216 : vector<32x32xf32> to vector<32x32xbf16>
    %cst_149 = arith.constant dense<0.000000e+00> : vector<8x32xf32>
    %330 = tpu.matmul %328, %329, %cst_149 {dimension_numbers = #tpu.dot_dimension_numbers<[1], [0], [0], [1], [0, 0, 1, 1], [], []>} : vector<8x32xbf16>, vector<32x32xbf16>, vector<8x32xf32> -> vector<8x32xf32>
    %331 = vector.broadcast %217 : vector<1x32xf32> to vector<8x32xf32>
    %332 = arith.addf %330, %331 : vector<8x32xf32>
    %333 = arith.addf %332, %213 : vector<8x32xf32>
    %cst_150 = arith.constant dense<0.000000e+00> : vector<8xf32>
    %334 = vector.multi_reduction <add>, %333, %cst_150 [1] : vector<8x32xf32> to vector<8xf32>
    %335 = vector.shape_cast %334 : vector<8xf32> to vector<8x1xf32>
    %cst_151 = arith.constant 3.200000e+01 : f32
    %336 = vector.broadcast %cst_151 : f32 to vector<8x1xf32>
    %337 = arith.divf %335, %336 : vector<8x1xf32>
    %338 = vector.broadcast %337 : vector<8x1xf32> to vector<8x32xf32>
    %339 = arith.subf %333, %338 : vector<8x32xf32>
    %340 = arith.mulf %339, %339 : vector<8x32xf32>
    %cst_152 = arith.constant dense<0.000000e+00> : vector<8xf32>
    %341 = vector.multi_reduction <add>, %340, %cst_152 [1] : vector<8x32xf32> to vector<8xf32>
    %342 = vector.shape_cast %341 : vector<8xf32> to vector<8x1xf32>
    %cst_153 = arith.constant 3.200000e+01 : f32
    %343 = vector.broadcast %cst_153 : f32 to vector<8x1xf32>
    %344 = arith.divf %342, %343 : vector<8x1xf32>
    %cst_154 = arith.constant 9.99999996E-13 : f32
    %345 = vector.broadcast %cst_154 : f32 to vector<8x1xf32>
    %346 = arith.addf %344, %345 : vector<8x1xf32>
    %347 = math.rsqrt %346 : vector<8x1xf32>
    %348 = vector.broadcast %347 : vector<8x1xf32> to vector<8x32xf32>
    %349 = arith.mulf %339, %348 : vector<8x32xf32>
    %350 = vector.broadcast %218 : vector<1x32xf32> to vector<8x32xf32>
    %351 = arith.mulf %349, %350 : vector<8x32xf32>
    %352 = vector.broadcast %219 : vector<1x32xf32> to vector<8x32xf32>
    %353 = arith.addf %351, %352 : vector<8x32xf32>
    %354 = arith.truncf %353 : vector<8x32xf32> to vector<8x32xbf16>
    %355 = arith.truncf %220 : vector<32x64xf32> to vector<32x64xbf16>
    %cst_155 = arith.constant dense<0.000000e+00> : vector<8x64xf32>
    %356 = tpu.matmul %354, %355, %cst_155 {dimension_numbers = #tpu.dot_dimension_numbers<[1], [0], [0], [1], [0, 0, 1, 1], [], []>} : vector<8x32xbf16>, vector<32x64xbf16>, vector<8x64xf32> -> vector<8x64xf32>
    %357 = vector.broadcast %221 : vector<1x64xf32> to vector<8x64xf32>
    %358 = arith.addf %356, %357 : vector<8x64xf32>
    %cst_156 = arith.constant 5.000000e-01 : f32
    %359 = vector.broadcast %cst_156 : f32 to vector<8x64xf32>
    %360 = arith.mulf %359, %358 : vector<8x64xf32>
    %cst_157 = arith.constant 0.707106769 : f32
    %361 = vector.broadcast %cst_157 : f32 to vector<8x64xf32>
    %362 = arith.mulf %358, %361 : vector<8x64xf32>
    %363 = math.erf %362 : vector<8x64xf32>
    %cst_158 = arith.constant 1.000000e+00 : f32
    %364 = vector.broadcast %cst_158 : f32 to vector<8x64xf32>
    %365 = arith.addf %364, %363 : vector<8x64xf32>
    %366 = arith.mulf %360, %365 : vector<8x64xf32>
    %367 = arith.truncf %366 : vector<8x64xf32> to vector<8x64xbf16>
    %368 = arith.truncf %222 : vector<64x32xf32> to vector<64x32xbf16>
    %cst_159 = arith.constant dense<0.000000e+00> : vector<8x32xf32>
    %369 = tpu.matmul %367, %368, %cst_159 {dimension_numbers = #tpu.dot_dimension_numbers<[1], [0], [0], [1], [0, 0, 1, 1], [], []>} : vector<8x64xbf16>, vector<64x32xbf16>, vector<8x32xf32> -> vector<8x32xf32>
    %370 = vector.broadcast %223 : vector<1x32xf32> to vector<8x32xf32>
    %371 = arith.addf %369, %370 : vector<8x32xf32>
    %372 = arith.addf %371, %353 : vector<8x32xf32>
    %cst_160 = arith.constant dense<0.000000e+00> : vector<8xf32>
    %373 = vector.multi_reduction <add>, %372, %cst_160 [1] : vector<8x32xf32> to vector<8xf32>
    %374 = vector.shape_cast %373 : vector<8xf32> to vector<8x1xf32>
    %cst_161 = arith.constant 3.200000e+01 : f32
    %375 = vector.broadcast %cst_161 : f32 to vector<8x1xf32>
    %376 = arith.divf %374, %375 : vector<8x1xf32>
    %377 = vector.broadcast %376 : vector<8x1xf32> to vector<8x32xf32>
    %378 = arith.subf %372, %377 : vector<8x32xf32>
    %379 = arith.mulf %378, %378 : vector<8x32xf32>
    %cst_162 = arith.constant dense<0.000000e+00> : vector<8xf32>
    %380 = vector.multi_reduction <add>, %379, %cst_162 [1] : vector<8x32xf32> to vector<8xf32>
    %381 = vector.shape_cast %380 : vector<8xf32> to vector<8x1xf32>
    %cst_163 = arith.constant 3.200000e+01 : f32
    %382 = vector.broadcast %cst_163 : f32 to vector<8x1xf32>
    %383 = arith.divf %381, %382 : vector<8x1xf32>
    %cst_164 = arith.constant 9.99999996E-13 : f32
    %384 = vector.broadcast %cst_164 : f32 to vector<8x1xf32>
    %385 = arith.addf %383, %384 : vector<8x1xf32>
    %386 = math.rsqrt %385 : vector<8x1xf32>
    %387 = vector.broadcast %386 : vector<8x1xf32> to vector<8x32xf32>
    %388 = arith.mulf %378, %387 : vector<8x32xf32>
    %389 = vector.broadcast %224 : vector<1x32xf32> to vector<8x32xf32>
    %390 = arith.mulf %388, %389 : vector<8x32xf32>
    %391 = vector.broadcast %225 : vector<1x32xf32> to vector<8x32xf32>
    %392 = arith.addf %390, %391 : vector<8x32xf32>
    %393 = arith.truncf %392 : vector<8x32xf32> to vector<8x32xbf16>
    %394 = arith.truncf %0 : vector<32x32xf32> to vector<32x32xbf16>
    %cst_165 = arith.constant dense<0.000000e+00> : vector<8x32xf32>
    %395 = tpu.matmul %393, %394, %cst_165 {dimension_numbers = #tpu.dot_dimension_numbers<[1], [0], [0], [1], [0, 0, 1, 1], [], []>} : vector<8x32xbf16>, vector<32x32xbf16>, vector<8x32xf32> -> vector<8x32xf32>
    %396 = vector.broadcast %1 : vector<1x32xf32> to vector<8x32xf32>
    %397 = arith.addf %395, %396 : vector<8x32xf32>
    %398 = math.tanh %397 : vector<8x32xf32>
    %399 = arith.truncf %398 : vector<8x32xf32> to vector<8x32xbf16>
    %400 = arith.truncf %2 : vector<32x128xf32> to vector<32x128xbf16>
    %cst_166 = arith.constant dense<0.000000e+00> : vector<8x128xf32>
    %401 = tpu.matmul %399, %400, %cst_166 {dimension_numbers = #tpu.dot_dimension_numbers<[1], [0], [0], [1], [0, 0, 1, 1], [], []>} : vector<8x32xbf16>, vector<32x128xbf16>, vector<8x128xf32> -> vector<8x128xf32>
    %402 = vector.broadcast %3 : vector<1x128xf32> to vector<8x128xf32>
    %403 = arith.addf %401, %402 : vector<8x128xf32>
    %404 = vector.extract_strided_slice %403 {offsets = [0, 0], sizes = [1, 128], strides = [1, 1]} : vector<8x128xf32> to vector<1x128xf32>
    %c0_167 = arith.constant 0 : index
    %c0_168 = arith.constant 0 : index
    %c0_169 = arith.constant 0 : index
    %405 = vector.load %arg35[%c0_167, %c0_168, %c0_169] : memref<1x1x128xf32, #tpu.memory_space<vmem>>, vector<1x1x128xf32>
    %406 = vector.shape_cast %405 : vector<1x1x128xf32> to vector<1x128xf32>
    %407 = vector.shape_cast %404 : vector<1x128xf32> to vector<1x1x128xf32>
    tpu.vector_store %arg35[%c0_167, %c0_168, %c0_169], %407 {strides = array<i32>} : memref<1x1x128xf32, #tpu.memory_space<vmem>>, vector<1x1x128xf32>,
    return
  }
  func.func @transform_0(%arg0: i32) -> (i32, i32, i32) {
    %c0_i32 = arith.constant 0 : i32
    %c0_i32_0 = arith.constant 0 : i32
    %c0_i32_1 = arith.constant 0 : i32
    return %arg0, %c0_i32, %c0_i32_0 : i32, i32, i32
  }
  func.func @transform_1(%arg0: i32) -> (i32, i32, i32) {
    %c0_i32 = arith.constant 0 : i32
    %c0_i32_0 = arith.constant 0 : i32
    %c0_i32_1 = arith.constant 0 : i32
    return %arg0, %c0_i32, %c0_i32_0 : i32, i32, i32
  }
  func.func @transform_2(%arg0: i32) -> (i32, i32) {
    %c0_i32 = arith.constant 0 : i32
    %c0_i32_0 = arith.constant 0 : i32
    %c0_i32_1 = arith.constant 0 : i32
    return %c0_i32, %c0_i32_0 : i32, i32
  }
  func.func @transform_3(%arg0: i32) -> (i32, i32, i32) {
    %c0_i32 = arith.constant 0 : i32
    %c0_i32_0 = arith.constant 0 : i32
    %c0_i32_1 = arith.constant 0 : i32
    return %arg0, %c0_i32, %c0_i32_0 : i32, i32, i32
  }
  func.func @transform_4(%arg0: i32) -> (i32, i32) {
    %c0_i32 = arith.constant 0 : i32
    %c0_i32_0 = arith.constant 0 : i32
    %c0_i32_1 = arith.constant 0 : i32
    return %c0_i32, %c0_i32_0 : i32, i32
  }
  func.func @transform_5(%arg0: i32) -> (i32, i32) {
    %c0_i32 = arith.constant 0 : i32
    %c0_i32_0 = arith.constant 0 : i32
    %c0_i32_1 = arith.constant 0 : i32
    return %c0_i32, %c0_i32_0 : i32, i32
  }
  func.func @transform_6(%arg0: i32) -> (i32, i32) {
    %c0_i32 = arith.constant 0 : i32
    %c0_i32_0 = arith.constant 0 : i32
    %c0_i32_1 = arith.constant 0 : i32
    return %c0_i32, %c0_i32_0 : i32, i32
  }
  func.func @transform_7(%arg0: i32) -> (i32, i32) {
    %c0_i32 = arith.constant 0 : i32
    %c0_i32_0 = arith.constant 0 : i32
    %c0_i32_1 = arith.constant 0 : i32
    return %c0_i32, %c0_i32_0 : i32, i32
  }
  func.func @transform_8(%arg0: i32) -> (i32, i32) {
    %c0_i32 = arith.constant 0 : i32
    %c0_i32_0 = arith.constant 0 : i32
    %c0_i32_1 = arith.constant 0 : i32
    return %c0_i32, %c0_i32_0 : i32, i32
  }
  func.func @transform_9(%arg0: i32) -> (i32, i32) {
    %c0_i32 = arith.constant 0 : i32
    %c0_i32_0 = arith.constant 0 : i32
    %c0_i32_1 = arith.constant 0 : i32
    return %c0_i32, %c0_i32_0 : i32, i32
  }
  func.func @transform_10(%arg0: i32) -> (i32, i32) {
    %c0_i32 = arith.constant 0 : i32
    %c0_i32_0 = arith.constant 0 : i32
    %c0_i32_1 = arith.constant 0 : i32
    return %c0_i32, %c0_i32_0 : i32, i32
  }
  func.func @transform_11(%arg0: i32) -> (i32, i32) {
    %c0_i32 = arith.constant 0 : i32
    %c0_i32_0 = arith.constant 0 : i32
    %c0_i32_1 = arith.constant 0 : i32
    return %c0_i32, %c0_i32_0 : i32, i32
  }
  func.func @transform_12(%arg0: i32) -> (i32, i32) {
    %c0_i32 = arith.constant 0 : i32
    %c0_i32_0 = arith.constant 0 : i32
    %c0_i32_1 = arith.constant 0 : i32
    return %c0_i32, %c0_i32_0 : i32, i32
  }
  func.func @transform_13(%arg0: i32) -> (i32, i32) {
    %c0_i32 = arith.constant 0 : i32
    %c0_i32_0 = arith.constant 0 : i32
    %c0_i32_1 = arith.constant 0 : i32
    return %c0_i32, %c0_i32_0 : i32, i32
  }
  func.func @transform_14(%arg0: i32) -> (i32, i32) {
    %c0_i32 = arith.constant 0 : i32
    %c0_i32_0 = arith.constant 0 : i32
    %c0_i32_1 = arith.constant 0 : i32
    return %c0_i32, %c0_i32_0 : i32, i32
  }
  func.func @transform_15(%arg0: i32) -> (i32, i32) {
    %c0_i32 = arith.constant 0 : i32
    %c0_i32_0 = arith.constant 0 : i32
    %c0_i32_1 = arith.constant 0 : i32
    return %c0_i32, %c0_i32_0 : i32, i32
  }
  func.func @transform_16(%arg0: i32) -> (i32, i32) {
    %c0_i32 = arith.constant 0 : i32
    %c0_i32_0 = arith.constant 0 : i32
    %c0_i32_1 = arith.constant 0 : i32
    return %c0_i32, %c0_i32_0 : i32, i32
  }
  func.func @transform_17(%arg0: i32) -> (i32, i32) {
    %c0_i32 = arith.constant 0 : i32
    %c0_i32_0 = arith.constant 0 : i32
    %c0_i32_1 = arith.constant 0 : i32
    return %c0_i32, %c0_i32_0 : i32, i32
  }
  func.func @transform_18(%arg0: i32) -> (i32, i32) {
    %c0_i32 = arith.constant 0 : i32
    %c0_i32_0 = arith.constant 0 : i32
    %c0_i32_1 = arith.constant 0 : i32
    return %c0_i32, %c0_i32_0 : i32, i32
  }
  func.func @transform_19(%arg0: i32) -> (i32, i32) {
    %c0_i32 = arith.constant 0 : i32
    %c0_i32_0 = arith.constant 0 : i32
    %c0_i32_1 = arith.constant 0 : i32
    return %c0_i32, %c0_i32_0 : i32, i32
  }
  func.func @transform_20(%arg0: i32) -> (i32, i32) {
    %c0_i32 = arith.constant 0 : i32
    %c0_i32_0 = arith.constant 0 : i32
    %c0_i32_1 = arith.constant 0 : i32
    return %c0_i32, %c0_i32_0 : i32, i32
  }
  func.func @transform_21(%arg0: i32) -> (i32, i32) {
    %c0_i32 = arith.constant 0 : i32
    %c0_i32_0 = arith.constant 0 : i32
    %c0_i32_1 = arith.constant 0 : i32
    return %c0_i32, %c0_i32_0 : i32, i32
  }
  func.func @transform_22(%arg0: i32) -> (i32, i32) {
    %c0_i32 = arith.constant 0 : i32
    %c0_i32_0 = arith.constant 0 : i32
    %c0_i32_1 = arith.constant 0 : i32
    return %c0_i32, %c0_i32_0 : i32, i32
  }
  func.func @transform_23(%arg0: i32) -> (i32, i32) {
    %c0_i32 = arith.constant 0 : i32
    %c0_i32_0 = arith.constant 0 : i32
    %c0_i32_1 = arith.constant 0 : i32
    return %c0_i32, %c0_i32_0 : i32, i32
  }
  func.func @transform_24(%arg0: i32) -> (i32, i32) {
    %c0_i32 = arith.constant 0 : i32
    %c0_i32_0 = arith.constant 0 : i32
    %c0_i32_1 = arith.constant 0 : i32
    return %c0_i32, %c0_i32_0 : i32, i32
  }
  func.func @transform_25(%arg0: i32) -> (i32, i32) {
    %c0_i32 = arith.constant 0 : i32
    %c0_i32_0 = arith.constant 0 : i32
    %c0_i32_1 = arith.constant 0 : i32
    return %c0_i32, %c0_i32_0 : i32, i32
  }
  func.func @transform_26(%arg0: i32) -> (i32, i32) {
    %c0_i32 = arith.constant 0 : i32
    %c0_i32_0 = arith.constant 0 : i32
    %c0_i32_1 = arith.constant 0 : i32
    return %c0_i32, %c0_i32_0 : i32, i32
  }
  func.func @transform_27(%arg0: i32) -> (i32, i32) {
    %c0_i32 = arith.constant 0 : i32
    %c0_i32_0 = arith.constant 0 : i32
    %c0_i32_1 = arith.constant 0 : i32
    return %c0_i32, %c0_i32_0 : i32, i32
  }
  func.func @transform_28(%arg0: i32) -> (i32, i32) {
    %c0_i32 = arith.constant 0 : i32
    %c0_i32_0 = arith.constant 0 : i32
    %c0_i32_1 = arith.constant 0 : i32
    return %c0_i32, %c0_i32_0 : i32, i32
  }
  func.func @transform_29(%arg0: i32) -> (i32, i32) {
    %c0_i32 = arith.constant 0 : i32
    %c0_i32_0 = arith.constant 0 : i32
    %c0_i32_1 = arith.constant 0 : i32
    return %c0_i32, %c0_i32_0 : i32, i32
  }
  func.func @transform_30(%arg0: i32) -> (i32, i32) {
    %c0_i32 = arith.constant 0 : i32
    %c0_i32_0 = arith.constant 0 : i32
    %c0_i32_1 = arith.constant 0 : i32
    return %c0_i32, %c0_i32_0 : i32, i32
  }
  func.func @transform_31(%arg0: i32) -> (i32, i32) {
    %c0_i32 = arith.constant 0 : i32
    %c0_i32_0 = arith.constant 0 : i32
    %c0_i32_1 = arith.constant 0 : i32
    return %c0_i32, %c0_i32_0 : i32, i32
  }
  func.func @transform_32(%arg0: i32) -> (i32, i32) {
    %c0_i32 = arith.constant 0 : i32
    %c0_i32_0 = arith.constant 0 : i32
    %c0_i32_1 = arith.constant 0 : i32
    return %c0_i32, %c0_i32_0 : i32, i32
  }
  func.func @transform_33(%arg0: i32) -> (i32, i32) {
    %c0_i32 = arith.constant 0 : i32
    %c0_i32_0 = arith.constant 0 : i32
    %c0_i32_1 = arith.constant 0 : i32
    return %c0_i32, %c0_i32_0 : i32, i32
  }
  func.func @transform_34(%arg0: i32) -> (i32, i32, i32) {
    %c0_i32 = arith.constant 0 : i32
    %c0_i32_0 = arith.constant 0 : i32
    %c0_i32_1 = arith.constant 0 : i32
    return %arg0, %c0_i32, %c0_i32_0 : i32, i32, i32
  }
}

</mosaic_0001>

<llo_original>
// kernel: tpu_custom_call.1
$region0: #{tpu_custom_call.1}
  #allocation0 [shape = 'u32[]', space=smem, size = 0x4, offset = 0x4, fixed_abs, tag = 'smem constant byte address 0x4 - core index']
  #allocation1 [shape = 'u32[144,128]{1,0:T(1,128)}', space=vmem, size = 0x12000, scoped, tag = 'internal scratch']
  #allocation2 [shape = 'f32[8,32]{1,0:T(8,128)}', space=vmem, size = 0x1000, scoped, tag = 'scratch operand']
  %s0 = inlined_call_operand.smem [shape: u32[35], index: -1, kind: input, shape index: {}]
  %s1 = sld [smem:[%s0]]
  %s2 = scalar_lea.smem %s0, 1
  %s3 = sld [smem:[%s2]]
  %s4 = scalar_lea.smem %s0, 2
  %s5 = sld [smem:[%s4]]
  %s6 = scalar_lea.smem %s0, 3
  %s7 = sld [smem:[%s6]]
  %s8 = scalar_lea.smem %s0, 4
  %s9 = sld [smem:[%s8]]
  %s10 = scalar_lea.smem %s0, 5
  %s11 = sld [smem:[%s10]]
  %s12 = scalar_lea.smem %s0, 6
  %s13 = sld [smem:[%s12]]
  %s14 = scalar_lea.smem %s0, 7
  %s15 = sld [smem:[%s14]]
  %s16 = scalar_lea.smem %s0, 8
  %s17 = sld [smem:[%s16]]
  %s18 = scalar_lea.smem %s0, 9
  %s19 = sld [smem:[%s18]]
  %s20 = scalar_lea.smem %s0, 10
  %s21 = sld [smem:[%s20]]
  %s22 = scalar_lea.smem %s0, 11
  %s23 = sld [smem:[%s22]]
  %s24 = scalar_lea.smem %s0, 12
  %s25 = sld [smem:[%s24]]
  %s26 = scalar_lea.smem %s0, 13
  %s27 = sld [smem:[%s26]]
  %s28 = scalar_lea.smem %s0, 14
  %s29 = sld [smem:[%s28]]
  %s30 = scalar_lea.smem %s0, 15
  %s31 = sld [smem:[%s30]]
  %s32 = scalar_lea.smem %s0, 16
  %s33 = sld [smem:[%s32]]
  %s34 = scalar_lea.smem %s0, 17
  %s35 = sld [smem:[%s34]]
  %s36 = scalar_lea.smem %s0, 18
  %s37 = sld [smem:[%s36]]
  %s38 = scalar_lea.smem %s0, 19
  %s39 = sld [smem:[%s38]]
  %s40 = scalar_lea.smem %s0, 20
  %s41 = sld [smem:[%s40]]
  %s42 = scalar_lea.smem %s0, 21
  %s43 = sld [smem:[%s42]]
  %s44 = scalar_lea.smem %s0, 22
  %s45 = sld [smem:[%s44]]
  %s46 = scalar_lea.smem %s0, 23
  %s47 = sld [smem:[%s46]]
  %s48 = scalar_lea.smem %s0, 24
  %s49 = sld [smem:[%s48]]
  %s50 = scalar_lea.smem %s0, 25
  %s51 = sld [smem:[%s50]]
  %s52 = scalar_lea.smem %s0, 26
  %s53 = sld [smem:[%s52]]
  %s54 = scalar_lea.smem %s0, 27
  %s55 = sld [smem:[%s54]]
  %s56 = scalar_lea.smem %s0, 28
  %s57 = sld [smem:[%s56]]
  %s58 = scalar_lea.smem %s0, 29
  %s59 = sld [smem:[%s58]]
  %s60 = scalar_lea.smem %s0, 30
  %s61 = sld [smem:[%s60]]
  %s62 = scalar_lea.smem %s0, 31
  %s63 = sld [smem:[%s62]]
  %s64 = scalar_lea.smem %s0, 32
  %s65 = sld [smem:[%s64]]
  %s66 = scalar_lea.smem %s0, 33
  %s67 = sld [smem:[%s66]]
  %s68 = scalar_lea.smem %s0, 34
  %s69 = sld [smem:[%s68]]
  %s70 = sld [smem:[#allocation0]]
  $region237: #{tpu_custom_call.1} parent=0
    _
  %s72 = ssub.s32 1, %s70
  %s73 = scalar_select 0, %s72, %s70
  $region1: #{tpu_custom_call.1} parent=0
    #allocation3 [shape = 'u8[8192]{0}', space=vmem, size = 0x2000, scoped, tag = 'input window, operand 0']
    #allocation4 [shape = 's32[2]{0}', space=sflag, size = 0x8, scoped, tag = 'scoped memory for tpu_custom_call.1']
    #allocation5 [shape = 's32[2]{0}', space=sflag, size = 0x8, scoped, tag = 'scoped memory for tpu_custom_call.1']
    #allocation6 [shape = 'u8[8192]{0}', space=vmem, size = 0x2000, scoped, tag = 'input window, operand 1']
    #allocation7 [shape = 's32[2]{0}', space=sflag, size = 0x8, scoped, tag = 'scoped memory for tpu_custom_call.1']
    #allocation8 [shape = 'u8[4096]{0}', space=vmem, size = 0x1000, scoped, tag = 'input window, operand 2, single buffered']
    #allocation9 [shape = 'u8[1024]{0}', space=vmem, size = 0x400, scoped, tag = 'input window, operand 3']
    #allocation10 [shape = 's32[2]{0}', space=sflag, size = 0x8, scoped, tag = 'scoped memory for tpu_custom_call.1']
    #allocation11 [shape = 'u8[512]{0}', space=vmem, size = 0x400, scoped, tag = 'input window, operand 4, single buffered']
    #allocation12 [shape = 'u8[512]{0}', space=vmem, size = 0x400, scoped, tag = 'input window, operand 5, single buffered']
    #allocation13 [shape = 's32[1]{0}', space=sflag, size = 0x4, scoped, tag = 'scoped memory for tpu_custom_call.1']
    #allocation14 [shape = 'u8[512]{0}', space=vmem, size = 0x400, scoped, tag = 'input window, operand 7, single buffered']
    #allocation15 [shape = 'u8[512]{0}', space=vmem, size = 0x400, scoped, tag = 'input window, operand 9, single buffered']
    #allocation16 [shape = 's32[1]{0}', space=sflag, size = 0x4, scoped, tag = 'scoped memory for tpu_custom_call.1']
    #allocation17 [shape = 'u8[512]{0}', space=vmem, size = 0x400, scoped, tag = 'input window, operand 10, single buffered']
    #allocation18 [shape = 'u8[512]{0}', space=vmem, size = 0x400, scoped, tag = 'input window, operand 11, single buffered']
    #allocation19 [shape = 's32[1]{0}', space=sflag, size = 0x4, scoped, tag = 'scoped memory for tpu_custom_call.1']
    #allocation20 [shape = 'u8[512]{0}', space=vmem, size = 0x400, scoped, tag = 'input window, operand 13, single buffered']
    #allocation21 [shape = 'u8[512]{0}', space=vmem, size = 0x400, scoped, tag = 'input window, operand 15, single buffered']
    #allocation22 [shape = 's32[1]{0}', space=sflag, size = 0x4, scoped, tag = 'scoped memory for tpu_custom_call.1']
    #allocation23 [shape = 'u8[512]{0}', space=vmem, size = 0x400, scoped, tag = 'input window, operand 16, single buffered']
    #allocation24 [shape = 'u8[512]{0}', space=vmem, size = 0x400, scoped, tag = 'input window, operand 17, single buffered']
    #allocation25 [shape = 's32[1]{0}', space=sflag, size = 0x4, scoped, tag = 'scoped memory for tpu_custom_call.1']
    #allocation26 [shape = 'u8[512]{0}', space=vmem, size = 0x400, scoped, tag = 'input window, operand 22, single buffered']
    #allocation27 [shape = 'u8[512]{0}', space=vmem, size = 0x400, scoped, tag = 'input window, operand 23, single buffered']
    #allocation28 [shape = 's32[1]{0}', space=sflag, size = 0x4, scoped, tag = 'scoped memory for tpu_custom_call.1']
    #allocation29 [shape = 'u8[512]{0}', space=vmem, size = 0x400, scoped, tag = 'input window, operand 25, single buffered']
    #allocation30 [shape = 'u8[1024]{0}', space=vmem, size = 0x400, scoped, tag = 'output window, operand 0']
    %74 = vsyncpa [#allocation4], 0
    %s75 = scalar_lea.sflag [#allocation4], 1
    %76 = vsyncpa %s75, 0
    %77 = vsyncpa [#allocation7], 0
    %s78 = scalar_lea.sflag [#allocation7], 1
    %79 = vsyncpa %s78, 0
    %80 = vsyncpa [#allocation10], 0
    %s81 = scalar_lea.sflag [#allocation10], 1
    %82 = vsyncpa %s81, 0
    %83 = vsyncpa [#allocation13], 0
    %84 = vsyncpa [#allocation16], 0
    %85 = vsyncpa [#allocation19], 0
    %86 = vsyncpa [#allocation22], 0
    %87 = vsyncpa [#allocation25], 0
    %88 = vsyncpa [#allocation28], 0
    %89 = vsyncpa [#allocation5], 0
    %s90 = scalar_lea.sflag [#allocation5], 1
    %91 = vsyncpa %s90, 0
    loop: start=0, step=1, limit=4
    $region2: #{tpu_custom_call.1} parent=1 // loop_pre_header
      _
    $region3: #{tpu_custom_call.1} parent=1 // loop_header
      %s93 = sphi 0, %s97
      %p94 = scmp.ge.s32.totalorder %s93, 4
      %s103 = sphi 0, %s105
      %s106 = sphi 0, %s103
      %s107 = sphi 0, %s106
      %s123 = sphi 0, %s107
      %s129 = sphi 0, %s131
      %s132 = sphi 0, %s129
      %s133 = sphi 0, %s132
      %s149 = sphi 0, %s133
      %s153 = sphi 0, %s153
      %s155 = sphi 0, %s153
      %s156 = sphi 0, %s155
      %s170 = sphi 0, %s156
      %s176 = sphi 0, %s178
      %s179 = sphi 0, %s176
      %s180 = sphi 0, %s179
      %s196 = sphi 0, %s180
      %s200 = sphi 0, %s200
      %s202 = sphi 0, %s200
      %s203 = sphi 0, %s202
      %s217 = sphi 0, %s203
      %s221 = sphi 0, %s221
      %s223 = sphi 0, %s221
      %s224 = sphi 0, %s223
      %s238 = sphi 0, %s224
      %s242 = sphi 0, %s242
      %s244 = sphi 0, %s242
      %s245 = sphi 0, %s244
      %s259 = sphi 0, %s245
      %s263 = sphi 0, %s263
      %s265 = sphi 0, %s263
      %s266 = sphi 0, %s265
      %s280 = sphi 0, %s266
      %s284 = sphi 0, %s284
      %s286 = sphi 0, %s284
      %s287 = sphi 0, %s286
      %s301 = sphi 0, %s287
      %s305 = sphi 0, %s305
      %s307 = sphi 0, %s305
      %s308 = sphi 0, %s307
      %s322 = sphi 0, %s308
      %s326 = sphi 0, %s326
      %s328 = sphi 0, %s326
      %s329 = sphi 0, %s328
      %s343 = sphi 0, %s329
      %s347 = sphi 0, %s347
      %s349 = sphi 0, %s347
      %s350 = sphi 0, %s349
      %s364 = sphi 0, %s350
      %s368 = sphi 0, %s368
      %s370 = sphi 0, %s368
      %s371 = sphi 0, %s370
      %s385 = sphi 0, %s371
      %s389 = sphi 0, %s389
      %s391 = sphi 0, %s389
      %s392 = sphi 0, %s391
      %s406 = sphi 0, %s392
      %s410 = sphi 0, %s410
      %s412 = sphi 0, %s410
      %s413 = sphi 0, %s412
      %s427 = sphi 0, %s413
      %s431 = sphi 0, %s431
      %s433 = sphi 0, %s431
      %s434 = sphi 0, %s433
      %s448 = sphi 0, %s434
      %s452 = sphi 0, %s452
      %s454 = sphi 0, %s452
      %s455 = sphi 0, %s454
      %s469 = sphi 0, %s455
      %s473 = sphi 0, %s473
      %s475 = sphi 0, %s473
      %s476 = sphi 0, %s475
      %s490 = sphi 0, %s476
      %s494 = sphi 0, %s494
      %s496 = sphi 0, %s494
      %s497 = sphi 0, %s496
      %s511 = sphi 0, %s497
      %s515 = sphi 0, %s515
      %s517 = sphi 0, %s515
      %s518 = sphi 0, %s517
      %s532 = sphi 0, %s518
      %s536 = sphi 0, %s536
      %s538 = sphi 0, %s536
      %s539 = sphi 0, %s538
      %s553 = sphi 0, %s539
      %s557 = sphi 0, %s557
      %s559 = sphi 0, %s557
      %s560 = sphi 0, %s559
      %s574 = sphi 0, %s560
      %s578 = sphi 0, %s578
      %s580 = sphi 0, %s578
      %s581 = sphi 0, %s580
      %s595 = sphi 0, %s581
      %s599 = sphi 0, %s599
      %s601 = sphi 0, %s599
      %s602 = sphi 0, %s601
      %s616 = sphi 0, %s602
      %s620 = sphi 0, %s620
      %s622 = sphi 0, %s620
      %s623 = sphi 0, %s622
      %s637 = sphi 0, %s623
      %s641 = sphi 0, %s641
      %s643 = sphi 0, %s641
      %s644 = sphi 0, %s643
      %s658 = sphi 0, %s644
      %s662 = sphi 0, %s662
      %s664 = sphi 0, %s662
      %s665 = sphi 0, %s664
      %s679 = sphi 0, %s665
      %s683 = sphi 0, %s683
      %s685 = sphi 0, %s683
      %s686 = sphi 0, %s685
      %s700 = sphi 0, %s686
      %s704 = sphi 0, %s704
      %s706 = sphi 0, %s704
      %s707 = sphi 0, %s706
      %s721 = sphi 0, %s707
      %s725 = sphi 0, %s725
      %s727 = sphi 0, %s725
      %s728 = sphi 0, %s727
      %s742 = sphi 0, %s728
      %s746 = sphi 0, %s746
      %s748 = sphi 0, %s746
      %s749 = sphi 0, %s748
      %s763 = sphi 0, %s749
      %s767 = sphi 0, %s767
      %s769 = sphi 0, %s767
      %s770 = sphi 0, %s769
      %s784 = sphi 0, %s770
      %s788 = sphi 0, %s788
      %s790 = sphi 0, %s788
      %s791 = sphi 0, %s790
      %s805 = sphi 0, %s791
      %s809 = sphi 0, %s809
      %s811 = sphi 0, %s809
      %s812 = sphi 0, %s811
      %s826 = sphi 0, %s812
      %s832 = sphi 0, %s834
      %s835 = sphi 0, %s832
      %s836 = sphi 0, %s835
      %s852 = sphi 0, %s836
    $region4: #{tpu_custom_call.1} parent=1 // loop_header_branch
      %96 = sbr.rel (%p94) target = $region8
    $region5: #{tpu_custom_call.1} parent=1 // loop_body
      %s98 = ssub.s32 %s93, 1
      %s99 = ssub.s32 %s93, 2
      %s100 = sadd.s32 %s93, 1
      %s101 = ssub.s32 %s93, %s100
      %p102 = scmp.eq.s32.totalorder %s101, 0
      %s104 = sadd.s32 %s103, 1
      %s105 = scalar_select %p102, %s103, %s104
      %p108 = pneg %p102
      %p109 = scmp.eq.s32.totalorder %s93, 1
      %p110 = por %p108, %p109
      %p111 = scmp.ne.s32.totalorder %s103, %s106
      %p112 = scmp.eq.s32.totalorder %s93, 0
      %p113 = por %p111, %p112
      %p114 = scmp.ne.s32.totalorder %s103, %s106
      %p115 = scmp.eq.s32.totalorder %s98, 1
      %p116 = por %p114, %p115
      %p117 = scmp.ne.s32.totalorder %s106, %s107
      %p118 = scmp.eq.s32.totalorder %s98, 0
      %p119 = por %p117, %p118
      %p120 = scmp.ne.s32.totalorder %s106, %s107
      %p121 = scmp.eq.s32.totalorder %s99, 1
      %p122 = por %p120, %p121
      %p124 = scmp.ne.s32.totalorder %s107, %s123
      %p125 = scmp.eq.s32.totalorder %s99, 0
      %p126 = por %p124, %p125
      %s127 = ssub.s32 %s93, %s100
      %p128 = scmp.eq.s32.totalorder %s127, 0
      %s130 = sadd.s32 %s129, 1
      %s131 = scalar_select %p128, %s129, %s130
      %p134 = pneg %p128
      %p135 = scmp.eq.s32.totalorder %s93, 1
      %p136 = por %p134, %p135
      %p137 = scmp.ne.s32.totalorder %s129, %s132
      %p138 = scmp.eq.s32.totalorder %s93, 0
      %p139 = por %p137, %p138
      %p140 = scmp.ne.s32.totalorder %s129, %s132
      %p141 = scmp.eq.s32.totalorder %s98, 1
      %p142 = por %p140, %p141
      %p143 = scmp.ne.s32.totalorder %s132, %s133
      %p144 = scmp.eq.s32.totalorder %s98, 0
      %p145 = por %p143, %p144
      %p146 = scmp.ne.s32.totalorder %s132, %s133
      %p147 = scmp.eq.s32.totalorder %s99, 1
      %p148 = por %p146, %p147
      %p150 = scmp.ne.s32.totalorder %s133, %s149
      %p151 = scmp.eq.s32.totalorder %s99, 0
      %p152 = por %p150, %p151
      %s154 = sadd.s32 %s153, 1
      %p157 = scmp.eq.s32.totalorder %s93, 1
      %p158 = scmp.ne.s32.totalorder %s153, %s155
      %p159 = scmp.eq.s32.totalorder %s93, 0
      %p160 = por %p158, %p159
      %p161 = scmp.ne.s32.totalorder %s153, %s155
      %p162 = scmp.eq.s32.totalorder %s98, 1
      %p163 = por %p161, %p162
      %p164 = scmp.ne.s32.totalorder %s155, %s156
      %p165 = scmp.eq.s32.totalorder %s98, 0
      %p166 = por %p164, %p165
      %p167 = scmp.ne.s32.totalorder %s155, %s156
      %p168 = scmp.eq.s32.totalorder %s99, 1
      %p169 = por %p167, %p168
      %p171 = scmp.ne.s32.totalorder %s156, %s170
      %p172 = scmp.eq.s32.totalorder %s99, 0
      %p173 = por %p171, %p172
      %s174 = ssub.s32 %s93, %s100
      %p175 = scmp.eq.s32.totalorder %s174, 0
      %s177 = sadd.s32 %s176, 1
      %s178 = scalar_select %p175, %s176, %s177
      %p181 = pneg %p175
      %p182 = scmp.eq.s32.totalorder %s93, 1
      %p183 = por %p181, %p182
      %p184 = scmp.ne.s32.totalorder %s176, %s179
      %p185 = scmp.eq.s32.totalorder %s93, 0
      %p186 = por %p184, %p185
      %p187 = scmp.ne.s32.totalorder %s176, %s179
      %p188 = scmp.eq.s32.totalorder %s98, 1
      %p189 = por %p187, %p188
      %p190 = scmp.ne.s32.totalorder %s179, %s180
      %p191 = scmp.eq.s32.totalorder %s98, 0
      %p192 = por %p190, %p191
      %p193 = scmp.ne.s32.totalorder %s179, %s180
      %p194 = scmp.eq.s32.totalorder %s99, 1
      %p195 = por %p193, %p194
      %p197 = scmp.ne.s32.totalorder %s180, %s196
      %p198 = scmp.eq.s32.totalorder %s99, 0
      %p199 = por %p197, %p198
      %s201 = sadd.s32 %s200, 1
      %p204 = scmp.eq.s32.totalorder %s93, 1
      %p205 = scmp.ne.s32.totalorder %s200, %s202
      %p206 = scmp.eq.s32.totalorder %s93, 0
      %p207 = por %p205, %p206
      %p208 = scmp.ne.s32.totalorder %s200, %s202
      %p209 = scmp.eq.s32.totalorder %s98, 1
      %p210 = por %p208, %p209
      %p211 = scmp.ne.s32.totalorder %s202, %s203
      %p212 = scmp.eq.s32.totalorder %s98, 0
      %p213 = por %p211, %p212
      %p214 = scmp.ne.s32.totalorder %s202, %s203
      %p215 = scmp.eq.s32.totalorder %s99, 1
      %p216 = por %p214, %p215
      %p218 = scmp.ne.s32.totalorder %s203, %s217
      %p219 = scmp.eq.s32.totalorder %s99, 0
      %p220 = por %p218, %p219
      %s222 = sadd.s32 %s221, 1
      %p225 = scmp.eq.s32.totalorder %s93, 1
      %p226 = scmp.ne.s32.totalorder %s221, %s223
      %p227 = scmp.eq.s32.totalorder %s93, 0
      %p228 = por %p226, %p227
      %p229 = scmp.ne.s32.totalorder %s221, %s223
      %p230 = scmp.eq.s32.totalorder %s98, 1
      %p231 = por %p229, %p230
      %p232 = scmp.ne.s32.totalorder %s223, %s224
      %p233 = scmp.eq.s32.totalorder %s98, 0
      %p234 = por %p232, %p233
      %p235 = scmp.ne.s32.totalorder %s223, %s224
      %p236 = scmp.eq.s32.totalorder %s99, 1
      %p237 = por %p235, %p236
      %p239 = scmp.ne.s32.totalorder %s224, %s238
      %p240 = scmp.eq.s32.totalorder %s99, 0
      %p241 = por %p239, %p240
      %s243 = sadd.s32 %s242, 1
      %p246 = scmp.eq.s32.totalorder %s93, 1
      %p247 = scmp.ne.s32.totalorder %s242, %s244
      %p248 = scmp.eq.s32.totalorder %s93, 0
      %p249 = por %p247, %p248
      %p250 = scmp.ne.s32.totalorder %s242, %s244
      %p251 = scmp.eq.s32.totalorder %s98, 1
      %p252 = por %p250, %p251
      %p253 = scmp.ne.s32.totalorder %s244, %s245
      %p254 = scmp.eq.s32.totalorder %s98, 0
      %p255 = por %p253, %p254
      %p256 = scmp.ne.s32.totalorder %s244, %s245
      %p257 = scmp.eq.s32.totalorder %s99, 1
      %p258 = por %p256, %p257
      %p260 = scmp.ne.s32.totalorder %s245, %s259
      %p261 = scmp.eq.s32.totalorder %s99, 0
      %p262 = por %p260, %p261
      %s264 = sadd.s32 %s263, 1
      %p267 = scmp.eq.s32.totalorder %s93, 1
      %p268 = scmp.ne.s32.totalorder %s263, %s265
      %p269 = scmp.eq.s32.totalorder %s93, 0
      %p270 = por %p268, %p269
      %p271 = scmp.ne.s32.totalorder %s263, %s265
      %p272 = scmp.eq.s32.totalorder %s98, 1
      %p273 = por %p271, %p272
      %p274 = scmp.ne.s32.totalorder %s265, %s266
      %p275 = scmp.eq.s32.totalorder %s98, 0
      %p276 = por %p274, %p275
      %p277 = scmp.ne.s32.totalorder %s265, %s266
      %p278 = scmp.eq.s32.totalorder %s99, 1
      %p279 = por %p277, %p278
      %p281 = scmp.ne.s32.totalorder %s266, %s280
      %p282 = scmp.eq.s32.totalorder %s99, 0
      %p283 = por %p281, %p282
      %s285 = sadd.s32 %s284, 1
      %p288 = scmp.eq.s32.totalorder %s93, 1
      %p289 = scmp.ne.s32.totalorder %s284, %s286
      %p290 = scmp.eq.s32.totalorder %s93, 0
      %p291 = por %p289, %p290
      %p292 = scmp.ne.s32.totalorder %s284, %s286
      %p293 = scmp.eq.s32.totalorder %s98, 1
      %p294 = por %p292, %p293
      %p295 = scmp.ne.s32.totalorder %s286, %s287
      %p296 = scmp.eq.s32.totalorder %s98, 0
      %p297 = por %p295, %p296
      %p298 = scmp.ne.s32.totalorder %s286, %s287
      %p299 = scmp.eq.s32.totalorder %s99, 1
      %p300 = por %p298, %p299
      %p302 = scmp.ne.s32.totalorder %s287, %s301
      %p303 = scmp.eq.s32.totalorder %s99, 0
      %p304 = por %p302, %p303
      %s306 = sadd.s32 %s305, 1
      %p309 = scmp.eq.s32.totalorder %s93, 1
      %p310 = scmp.ne.s32.totalorder %s305, %s307
      %p311 = scmp.eq.s32.totalorder %s93, 0
      %p312 = por %p310, %p311
      %p313 = scmp.ne.s32.totalorder %s305, %s307
      %p314 = scmp.eq.s32.totalorder %s98, 1
      %p315 = por %p313, %p314
      %p316 = scmp.ne.s32.totalorder %s307, %s308
      %p317 = scmp.eq.s32.totalorder %s98, 0
      %p318 = por %p316, %p317
      %p319 = scmp.ne.s32.totalorder %s307, %s308
      %p320 = scmp.eq.s32.totalorder %s99, 1
      %p321 = por %p319, %p320
      %p323 = scmp.ne.s32.totalorder %s308, %s322
      %p324 = scmp.eq.s32.totalorder %s99, 0
      %p325 = por %p323, %p324
      %s327 = sadd.s32 %s326, 1
      %p330 = scmp.eq.s32.totalorder %s93, 1
      %p331 = scmp.ne.s32.totalorder %s326, %s328
      %p332 = scmp.eq.s32.totalorder %s93, 0
      %p333 = por %p331, %p332
      %p334 = scmp.ne.s32.totalorder %s326, %s328
      %p335 = scmp.eq.s32.totalorder %s98, 1
      %p336 = por %p334, %p335
      %p337 = scmp.ne.s32.totalorder %s328, %s329
      %p338 = scmp.eq.s32.totalorder %s98, 0
      %p339 = por %p337, %p338
      %p340 = scmp.ne.s32.totalorder %s328, %s329
      %p341 = scmp.eq.s32.totalorder %s99, 1
      %p342 = por %p340, %p341
      %p344 = scmp.ne.s32.totalorder %s329, %s343
      %p345 = scmp.eq.s32.totalorder %s99, 0
      %p346 = por %p344, %p345
      %s348 = sadd.s32 %s347, 1
      %p351 = scmp.eq.s32.totalorder %s93, 1
      %p352 = scmp.ne.s32.totalorder %s347, %s349
      %p353 = scmp.eq.s32.totalorder %s93, 0
      %p354 = por %p352, %p353
      %p355 = scmp.ne.s32.totalorder %s347, %s349
      %p356 = scmp.eq.s32.totalorder %s98, 1
      %p357 = por %p355, %p356
      %p358 = scmp.ne.s32.totalorder %s349, %s350
      %p359 = scmp.eq.s32.totalorder %s98, 0
      %p360 = por %p358, %p359
      %p361 = scmp.ne.s32.totalorder %s349, %s350
      %p362 = scmp.eq.s32.totalorder %s99, 1
      %p363 = por %p361, %p362
      %p365 = scmp.ne.s32.totalorder %s350, %s364
      %p366 = scmp.eq.s32.totalorder %s99, 0
      %p367 = por %p365, %p366
      %s369 = sadd.s32 %s368, 1
      %p372 = scmp.eq.s32.totalorder %s93, 1
      %p373 = scmp.ne.s32.totalorder %s368, %s370
      %p374 = scmp.eq.s32.totalorder %s93, 0
      %p375 = por %p373, %p374
      %p376 = scmp.ne.s32.totalorder %s368, %s370
      %p377 = scmp.eq.s32.totalorder %s98, 1
      %p378 = por %p376, %p377
      %p379 = scmp.ne.s32.totalorder %s370, %s371
      %p380 = scmp.eq.s32.totalorder %s98, 0
      %p381 = por %p379, %p380
      %p382 = scmp.ne.s32.totalorder %s370, %s371
      %p383 = scmp.eq.s32.totalorder %s99, 1
      %p384 = por %p382, %p383
      %p386 = scmp.ne.s32.totalorder %s371, %s385
      %p387 = scmp.eq.s32.totalorder %s99, 0
      %p388 = por %p386, %p387
      %s390 = sadd.s32 %s389, 1
      %p393 = scmp.eq.s32.totalorder %s93, 1
      %p394 = scmp.ne.s32.totalorder %s389, %s391
      %p395 = scmp.eq.s32.totalorder %s93, 0
      %p396 = por %p394, %p395
      %p397 = scmp.ne.s32.totalorder %s389, %s391
      %p398 = scmp.eq.s32.totalorder %s98, 1
      %p399 = por %p397, %p398
      %p400 = scmp.ne.s32.totalorder %s391, %s392
      %p401 = scmp.eq.s32.totalorder %s98, 0
      %p402 = por %p400, %p401
      %p403 = scmp.ne.s32.totalorder %s391, %s392
      %p404 = scmp.eq.s32.totalorder %s99, 1
      %p405 = por %p403, %p404
      %p407 = scmp.ne.s32.totalorder %s392, %s406
      %p408 = scmp.eq.s32.totalorder %s99, 0
      %p409 = por %p407, %p408
      %s411 = sadd.s32 %s410, 1
      %p414 = scmp.eq.s32.totalorder %s93, 1
      %p415 = scmp.ne.s32.totalorder %s410, %s412
      %p416 = scmp.eq.s32.totalorder %s93, 0
      %p417 = por %p415, %p416
      %p418 = scmp.ne.s32.totalorder %s410, %s412
      %p419 = scmp.eq.s32.totalorder %s98, 1
      %p420 = por %p418, %p419
      %p421 = scmp.ne.s32.totalorder %s412, %s413
      %p422 = scmp.eq.s32.totalorder %s98, 0
      %p423 = por %p421, %p422
      %p424 = scmp.ne.s32.totalorder %s412, %s413
      %p425 = scmp.eq.s32.totalorder %s99, 1
      %p426 = por %p424, %p425
      %p428 = scmp.ne.s32.totalorder %s413, %s427
      %p429 = scmp.eq.s32.totalorder %s99, 0
      %p430 = por %p428, %p429
      %s432 = sadd.s32 %s431, 1
      %p435 = scmp.eq.s32.totalorder %s93, 1
      %p436 = scmp.ne.s32.totalorder %s431, %s433
      %p437 = scmp.eq.s32.totalorder %s93, 0
      %p438 = por %p436, %p437
      %p439 = scmp.ne.s32.totalorder %s431, %s433
      %p440 = scmp.eq.s32.totalorder %s98, 1
      %p441 = por %p439, %p440
      %p442 = scmp.ne.s32.totalorder %s433, %s434
      %p443 = scmp.eq.s32.totalorder %s98, 0
      %p444 = por %p442, %p443
      %p445 = scmp.ne.s32.totalorder %s433, %s434
      %p446 = scmp.eq.s32.totalorder %s99, 1
      %p447 = por %p445, %p446
      %p449 = scmp.ne.s32.totalorder %s434, %s448
      %p450 = scmp.eq.s32.totalorder %s99, 0
      %p451 = por %p449, %p450
      %s453 = sadd.s32 %s452, 1
      %p456 = scmp.eq.s32.totalorder %s93, 1
      %p457 = scmp.ne.s32.totalorder %s452, %s454
      %p458 = scmp.eq.s32.totalorder %s93, 0
      %p459 = por %p457, %p458
      %p460 = scmp.ne.s32.totalorder %s452, %s454
      %p461 = scmp.eq.s32.totalorder %s98, 1
      %p462 = por %p460, %p461
      %p463 = scmp.ne.s32.totalorder %s454, %s455
      %p464 = scmp.eq.s32.totalorder %s98, 0
      %p465 = por %p463, %p464
      %p466 = scmp.ne.s32.totalorder %s454, %s455
      %p467 = scmp.eq.s32.totalorder %s99, 1
      %p468 = por %p466, %p467
      %p470 = scmp.ne.s32.totalorder %s455, %s469
      %p471 = scmp.eq.s32.totalorder %s99, 0
      %p472 = por %p470, %p471
      %s474 = sadd.s32 %s473, 1
      %p477 = scmp.eq.s32.totalorder %s93, 1
      %p478 = scmp.ne.s32.totalorder %s473, %s475
      %p479 = scmp.eq.s32.totalorder %s93, 0
      %p480 = por %p478, %p479
      %p481 = scmp.ne.s32.totalorder %s473, %s475
      %p482 = scmp.eq.s32.totalorder %s98, 1
      %p483 = por %p481, %p482
      %p484 = scmp.ne.s32.totalorder %s475, %s476
      %p485 = scmp.eq.s32.totalorder %s98, 0
      %p486 = por %p484, %p485
      %p487 = scmp.ne.s32.totalorder %s475, %s476
      %p488 = scmp.eq.s32.totalorder %s99, 1
      %p489 = por %p487, %p488
      %p491 = scmp.ne.s32.totalorder %s476, %s490
      %p492 = scmp.eq.s32.totalorder %s99, 0
      %p493 = por %p491, %p492
      %s495 = sadd.s32 %s494, 1
      %p498 = scmp.eq.s32.totalorder %s93, 1
      %p499 = scmp.ne.s32.totalorder %s494, %s496
      %p500 = scmp.eq.s32.totalorder %s93, 0
      %p501 = por %p499, %p500
      %p502 = scmp.ne.s32.totalorder %s494, %s496
      %p503 = scmp.eq.s32.totalorder %s98, 1
      %p504 = por %p502, %p503
      %p505 = scmp.ne.s32.totalorder %s496, %s497
      %p506 = scmp.eq.s32.totalorder %s98, 0
      %p507 = por %p505, %p506
      %p508 = scmp.ne.s32.totalorder %s496, %s497
      %p509 = scmp.eq.s32.totalorder %s99, 1
      %p510 = por %p508, %p509
      %p512 = scmp.ne.s32.totalorder %s497, %s511
      %p513 = scmp.eq.s32.totalorder %s99, 0
      %p514 = por %p512, %p513
      %s516 = sadd.s32 %s515, 1
      %p519 = scmp.eq.s32.totalorder %s93, 1
      %p520 = scmp.ne.s32.totalorder %s515, %s517
      %p521 = scmp.eq.s32.totalorder %s93, 0
      %p522 = por %p520, %p521
      %p523 = scmp.ne.s32.totalorder %s515, %s517
      %p524 = scmp.eq.s32.totalorder %s98, 1
      %p525 = por %p523, %p524
      %p526 = scmp.ne.s32.totalorder %s517, %s518
      %p527 = scmp.eq.s32.totalorder %s98, 0
      %p528 = por %p526, %p527
      %p529 = scmp.ne.s32.totalorder %s517, %s518
      %p530 = scmp.eq.s32.totalorder %s99, 1
      %p531 = por %p529, %p530
      %p533 = scmp.ne.s32.totalorder %s518, %s532
      %p534 = scmp.eq.s32.totalorder %s99, 0
      %p535 = por %p533, %p534
      %s537 = sadd.s32 %s536, 1
      %p540 = scmp.eq.s32.totalorder %s93, 1
      %p541 = scmp.ne.s32.totalorder %s536, %s538
      %p542 = scmp.eq.s32.totalorder %s93, 0
      %p543 = por %p541, %p542
      %p544 = scmp.ne.s32.totalorder %s536, %s538
      %p545 = scmp.eq.s32.totalorder %s98, 1
      %p546 = por %p544, %p545
      %p547 = scmp.ne.s32.totalorder %s538, %s539
      %p548 = scmp.eq.s32.totalorder %s98, 0
      %p549 = por %p547, %p548
      %p550 = scmp.ne.s32.totalorder %s538, %s539
      %p551 = scmp.eq.s32.totalorder %s99, 1
      %p552 = por %p550, %p551
      %p554 = scmp.ne.s32.totalorder %s539, %s553
      %p555 = scmp.eq.s32.totalorder %s99, 0
      %p556 = por %p554, %p555
      %s558 = sadd.s32 %s557, 1
      %p561 = scmp.eq.s32.totalorder %s93, 1
      %p562 = scmp.ne.s32.totalorder %s557, %s559
      %p563 = scmp.eq.s32.totalorder %s93, 0
      %p564 = por %p562, %p563
      %p565 = scmp.ne.s32.totalorder %s557, %s559
      %p566 = scmp.eq.s32.totalorder %s98, 1
      %p567 = por %p565, %p566
      %p568 = scmp.ne.s32.totalorder %s559, %s560
      %p569 = scmp.eq.s32.totalorder %s98, 0
      %p570 = por %p568, %p569
      %p571 = scmp.ne.s32.totalorder %s559, %s560
      %p572 = scmp.eq.s32.totalorder %s99, 1
      %p573 = por %p571, %p572
      %p575 = scmp.ne.s32.totalorder %s560, %s574
      %p576 = scmp.eq.s32.totalorder %s99, 0
      %p577 = por %p575, %p576
      %s579 = sadd.s32 %s578, 1
      %p582 = scmp.eq.s32.totalorder %s93, 1
      %p583 = scmp.ne.s32.totalorder %s578, %s580
      %p584 = scmp.eq.s32.totalorder %s93, 0
      %p585 = por %p583, %p584
      %p586 = scmp.ne.s32.totalorder %s578, %s580
      %p587 = scmp.eq.s32.totalorder %s98, 1
      %p588 = por %p586, %p587
      %p589 = scmp.ne.s32.totalorder %s580, %s581
      %p590 = scmp.eq.s32.totalorder %s98, 0
      %p591 = por %p589, %p590
      %p592 = scmp.ne.s32.totalorder %s580, %s581
      %p593 = scmp.eq.s32.totalorder %s99, 1
      %p594 = por %p592, %p593
      %p596 = scmp.ne.s32.totalorder %s581, %s595
      %p597 = scmp.eq.s32.totalorder %s99, 0
      %p598 = por %p596, %p597
      %s600 = sadd.s32 %s599, 1
      %p603 = scmp.eq.s32.totalorder %s93, 1
      %p604 = scmp.ne.s32.totalorder %s599, %s601
      %p605 = scmp.eq.s32.totalorder %s93, 0
      %p606 = por %p604, %p605
      %p607 = scmp.ne.s32.totalorder %s599, %s601
      %p608 = scmp.eq.s32.totalorder %s98, 1
      %p609 = por %p607, %p608
      %p610 = scmp.ne.s32.totalorder %s601, %s602
      %p611 = scmp.eq.s32.totalorder %s98, 0
      %p612 = por %p610, %p611
      %p613 = scmp.ne.s32.totalorder %s601, %s602
      %p614 = scmp.eq.s32.totalorder %s99, 1
      %p615 = por %p613, %p614
      %p617 = scmp.ne.s32.totalorder %s602, %s616
      %p618 = scmp.eq.s32.totalorder %s99, 0
      %p619 = por %p617, %p618
      %s621 = sadd.s32 %s620, 1
      %p624 = scmp.eq.s32.totalorder %s93, 1
      %p625 = scmp.ne.s32.totalorder %s620, %s622
      %p626 = scmp.eq.s32.totalorder %s93, 0
      %p627 = por %p625, %p626
      %p628 = scmp.ne.s32.totalorder %s620, %s622
      %p629 = scmp.eq.s32.totalorder %s98, 1
      %p630 = por %p628, %p629
      %p631 = scmp.ne.s32.totalorder %s622, %s623
      %p632 = scmp.eq.s32.totalorder %s98, 0
      %p633 = por %p631, %p632
      %p634 = scmp.ne.s32.totalorder %s622, %s623
      %p635 = scmp.eq.s32.totalorder %s99, 1
      %p636 = por %p634, %p635
      %p638 = scmp.ne.s32.totalorder %s623, %s637
      %p639 = scmp.eq.s32.totalorder %s99, 0
      %p640 = por %p638, %p639
      %s642 = sadd.s32 %s641, 1
      %p645 = scmp.eq.s32.totalorder %s93, 1
      %p646 = scmp.ne.s32.totalorder %s641, %s643
      %p647 = scmp.eq.s32.totalorder %s93, 0
      %p648 = por %p646, %p647
      %p649 = scmp.ne.s32.totalorder %s641, %s643
      %p650 = scmp.eq.s32.totalorder %s98, 1
      %p651 = por %p649, %p650
      %p652 = scmp.ne.s32.totalorder %s643, %s644
      %p653 = scmp.eq.s32.totalorder %s98, 0
      %p654 = por %p652, %p653
      %p655 = scmp.ne.s32.totalorder %s643, %s644
      %p656 = scmp.eq.s32.totalorder %s99, 1
      %p657 = por %p655, %p656
      %p659 = scmp.ne.s32.totalorder %s644, %s658
      %p660 = scmp.eq.s32.totalorder %s99, 0
      %p661 = por %p659, %p660
      %s663 = sadd.s32 %s662, 1
      %p666 = scmp.eq.s32.totalorder %s93, 1
      %p667 = scmp.ne.s32.totalorder %s662, %s664
      %p668 = scmp.eq.s32.totalorder %s93, 0
      %p669 = por %p667, %p668
      %p670 = scmp.ne.s32.totalorder %s662, %s664
      %p671 = scmp.eq.s32.totalorder %s98, 1
      %p672 = por %p670, %p671
      %p673 = scmp.ne.s32.totalorder %s664, %s665
      %p674 = scmp.eq.s32.totalorder %s98, 0
      %p675 = por %p673, %p674
      %p676 = scmp.ne.s32.totalorder %s664, %s665
      %p677 = scmp.eq.s32.totalorder %s99, 1
      %p678 = por %p676, %p677
      %p680 = scmp.ne.s32.totalorder %s665, %s679
      %p681 = scmp.eq.s32.totalorder %s99, 0
      %p682 = por %p680, %p681
      %s684 = sadd.s32 %s683, 1
      %p687 = scmp.eq.s32.totalorder %s93, 1
      %p688 = scmp.ne.s32.totalorder %s683, %s685
      %p689 = scmp.eq.s32.totalorder %s93, 0
      %p690 = por %p688, %p689
      %p691 = scmp.ne.s32.totalorder %s683, %s685
      %p692 = scmp.eq.s32.totalorder %s98, 1
      %p693 = por %p691, %p692
      %p694 = scmp.ne.s32.totalorder %s685, %s686
      %p695 = scmp.eq.s32.totalorder %s98, 0
      %p696 = por %p694, %p695
      %p697 = scmp.ne.s32.totalorder %s685, %s686
      %p698 = scmp.eq.s32.totalorder %s99, 1
      %p699 = por %p697, %p698
      %p701 = scmp.ne.s32.totalorder %s686, %s700
      %p702 = scmp.eq.s32.totalorder %s99, 0
      %p703 = por %p701, %p702
      %s705 = sadd.s32 %s704, 1
      %p708 = scmp.eq.s32.totalorder %s93, 1
      %p709 = scmp.ne.s32.totalorder %s704, %s706
      %p710 = scmp.eq.s32.totalorder %s93, 0
      %p711 = por %p709, %p710
      %p712 = scmp.ne.s32.totalorder %s704, %s706
      %p713 = scmp.eq.s32.totalorder %s98, 1
      %p714 = por %p712, %p713
      %p715 = scmp.ne.s32.totalorder %s706, %s707
      %p716 = scmp.eq.s32.totalorder %s98, 0
      %p717 = por %p715, %p716
      %p718 = scmp.ne.s32.totalorder %s706, %s707
      %p719 = scmp.eq.s32.totalorder %s99, 1
      %p720 = por %p718, %p719
      %p722 = scmp.ne.s32.totalorder %s707, %s721
      %p723 = scmp.eq.s32.totalorder %s99, 0
      %p724 = por %p722, %p723
      %s726 = sadd.s32 %s725, 1
      %p729 = scmp.eq.s32.totalorder %s93, 1
      %p730 = scmp.ne.s32.totalorder %s725, %s727
      %p731 = scmp.eq.s32.totalorder %s93, 0
      %p732 = por %p730, %p731
      %p733 = scmp.ne.s32.totalorder %s725, %s727
      %p734 = scmp.eq.s32.totalorder %s98, 1
      %p735 = por %p733, %p734
      %p736 = scmp.ne.s32.totalorder %s727, %s728
      %p737 = scmp.eq.s32.totalorder %s98, 0
      %p738 = por %p736, %p737
      %p739 = scmp.ne.s32.totalorder %s727, %s728
      %p740 = scmp.eq.s32.totalorder %s99, 1
      %p741 = por %p739, %p740
      %p743 = scmp.ne.s32.totalorder %s728, %s742
      %p744 = scmp.eq.s32.totalorder %s99, 0
      %p745 = por %p743, %p744
      %s747 = sadd.s32 %s746, 1
      %p750 = scmp.eq.s32.totalorder %s93, 1
      %p751 = scmp.ne.s32.totalorder %s746, %s748
      %p752 = scmp.eq.s32.totalorder %s93, 0
      %p753 = por %p751, %p752
      %p754 = scmp.ne.s32.totalorder %s746, %s748
      %p755 = scmp.eq.s32.totalorder %s98, 1
      %p756 = por %p754, %p755
      %p757 = scmp.ne.s32.totalorder %s748, %s749
      %p758 = scmp.eq.s32.totalorder %s98, 0
      %p759 = por %p757, %p758
      %p760 = scmp.ne.s32.totalorder %s748, %s749
      %p761 = scmp.eq.s32.totalorder %s99, 1
      %p762 = por %p760, %p761
      %p764 = scmp.ne.s32.totalorder %s749, %s763
      %p765 = scmp.eq.s32.totalorder %s99, 0
      %p766 = por %p764, %p765
      %s768 = sadd.s32 %s767, 1
      %p771 = scmp.eq.s32.totalorder %s93, 1
      %p772 = scmp.ne.s32.totalorder %s767, %s769
      %p773 = scmp.eq.s32.totalorder %s93, 0
      %p774 = por %p772, %p773
      %p775 = scmp.ne.s32.totalorder %s767, %s769
      %p776 = scmp.eq.s32.totalorder %s98, 1
      %p777 = por %p775, %p776
      %p778 = scmp.ne.s32.totalorder %s769, %s770
      %p779 = scmp.eq.s32.totalorder %s98, 0
      %p780 = por %p778, %p779
      %p781 = scmp.ne.s32.totalorder %s769, %s770
      %p782 = scmp.eq.s32.totalorder %s99, 1
      %p783 = por %p781, %p782
      %p785 = scmp.ne.s32.totalorder %s770, %s784
      %p786 = scmp.eq.s32.totalorder %s99, 0
      %p787 = por %p785, %p786
      %s789 = sadd.s32 %s788, 1
      %p792 = scmp.eq.s32.totalorder %s93, 1
      %p793 = scmp.ne.s32.totalorder %s788, %s790
      %p794 = scmp.eq.s32.totalorder %s93, 0
      %p795 = por %p793, %p794
      %p796 = scmp.ne.s32.totalorder %s788, %s790
      %p797 = scmp.eq.s32.totalorder %s98, 1
      %p798 = por %p796, %p797
      %p799 = scmp.ne.s32.totalorder %s790, %s791
      %p800 = scmp.eq.s32.totalorder %s98, 0
      %p801 = por %p799, %p800
      %p802 = scmp.ne.s32.totalorder %s790, %s791
      %p803 = scmp.eq.s32.totalorder %s99, 1
      %p804 = por %p802, %p803
      %p806 = scmp.ne.s32.totalorder %s791, %s805
      %p807 = scmp.eq.s32.totalorder %s99, 0
      %p808 = por %p806, %p807
      %s810 = sadd.s32 %s809, 1
      %p813 = scmp.eq.s32.totalorder %s93, 1
      %p814 = scmp.ne.s32.totalorder %s809, %s811
      %p815 = scmp.eq.s32.totalorder %s93, 0
      %p816 = por %p814, %p815
      %p817 = scmp.ne.s32.totalorder %s809, %s811
      %p818 = scmp.eq.s32.totalorder %s98, 1
      %p819 = por %p817, %p818
      %p820 = scmp.ne.s32.totalorder %s811, %s812
      %p821 = scmp.eq.s32.totalorder %s98, 0
      %p822 = por %p820, %p821
      %p823 = scmp.ne.s32.totalorder %s811, %s812
      %p824 = scmp.eq.s32.totalorder %s99, 1
      %p825 = por %p823, %p824
      %p827 = scmp.ne.s32.totalorder %s812, %s826
      %p828 = scmp.eq.s32.totalorder %s99, 0
      %p829 = por %p827, %p828
      %s830 = ssub.s32 %s93, %s100
      %p831 = scmp.eq.s32.totalorder %s830, 0
      %s833 = sadd.s32 %s832, 1
      %s834 = scalar_select %p831, %s832, %s833
      %p837 = pneg %p831
      %p838 = scmp.eq.s32.totalorder %s93, 1
      %p839 = por %p837, %p838
      %p840 = scmp.ne.s32.totalorder %s832, %s835
      %p841 = scmp.eq.s32.totalorder %s93, 0
      %p842 = por %p840, %p841
      %p843 = scmp.ne.s32.totalorder %s832, %s835
      %p844 = scmp.eq.s32.totalorder %s98, 1
      %p845 = por %p843, %p844
      %p846 = scmp.ne.s32.totalorder %s835, %s836
      %p847 = scmp.eq.s32.totalorder %s98, 0
      %p848 = por %p846, %p847
      %p849 = scmp.ne.s32.totalorder %s835, %s836
      %p850 = scmp.eq.s32.totalorder %s99, 1
      %p851 = por %p849, %p850
      %p853 = scmp.ne.s32.totalorder %s836, %s852
      %p854 = scmp.eq.s32.totalorder %s99, 0
      %p855 = por %p853, %p854
      %p856 = scmp.le.s32.totalorder 1, %s93
      %p857 = scmp.lt.s32.totalorder %s93, 3
      %p858 = pnand %p856, %p857
      %p859 = pneg %p858
      // Predicated region
      $region9: #{tpu_custom_call.1} parent=5 // pred_check
        _
      $region10: #{tpu_custom_call.1} parent=5 // pred_check_branch
        %861 = sbr.rel (%p858) target = $region12
      $region11: #{tpu_custom_call.1} parent=5 // pred_region
        %s862 = ssub.s32 %s93, 1
        // Predicated region
        $region13: #{tpu_custom_call.1} parent=11 // pred_check
          %p863 = pneg %p166
        $region14: #{tpu_custom_call.1} parent=11 // pred_check_branch
          %865 = sbr.rel (%p863) target = $region16
        $region15: #{tpu_custom_call.1} parent=11 // pred_region
          %s867 = ssub.s32 128, 128
          %868 = vsyncadd [#allocation7], %s867
          %s870 = sshll.u32 [#allocation8], 4
          %s871 = int_to_ptr.vmem [resolvable:$true] %s870
          %873 = dma.hbm_to_vmem [thread:$0]  %s5, 128, %s871, [#allocation7]
        $region16: #{tpu_custom_call.1} parent=11 // pred_fallthru
          _
        // Predicated region
        $region17: #{tpu_custom_call.1} parent=11 // pred_check
          %p874 = pneg %p213
        $region18: #{tpu_custom_call.1} parent=11 // pred_check_branch
          %876 = sbr.rel (%p874) target = $region20
        $region19: #{tpu_custom_call.1} parent=11 // pred_region
          %s878 = ssub.s32 16, 16
          %879 = vsyncadd [#allocation10], %s878
          %s881 = sshll.u32 [#allocation11], 4
          %s882 = int_to_ptr.vmem [resolvable:$true] %s881
          %884 = dma.hbm_to_vmem [thread:$0]  %s9, 16, %s882, [#allocation10]
        $region20: #{tpu_custom_call.1} parent=11 // pred_fallthru
          _
        // Predicated region
        $region21: #{tpu_custom_call.1} parent=11 // pred_check
          %p885 = pneg %p234
        $region22: #{tpu_custom_call.1} parent=11 // pred_check_branch
          %887 = sbr.rel (%p885) target = $region24
        $region23: #{tpu_custom_call.1} parent=11 // pred_region
          %s889 = ssub.s32 16, 16
          %890 = vsyncadd [#allocation13], %s889
          %s892 = sshll.u32 [#allocation12], 4
          %s893 = int_to_ptr.vmem [resolvable:$true] %s892
          %895 = dma.hbm_to_vmem [thread:$0]  %s11, 16, %s893, [#allocation13]
        $region24: #{tpu_custom_call.1} parent=11 // pred_fallthru
          _
        // Predicated region
        $region25: #{tpu_custom_call.1} parent=11 // pred_check
          %p896 = pneg %p255
        $region26: #{tpu_custom_call.1} parent=11 // pred_check_branch
          %898 = sbr.rel (%p896) target = $region28
        $region27: #{tpu_custom_call.1} parent=11 // pred_region
          _
        $region28: #{tpu_custom_call.1} parent=11 // pred_fallthru
          _
        // Predicated region
        $region29: #{tpu_custom_call.1} parent=11 // pred_check
          %p899 = pneg %p276
        $region30: #{tpu_custom_call.1} parent=11 // pred_check_branch
          %901 = sbr.rel (%p899) target = $region32
        $region31: #{tpu_custom_call.1} parent=11 // pred_region
          %s903 = ssub.s32 16, 16
          %904 = vsyncadd [#allocation13], %s903
          %s906 = sshll.u32 [#allocation14], 4
          %s907 = int_to_ptr.vmem [resolvable:$true] %s906
          %909 = dma.hbm_to_vmem [thread:$0]  %s15, 16, %s907, [#allocation13]
        $region32: #{tpu_custom_call.1} parent=11 // pred_fallthru
          _
        // Predicated region
        $region33: #{tpu_custom_call.1} parent=11 // pred_check
          %p910 = pneg %p297
        $region34: #{tpu_custom_call.1} parent=11 // pred_check_branch
          %912 = sbr.rel (%p910) target = $region36
        $region35: #{tpu_custom_call.1} parent=11 // pred_region
          _
        $region36: #{tpu_custom_call.1} parent=11 // pred_fallthru
          _
        // Predicated region
        $region37: #{tpu_custom_call.1} parent=11 // pred_check
          %p913 = pneg %p318
        $region38: #{tpu_custom_call.1} parent=11 // pred_check_branch
          %915 = sbr.rel (%p913) target = $region40
        $region39: #{tpu_custom_call.1} parent=11 // pred_region
          %s917 = ssub.s32 16, 16
          %918 = vsyncadd [#allocation16], %s917
          %s920 = sshll.u32 [#allocation15], 4
          %s921 = int_to_ptr.vmem [resolvable:$true] %s920
          %923 = dma.hbm_to_vmem [thread:$0]  %s19, 16, %s921, [#allocation16]
        $region40: #{tpu_custom_call.1} parent=11 // pred_fallthru
          _
        // Predicated region
        $region41: #{tpu_custom_call.1} parent=11 // pred_check
          %p924 = pneg %p339
        $region42: #{tpu_custom_call.1} parent=11 // pred_check_branch
          %926 = sbr.rel (%p924) target = $region44
        $region43: #{tpu_custom_call.1} parent=11 // pred_region
          %s928 = ssub.s32 16, 16
          %929 = vsyncadd [#allocation16], %s928
          %s931 = sshll.u32 [#allocation17], 4
          %s932 = int_to_ptr.vmem [resolvable:$true] %s931
          %934 = dma.hbm_to_vmem [thread:$0]  %s21, 16, %s932, [#allocation16]
        $region44: #{tpu_custom_call.1} parent=11 // pred_fallthru
          _
        // Predicated region
        $region45: #{tpu_custom_call.1} parent=11 // pred_check
          %p935 = pneg %p360
        $region46: #{tpu_custom_call.1} parent=11 // pred_check_branch
          %937 = sbr.rel (%p935) target = $region48
        $region47: #{tpu_custom_call.1} parent=11 // pred_region
          %s939 = ssub.s32 16, 16
          %940 = vsyncadd [#allocation19], %s939
          %s942 = sshll.u32 [#allocation18], 4
          %s943 = int_to_ptr.vmem [resolvable:$true] %s942
          %945 = dma.hbm_to_vmem [thread:$0]  %s23, 16, %s943, [#allocation19]
        $region48: #{tpu_custom_call.1} parent=11 // pred_fallthru
          _
        // Predicated region
        $region49: #{tpu_custom_call.1} parent=11 // pred_check
          %p946 = pneg %p381
        $region50: #{tpu_custom_call.1} parent=11 // pred_check_branch
          %948 = sbr.rel (%p946) target = $region52
        $region51: #{tpu_custom_call.1} parent=11 // pred_region
          _
        $region52: #{tpu_custom_call.1} parent=11 // pred_fallthru
          _
        // Predicated region
        $region53: #{tpu_custom_call.1} parent=11 // pred_check
          %p949 = pneg %p402
        $region54: #{tpu_custom_call.1} parent=11 // pred_check_branch
          %951 = sbr.rel (%p949) target = $region56
        $region55: #{tpu_custom_call.1} parent=11 // pred_region
          %s953 = ssub.s32 16, 16
          %954 = vsyncadd [#allocation19], %s953
          %s956 = sshll.u32 [#allocation20], 4
          %s957 = int_to_ptr.vmem [resolvable:$true] %s956
          %959 = dma.hbm_to_vmem [thread:$0]  %s27, 16, %s957, [#allocation19]
        $region56: #{tpu_custom_call.1} parent=11 // pred_fallthru
          _
        // Predicated region
        $region57: #{tpu_custom_call.1} parent=11 // pred_check
          %p960 = pneg %p423
        $region58: #{tpu_custom_call.1} parent=11 // pred_check_branch
          %962 = sbr.rel (%p960) target = $region60
        $region59: #{tpu_custom_call.1} parent=11 // pred_region
          _
        $region60: #{tpu_custom_call.1} parent=11 // pred_fallthru
          _
        // Predicated region
        $region61: #{tpu_custom_call.1} parent=11 // pred_check
          %p963 = pneg %p444
        $region62: #{tpu_custom_call.1} parent=11 // pred_check_branch
          %965 = sbr.rel (%p963) target = $region64
        $region63: #{tpu_custom_call.1} parent=11 // pred_region
          %s967 = ssub.s32 16, 16
          %968 = vsyncadd [#allocation22], %s967
          %s970 = sshll.u32 [#allocation21], 4
          %s971 = int_to_ptr.vmem [resolvable:$true] %s970
          %973 = dma.hbm_to_vmem [thread:$0]  %s31, 16, %s971, [#allocation22]
        $region64: #{tpu_custom_call.1} parent=11 // pred_fallthru
          _
        // Predicated region
        $region65: #{tpu_custom_call.1} parent=11 // pred_check
          %p974 = pneg %p465
        $region66: #{tpu_custom_call.1} parent=11 // pred_check_branch
          %976 = sbr.rel (%p974) target = $region68
        $region67: #{tpu_custom_call.1} parent=11 // pred_region
          %s978 = ssub.s32 16, 16
          %979 = vsyncadd [#allocation22], %s978
          %s981 = sshll.u32 [#allocation23], 4
          %s982 = int_to_ptr.vmem [resolvable:$true] %s981
          %984 = dma.hbm_to_vmem [thread:$0]  %s33, 16, %s982, [#allocation22]
        $region68: #{tpu_custom_call.1} parent=11 // pred_fallthru
          _
        // Predicated region
        $region69: #{tpu_custom_call.1} parent=11 // pred_check
          %p985 = pneg %p486
        $region70: #{tpu_custom_call.1} parent=11 // pred_check_branch
          %987 = sbr.rel (%p985) target = $region72
        $region71: #{tpu_custom_call.1} parent=11 // pred_region
          %s989 = ssub.s32 16, 16
          %990 = vsyncadd [#allocation25], %s989
          %s992 = sshll.u32 [#allocation24], 4
          %s993 = int_to_ptr.vmem [resolvable:$true] %s992
          %995 = dma.hbm_to_vmem [thread:$0]  %s35, 16, %s993, [#allocation25]
        $region72: #{tpu_custom_call.1} parent=11 // pred_fallthru
          _
        // Predicated region
        $region73: #{tpu_custom_call.1} parent=11 // pred_check
          %p996 = pneg %p507
        $region74: #{tpu_custom_call.1} parent=11 // pred_check_branch
          %998 = sbr.rel (%p996) target = $region76
        $region75: #{tpu_custom_call.1} parent=11 // pred_region
          _
        $region76: #{tpu_custom_call.1} parent=11 // pred_fallthru
          _
        // Predicated region
        $region77: #{tpu_custom_call.1} parent=11 // pred_check
          %p999 = pneg %p528
        $region78: #{tpu_custom_call.1} parent=11 // pred_check_branch
          %1001 = sbr.rel (%p999) target = $region80
        $region79: #{tpu_custom_call.1} parent=11 // pred_region
          _
        $region80: #{tpu_custom_call.1} parent=11 // pred_fallthru
          _
        // Predicated region
        $region81: #{tpu_custom_call.1} parent=11 // pred_check
          %p1002 = pneg %p549
        $region82: #{tpu_custom_call.1} parent=11 // pred_check_branch
          %1004 = sbr.rel (%p1002) target = $region84
        $region83: #{tpu_custom_call.1} parent=11 // pred_region
          _
        $region84: #{tpu_custom_call.1} parent=11 // pred_fallthru
          _
        // Predicated region
        $region85: #{tpu_custom_call.1} parent=11 // pred_check
          %p1005 = pneg %p570
        $region86: #{tpu_custom_call.1} parent=11 // pred_check_branch
          %1007 = sbr.rel (%p1005) target = $region88
        $region87: #{tpu_custom_call.1} parent=11 // pred_region
          _
        $region88: #{tpu_custom_call.1} parent=11 // pred_fallthru
          _
        // Predicated region
        $region89: #{tpu_custom_call.1} parent=11 // pred_check
          %p1008 = pneg %p591
        $region90: #{tpu_custom_call.1} parent=11 // pred_check_branch
          %1010 = sbr.rel (%p1008) target = $region92
        $region91: #{tpu_custom_call.1} parent=11 // pred_region
          %s1012 = ssub.s32 16, 16
          %1013 = vsyncadd [#allocation25], %s1012
          %s1015 = sshll.u32 [#allocation26], 4
          %s1016 = int_to_ptr.vmem [resolvable:$true] %s1015
          %1018 = dma.hbm_to_vmem [thread:$0]  %s45, 16, %s1016, [#allocation25]
        $region92: #{tpu_custom_call.1} parent=11 // pred_fallthru
          _
        // Predicated region
        $region93: #{tpu_custom_call.1} parent=11 // pred_check
          %p1019 = pneg %p612
        $region94: #{tpu_custom_call.1} parent=11 // pred_check_branch
          %1021 = sbr.rel (%p1019) target = $region96
        $region95: #{tpu_custom_call.1} parent=11 // pred_region
          %s1023 = ssub.s32 16, 16
          %1024 = vsyncadd [#allocation28], %s1023
          %s1026 = sshll.u32 [#allocation27], 4
          %s1027 = int_to_ptr.vmem [resolvable:$true] %s1026
          %1029 = dma.hbm_to_vmem [thread:$0]  %s47, 16, %s1027, [#allocation28]
        $region96: #{tpu_custom_call.1} parent=11 // pred_fallthru
          _
        // Predicated region
        $region97: #{tpu_custom_call.1} parent=11 // pred_check
          %p1030 = pneg %p633
        $region98: #{tpu_custom_call.1} parent=11 // pred_check_branch
          %1032 = sbr.rel (%p1030) target = $region100
        $region99: #{tpu_custom_call.1} parent=11 // pred_region
          _
        $region100: #{tpu_custom_call.1} parent=11 // pred_fallthru
          _
        // Predicated region
        $region101: #{tpu_custom_call.1} parent=11 // pred_check
          %p1033 = pneg %p654
        $region102: #{tpu_custom_call.1} parent=11 // pred_check_branch
          %1035 = sbr.rel (%p1033) target = $region104
        $region103: #{tpu_custom_call.1} parent=11 // pred_region
          %s1037 = ssub.s32 16, 16
          %1038 = vsyncadd [#allocation28], %s1037
          %s1040 = sshll.u32 [#allocation29], 4
          %s1041 = int_to_ptr.vmem [resolvable:$true] %s1040
          %1043 = dma.hbm_to_vmem [thread:$0]  %s51, 16, %s1041, [#allocation28]
        $region104: #{tpu_custom_call.1} parent=11 // pred_fallthru
          _
        // Predicated region
        $region105: #{tpu_custom_call.1} parent=11 // pred_check
          %p1044 = pneg %p675
        $region106: #{tpu_custom_call.1} parent=11 // pred_check_branch
          %1046 = sbr.rel (%p1044) target = $region108
        $region107: #{tpu_custom_call.1} parent=11 // pred_region
          _
        $region108: #{tpu_custom_call.1} parent=11 // pred_fallthru
          _
        // Predicated region
        $region109: #{tpu_custom_call.1} parent=11 // pred_check
          %p1047 = pneg %p696
        $region110: #{tpu_custom_call.1} parent=11 // pred_check_branch
          %1049 = sbr.rel (%p1047) target = $region112
        $region111: #{tpu_custom_call.1} parent=11 // pred_region
          _
        $region112: #{tpu_custom_call.1} parent=11 // pred_fallthru
          _
        // Predicated region
        $region113: #{tpu_custom_call.1} parent=11 // pred_check
          %p1050 = pneg %p717
        $region114: #{tpu_custom_call.1} parent=11 // pred_check_branch
          %1052 = sbr.rel (%p1050) target = $region116
        $region115: #{tpu_custom_call.1} parent=11 // pred_region
          _
        $region116: #{tpu_custom_call.1} parent=11 // pred_fallthru
          _
        // Predicated region
        $region117: #{tpu_custom_call.1} parent=11 // pred_check
          %p1053 = pneg %p738
        $region118: #{tpu_custom_call.1} parent=11 // pred_check_branch
          %1055 = sbr.rel (%p1053) target = $region120
        $region119: #{tpu_custom_call.1} parent=11 // pred_region
          _
        $region120: #{tpu_custom_call.1} parent=11 // pred_fallthru
          _
        // Predicated region
        $region121: #{tpu_custom_call.1} parent=11 // pred_check
          %p1056 = pneg %p759
        $region122: #{tpu_custom_call.1} parent=11 // pred_check_branch
          %1058 = sbr.rel (%p1056) target = $region124
        $region123: #{tpu_custom_call.1} parent=11 // pred_region
          _
        $region124: #{tpu_custom_call.1} parent=11 // pred_fallthru
          _
        // Predicated region
        $region125: #{tpu_custom_call.1} parent=11 // pred_check
          %p1059 = pneg %p780
        $region126: #{tpu_custom_call.1} parent=11 // pred_check_branch
          %1061 = sbr.rel (%p1059) target = $region128
        $region127: #{tpu_custom_call.1} parent=11 // pred_region
          _
        $region128: #{tpu_custom_call.1} parent=11 // pred_fallthru
          _
        // Predicated region
        $region129: #{tpu_custom_call.1} parent=11 // pred_check
          %p1062 = pneg %p801
        $region130: #{tpu_custom_call.1} parent=11 // pred_check_branch
          %1064 = sbr.rel (%p1062) target = $region132
        $region131: #{tpu_custom_call.1} parent=11 // pred_region
          _
        $region132: #{tpu_custom_call.1} parent=11 // pred_fallthru
          _
        // Predicated region
        $region133: #{tpu_custom_call.1} parent=11 // pred_check
          %p1065 = pneg %p822
        $region134: #{tpu_custom_call.1} parent=11 // pred_check_branch
          %1067 = sbr.rel (%p1065) target = $region136
        $region135: #{tpu_custom_call.1} parent=11 // pred_region
          _
        $region136: #{tpu_custom_call.1} parent=11 // pred_fallthru
          _
      $region12: #{tpu_custom_call.1} parent=5 // pred_fallthru
        _
      %p1068 = scmp.lt.s32.totalorder %s93, 2
      // Predicated region
      $region137: #{tpu_custom_call.1} parent=5 // pred_check
        %p1069 = pneg %p1068
      $region138: #{tpu_custom_call.1} parent=5 // pred_check_branch
        %1071 = sbr.rel (%p1069) target = $region140
      $region139: #{tpu_custom_call.1} parent=5 // pred_region
        // Predicated region
        $region141: #{tpu_custom_call.1} parent=139 // pred_check
          %p1072 = pneg %p113
        $region142: #{tpu_custom_call.1} parent=139 // pred_check_branch
          %1074 = sbr.rel (%p1072) target = $region144
        $region143: #{tpu_custom_call.1} parent=139 // pred_region
          %s1075 = sand.u32 %s103, 1
          %s1076 = scalar_lea.sflag [#allocation4], %s1075
          %s1077 = sand.u32 %s103, 1
          %s1078 = smul.addr %s1077, 8
          %s1079 = scalar_lea.vmem [#allocation3], %s1078
          %s1081 = ssub.s32 128, 128
          %1082 = vsyncadd %s1076, %s1081
          %s1083 = smul.addr %s93, 128
          %s1084 = scalar_lea.hbm %s1, %s1083
          %s1086 = sshll.u32 %s1079, 4
          %s1087 = int_to_ptr.vmem [resolvable:$true] %s1086
          %1089 = dma.hbm_to_vmem [thread:$0]  %s1084, 128, %s1087, %s1076
        $region144: #{tpu_custom_call.1} parent=139 // pred_fallthru
          _
        // Predicated region
        $region145: #{tpu_custom_call.1} parent=139 // pred_check
          %p1090 = pneg %p139
        $region146: #{tpu_custom_call.1} parent=139 // pred_check_branch
          %1092 = sbr.rel (%p1090) target = $region148
        $region147: #{tpu_custom_call.1} parent=139 // pred_region
          %s1093 = sand.u32 %s93, 1
          %s1094 = scalar_lea.sflag [#allocation7], %s1093
          %s1095 = sand.u32 %s129, 1
          %s1096 = smul.addr %s1095, 8
          %s1097 = scalar_lea.vmem [#allocation6], %s1096
          %s1099 = ssub.s32 128, 128
          %1100 = vsyncadd %s1094, %s1099
          %s1101 = smul.addr %s93, 128
          %s1102 = scalar_lea.hbm %s3, %s1101
          %s1104 = sshll.u32 %s1097, 4
          %s1105 = int_to_ptr.vmem [resolvable:$true] %s1104
          %1107 = dma.hbm_to_vmem [thread:$0]  %s1102, 128, %s1105, %s1094
        $region148: #{tpu_custom_call.1} parent=139 // pred_fallthru
          _
        // Predicated region
        $region149: #{tpu_custom_call.1} parent=139 // pred_check
          %p1108 = pneg %p186
        $region150: #{tpu_custom_call.1} parent=139 // pred_check_branch
          %1110 = sbr.rel (%p1108) target = $region152
        $region151: #{tpu_custom_call.1} parent=139 // pred_region
          %s1111 = sand.u32 %s93, 1
          %s1112 = scalar_lea.sflag [#allocation10], %s1111
          %s1113 = sand.u32 %s176, 1
          %s1114 = scalar_lea.vmem [#allocation9], %s1113
          %s1116 = ssub.s32 16, 16
          %1117 = vsyncadd %s1112, %s1116
          %s1118 = smul.addr %s93, 16
          %s1119 = scalar_lea.hbm %s7, %s1118
          %s1121 = sshll.u32 %s1114, 4
          %s1122 = int_to_ptr.vmem [resolvable:$true] %s1121
          %1124 = dma.hbm_to_vmem [thread:$0]  %s1119, 16, %s1122, %s1112
        $region152: #{tpu_custom_call.1} parent=139 // pred_fallthru
          _
      $region140: #{tpu_custom_call.1} parent=5 // pred_fallthru
        _
      %p1125 = scmp.le.s32.totalorder 1, %s93
      %p1126 = scmp.lt.s32.totalorder %s93, 3
      %p1127 = pnand %p1125, %p1126
      %p1128 = pneg %p1127
      // Predicated region
      $region153: #{tpu_custom_call.1} parent=5 // pred_check
        _
      $region154: #{tpu_custom_call.1} parent=5 // pred_check_branch
        %1130 = sbr.rel (%p1127) target = $region156
      $region155: #{tpu_custom_call.1} parent=5 // pred_region
        %s1131 = ssub.s32 %s93, 1
        %s1132 = sand.u32 %s106, 1
        %s1133 = scalar_lea.sflag [#allocation4], %s1132
        %s1134 = sand.u32 %s106, 1
        %s1135 = smul.addr %s1134, 8
        %s1136 = scalar_lea.vmem [#allocation3], %s1135
        // Predicated region
        $region157: #{tpu_custom_call.1} parent=155 // pred_check
          %p1137 = pneg %p119
        $region158: #{tpu_custom_call.1} parent=155 // pred_check_branch
          %1139 = sbr.rel (%p1137) target = $region160
        $region159: #{tpu_custom_call.1} parent=155 // pred_region
          %1140 = dma.done %s1133, 128
        $region160: #{tpu_custom_call.1} parent=155 // pred_fallthru
          _
        %s1141 = sand.u32 %s98, 1
        %s1142 = scalar_lea.sflag [#allocation7], %s1141
        %s1143 = sand.u32 %s132, 1
        %s1144 = smul.addr %s1143, 8
        %s1145 = scalar_lea.vmem [#allocation6], %s1144
        // Predicated region
        $region161: #{tpu_custom_call.1} parent=155 // pred_check
          %p1146 = pneg %p145
        $region162: #{tpu_custom_call.1} parent=155 // pred_check_branch
          %1148 = sbr.rel (%p1146) target = $region164
        $region163: #{tpu_custom_call.1} parent=155 // pred_region
          %1149 = dma.done %s1142, 128
        $region164: #{tpu_custom_call.1} parent=155 // pred_fallthru
          _
        // Predicated region
        $region165: #{tpu_custom_call.1} parent=155 // pred_check
          %p1150 = pneg %p166
        $region166: #{tpu_custom_call.1} parent=155 // pred_check_branch
          %1152 = sbr.rel (%p1150) target = $region168
        $region167: #{tpu_custom_call.1} parent=155 // pred_region
          %1153 = dma.done [#allocation7], 128
        $region168: #{tpu_custom_call.1} parent=155 // pred_fallthru
          _
        %s1154 = sand.u32 %s98, 1
        %s1155 = scalar_lea.sflag [#allocation10], %s1154
        %s1156 = sand.u32 %s179, 1
        %s1157 = scalar_lea.vmem [#allocation9], %s1156
        // Predicated region
        $region169: #{tpu_custom_call.1} parent=155 // pred_check
          %p1158 = pneg %p192
        $region170: #{tpu_custom_call.1} parent=155 // pred_check_branch
          %1160 = sbr.rel (%p1158) target = $region172
        $region171: #{tpu_custom_call.1} parent=155 // pred_region
          %1161 = dma.done %s1155, 16
        $region172: #{tpu_custom_call.1} parent=155 // pred_fallthru
          _
        // Predicated region
        $region173: #{tpu_custom_call.1} parent=155 // pred_check
          %p1162 = pneg %p213
        $region174: #{tpu_custom_call.1} parent=155 // pred_check_branch
          %1164 = sbr.rel (%p1162) target = $region176
        $region175: #{tpu_custom_call.1} parent=155 // pred_region
          %1165 = dma.done [#allocation10], 16
        $region176: #{tpu_custom_call.1} parent=155 // pred_fallthru
          _
        // Predicated region
        $region177: #{tpu_custom_call.1} parent=155 // pred_check
          %p1166 = pneg %p234
        $region178: #{tpu_custom_call.1} parent=155 // pred_check_branch
          %1168 = sbr.rel (%p1166) target = $region180
        $region179: #{tpu_custom_call.1} parent=155 // pred_region
          %1169 = dma.done [#allocation13], 16
        $region180: #{tpu_custom_call.1} parent=155 // pred_fallthru
          _
        // Predicated region
        $region181: #{tpu_custom_call.1} parent=155 // pred_check
          %p1170 = pneg %p276
        $region182: #{tpu_custom_call.1} parent=155 // pred_check_branch
          %1172 = sbr.rel (%p1170) target = $region184
        $region183: #{tpu_custom_call.1} parent=155 // pred_region
          %1173 = dma.done [#allocation13], 16
        $region184: #{tpu_custom_call.1} parent=155 // pred_fallthru
          _
        // Predicated region
        $region185: #{tpu_custom_call.1} parent=155 // pred_check
          %p1174 = pneg %p318
        $region186: #{tpu_custom_call.1} parent=155 // pred_check_branch
          %1176 = sbr.rel (%p1174) target = $region188
        $region187: #{tpu_custom_call.1} parent=155 // pred_region
          %1177 = dma.done [#allocation16], 16
        $region188: #{tpu_custom_call.1} parent=155 // pred_fallthru
          _
        // Predicated region
        $region189: #{tpu_custom_call.1} parent=155 // pred_check
          %p1178 = pneg %p339
        $region190: #{tpu_custom_call.1} parent=155 // pred_check_branch
          %1180 = sbr.rel (%p1178) target = $region192
        $region191: #{tpu_custom_call.1} parent=155 // pred_region
          %1181 = dma.done [#allocation16], 16
        $region192: #{tpu_custom_call.1} parent=155 // pred_fallthru
          _
        // Predicated region
        $region193: #{tpu_custom_call.1} parent=155 // pred_check
          %p1182 = pneg %p360
        $region194: #{tpu_custom_call.1} parent=155 // pred_check_branch
          %1184 = sbr.rel (%p1182) target = $region196
        $region195: #{tpu_custom_call.1} parent=155 // pred_region
          %1185 = dma.done [#allocation19], 16
        $region196: #{tpu_custom_call.1} parent=155 // pred_fallthru
          _
        // Predicated region
        $region197: #{tpu_custom_call.1} parent=155 // pred_check
          %p1186 = pneg %p402
        $region198: #{tpu_custom_call.1} parent=155 // pred_check_branch
          %1188 = sbr.rel (%p1186) target = $region200
        $region199: #{tpu_custom_call.1} parent=155 // pred_region
          %1189 = dma.done [#allocation19], 16
        $region200: #{tpu_custom_call.1} parent=155 // pred_fallthru
          _
        // Predicated region
        $region201: #{tpu_custom_call.1} parent=155 // pred_check
          %p1190 = pneg %p444
        $region202: #{tpu_custom_call.1} parent=155 // pred_check_branch
          %1192 = sbr.rel (%p1190) target = $region204
        $region203: #{tpu_custom_call.1} parent=155 // pred_region
          %1193 = dma.done [#allocation22], 16
        $region204: #{tpu_custom_call.1} parent=155 // pred_fallthru
          _
        // Predicated region
        $region205: #{tpu_custom_call.1} parent=155 // pred_check
          %p1194 = pneg %p465
        $region206: #{tpu_custom_call.1} parent=155 // pred_check_branch
          %1196 = sbr.rel (%p1194) target = $region208
        $region207: #{tpu_custom_call.1} parent=155 // pred_region
          %1197 = dma.done [#allocation22], 16
        $region208: #{tpu_custom_call.1} parent=155 // pred_fallthru
          _
        // Predicated region
        $region209: #{tpu_custom_call.1} parent=155 // pred_check
          %p1198 = pneg %p486
        $region210: #{tpu_custom_call.1} parent=155 // pred_check_branch
          %1200 = sbr.rel (%p1198) target = $region212
        $region211: #{tpu_custom_call.1} parent=155 // pred_region
          %1201 = dma.done [#allocation25], 16
        $region212: #{tpu_custom_call.1} parent=155 // pred_fallthru
          _
        // Predicated region
        $region213: #{tpu_custom_call.1} parent=155 // pred_check
          %p1202 = pneg %p591
        $region214: #{tpu_custom_call.1} parent=155 // pred_check_branch
          %1204 = sbr.rel (%p1202) target = $region216
        $region215: #{tpu_custom_call.1} parent=155 // pred_region
          %1205 = dma.done [#allocation25], 16
        $region216: #{tpu_custom_call.1} parent=155 // pred_fallthru
          _
        // Predicated region
        $region217: #{tpu_custom_call.1} parent=155 // pred_check
          %p1206 = pneg %p612
        $region218: #{tpu_custom_call.1} parent=155 // pred_check_branch
          %1208 = sbr.rel (%p1206) target = $region220
        $region219: #{tpu_custom_call.1} parent=155 // pred_region
          %1209 = dma.done [#allocation28], 16
        $region220: #{tpu_custom_call.1} parent=155 // pred_fallthru
          _
        // Predicated region
        $region221: #{tpu_custom_call.1} parent=155 // pred_check
          %p1210 = pneg %p654
        $region222: #{tpu_custom_call.1} parent=155 // pred_check_branch
          %1212 = sbr.rel (%p1210) target = $region224
        $region223: #{tpu_custom_call.1} parent=155 // pred_region
          %1213 = dma.done [#allocation28], 16
        $region224: #{tpu_custom_call.1} parent=155 // pred_fallthru
          _
        %s1214 = sand.u32 %s106, 1
        %s1215 = scalar_lea.sflag [#allocation4], %s1214
        %s1216 = sand.u32 %s106, 1
        %s1217 = smul.addr %s1216, 8
        %s1218 = scalar_lea.vmem [#allocation3], %s1217
        %p1219 = pneg %p119
        %p1220 = pneg %p116
        %s1221 = sand.u32 %s98, 1
        %s1222 = scalar_lea.sflag [#allocation7], %s1221
        %s1223 = sand.u32 %s132, 1
        %s1224 = smul.addr %s1223, 8
        %s1225 = scalar_lea.vmem [#allocation6], %s1224
        %p1226 = pneg %p145
        %p1227 = pneg %p142
        %p1228 = pneg %p166
        %p1229 = pneg %p163
        %s1230 = sand.u32 %s98, 1
        %s1231 = scalar_lea.sflag [#allocation10], %s1230
        %s1232 = sand.u32 %s179, 1
        %s1233 = scalar_lea.vmem [#allocation9], %s1232
        %p1234 = pneg %p192
        %p1235 = pneg %p189
        %p1236 = pneg %p213
        %p1237 = pneg %p210
        %p1238 = pneg %p234
        %p1239 = pneg %p231
        %p1240 = pneg %p255
        %p1241 = pneg %p252
        %p1242 = pneg %p276
        %p1243 = pneg %p273
        %p1244 = pneg %p297
        %p1245 = pneg %p294
        %p1246 = pneg %p318
        %p1247 = pneg %p315
        %p1248 = pneg %p339
        %p1249 = pneg %p336
        %p1250 = pneg %p360
        %p1251 = pneg %p357
        %p1252 = pneg %p381
        %p1253 = pneg %p378
        %p1254 = pneg %p402
        %p1255 = pneg %p399
        %p1256 = pneg %p423
        %p1257 = pneg %p420
        %p1258 = pneg %p444
        %p1259 = pneg %p441
        %p1260 = pneg %p465
        %p1261 = pneg %p462
        %p1262 = pneg %p486
        %p1263 = pneg %p483
        %p1264 = pneg %p507
        %p1265 = pneg %p504
        %p1266 = pneg %p528
        %p1267 = pneg %p525
        %p1268 = pneg %p549
        %p1269 = pneg %p546
        %p1270 = pneg %p570
        %p1271 = pneg %p567
        %p1272 = pneg %p591
        %p1273 = pneg %p588
        %p1274 = pneg %p612
        %p1275 = pneg %p609
        %p1276 = pneg %p633
        %p1277 = pneg %p630
        %p1278 = pneg %p654
        %p1279 = pneg %p651
        %p1280 = pneg %p675
        %p1281 = pneg %p672
        %p1282 = pneg %p696
        %p1283 = pneg %p693
        %p1284 = pneg %p717
        %p1285 = pneg %p714
        %p1286 = pneg %p738
        %p1287 = pneg %p735
        %p1288 = pneg %p759
        %p1289 = pneg %p756
        %p1290 = pneg %p780
        %p1291 = pneg %p777
        %p1292 = pneg %p801
        %p1293 = pneg %p798
        %p1294 = pneg %p822
        %p1295 = pneg %p819
        %p1296 = pneg %p848
        %p1297 = pneg %p845
        %s1298 = sand.u32 %s835, 1
        %s1299 = scalar_lea.sflag [#allocation5], %s1298
        %s1300 = sand.u32 %s835, 1
        %s1301 = scalar_lea.vmem [#allocation30], %s1300
        %v1303 = vld [vmem:[%s61] sm:$0xff]
        %v1304 = vld [vmem:[%s61 + $0x8] sm:$0xff]
        %v1305 = vld [vmem:[%s61 + $0x10] sm:$0xff]
        %v1306 = vld [vmem:[%s61 + $0x18] sm:$0xff]
        %v1307 = vld [vmem:[%s63] sm:$0x1]
        %v1308 = vld [vmem:[%s65] sm:$0xff]
        %v1309 = vld [vmem:[%s65 + $0x8] sm:$0xff]
        %v1310 = vld [vmem:[%s65 + $0x10] sm:$0xff]
        %v1311 = vld [vmem:[%s65 + $0x18] sm:$0xff]
        %v1312 = vld [vmem:[%s67] sm:$0x1]
        %v1313 = vld [vmem:[%s1157] sm:$0x1]
        %v1314 = vld [vmem:[%s1136] sm:$0xff]
        %v1315 = vld [vmem:[%s1145] sm:$0xff]
        %v1316 = vadd.f32 %v1314, %v1315
        %v1317 = vld [vmem:[#allocation8] sm:$0xff]
        %v1318 = vadd.f32 %v1316, %v1317
        %v1319 = vld [vmem:[#allocation11] sm:$0x1]
        %v1320 = vld [vmem:[#allocation12] sm:$0x1]
        %vm1321 = vcmask 261120
        %v1322 = vsel %vm1321, %v1318, 0.0
        %1323 = vadd.xlane.f32.xlu0 %v1322
        %v1324 = vpop.xlane.xlu0 %1323
        %v1325 = vrcp.pop 32.0
        %v1326 = vmul.f32 %v1324, %v1325
        %v1327 = vsub.f32 %v1318, %v1326
        %v1328 = vmul.f32 %v1327, %v1327
        %v1329 = vsel %vm1321, %v1328, 0.0
        %1330 = vadd.xlane.f32.xlu0 %v1329
        %v1331 = vpop.xlane.xlu0 %1330
        %v1332 = vmul.f32 %v1331, %v1325
        %v1333 = vadd.f32 %v1332, 1e-12
        %v1334 = vrsqrt.pop %v1333
        %v1335 = vmul.f32 %v1327, %v1334
        %v1337 = vlaneseq
        %v1338 = vshrl.u32 %v1337, 7
        %v1339 = vsub.s32 0, %v1338
        %v1340 = vrot.slane %v1319, %v1339
        %v1342 = vmul.f32 %v1335, %v1340
        %v1344 = vlaneseq
        %v1345 = vshrl.u32 %v1344, 7
        %v1346 = vsub.s32 0, %v1345
        %v1347 = vrot.slane %v1320, %v1346
        %v1349 = vadd.f32 %v1342, %v1347
        %v1350 = vld [vmem:[%s13] sm:$0xff]
        %v1351 = vld [vmem:[%s13 + $0x8] sm:$0xff]
        %v1352 = vld [vmem:[%s13 + $0x10] sm:$0xff]
        %v1353 = vld [vmem:[%s13 + $0x18] sm:$0xff]
        %v1354 = vld [vmem:[#allocation14] sm:$0x1]
        %v1355 = vld [vmem:[%s17] sm:$0xff]
        %v1356 = vld [vmem:[%s17 + $0x8] sm:$0xff]
        %v1357 = vld [vmem:[%s17 + $0x10] sm:$0xff]
        %v1358 = vld [vmem:[%s17 + $0x18] sm:$0xff]
        %v1359 = vld [vmem:[#allocation15] sm:$0x1]
        %v1360 = vld [vmem:[#allocation17] sm:$0x1]
        %v1361 = vld [vmem:[#allocation18] sm:$0x1]
        %v1362 = vld [vmem:[%s25] sm:$0xff]
        %v1363 = vld [vmem:[%s25 + $0x8] sm:$0xff]
        %v1364 = vld [vmem:[%s25 + $0x10] sm:$0xff]
        %v1365 = vld [vmem:[%s25 + $0x18] sm:$0xff]
        %v1366 = vld [vmem:[#allocation20] sm:$0x1]
        %v1367 = vld [vmem:[%s29] sm:$0xff]
        %v1368 = vld [vmem:[%s29 + $0x8] sm:$0xff]
        %v1369 = vld [vmem:[%s29 + $0x10] sm:$0xff]
        %v1370 = vld [vmem:[%s29 + $0x18] sm:$0xff]
        %v1371 = vld [vmem:[%s29 + $0x20] sm:$0xff]
        %v1372 = vld [vmem:[%s29 + $0x28] sm:$0xff]
        %v1373 = vld [vmem:[%s29 + $0x30] sm:$0xff]
        %v1374 = vld [vmem:[%s29 + $0x38] sm:$0xff]
        %v1375 = vld [vmem:[#allocation21] sm:$0x1]
        %v1376 = vld [vmem:[#allocation23] sm:$0x1]
        %v1377 = vld [vmem:[#allocation24] sm:$0x1]
        %v1378 = vpack.c.bf16 %v1349, %v1349
        %v1379 = vpack.c.bf16 %v1351, %v1350
        %v1380 = vpack.c.bf16 %v1353, %v1352
        %v1382 = vlaneseq
        %v1383 = vshrl.u32 %v1382, 7
        %v1384 = vsub.s32 0, %v1383
        %v1385 = vrot.slane %v1354, %v1384
        %v1388 = vsel %vm1321, %v1378, 0
        %1390 = vmatprep.subr.bf16.mxu0 0
        %1391 = vmatpush1.bf16.msra.mxu0 %v1379
        %1392 = vmatprep.subr.bf16.mxu0 0
        %1393 = vmatpush1.bf16.msra.mxu0 %v1380
        %1394 = vmatprep.subr.bf16.mxu0 0
        %1395 = vmatpush1.bf16.msra.mxu0 0
        %1396 = vmatprep.subr.bf16.mxu0 0
        %1397 = vmatpush1.bf16.msra.mxu0 0
        %1398 = vmatprep.subr.bf16.mxu0 0
        %1399 = vmatpush1.bf16.msra.mxu0 0
        %1400 = vmatprep.subr.bf16.mxu0 0
        %1401 = vmatpush1.bf16.msra.mxu0 0
        %1402 = vmatprep.subr.bf16.mxu0 0
        %1403 = vmatpush1.bf16.msra.mxu0 0
        %1404 = vmatprep.subr.bf16.mxu0 0
        %1405 = vmatpush1.bf16.msra.mxu0 0
        %1406 = vmatprep.subr.bf16.mxu0 0
        %1407 = vmatpush1.bf16.msra.mxu0 0
        %1408 = vmatprep.subr.bf16.mxu0 0
        %1409 = vmatpush1.bf16.msra.mxu0 0
        %1410 = vmatprep.subr.bf16.mxu0 0
        %1411 = vmatpush1.bf16.msra.mxu0 0
        %1412 = vmatprep.subr.bf16.mxu0 0
        %1413 = vmatpush1.bf16.msra.mxu0 0
        %1414 = vmatprep.subr.bf16.mxu0 0
        %1415 = vmatpush1.bf16.msra.mxu0 0
        %1416 = vmatprep.subr.bf16.mxu0 0
        %1417 = vmatpush1.bf16.msra.mxu0 0
        %1418 = vmatprep.subr.bf16.mxu0 0
        %1419 = vmatpush1.bf16.msra.mxu0 0
        %1420 = vmatprep.subr.bf16.mxu0 0
        %1421 = vmatpush1.bf16.msra.mxu0 0
        %1422 = vmatprep.mubr.bf16.mxu0 0
        %1423 = vmatmul.mubr.bf16.gmra.mrb[0].mxu0 %v1388
        %v1424 = vpop.f32.mrb[0].mxu0
        %v1425 = vadd.f32 %v1385, %v1424
        %v1426 = vpop.f32.mrb[0].mxu0
        %v1427 = vpop.f32.mrb[0].mxu0
        %v1428 = vpop.f32.mrb[0].mxu0
        %1429 = vdwg.mxu0
        %v1430 = vpack.c.bf16 %v1425, %v1425
        %1432 = vrot.lane.b32.xlu0 %v1430, 96
        %v1433 = vpop.permute.xlu0 %1432
        %vm1434 = vcmask 64512
        %v1436 = vsel %vm1434, %v1430, 0
        %v1439 = vsel %vm1434, %v1433, 0
        %1441 = vmatprep.subr.bf16.mxu0 0
        %1442 = vmatpush1.bf16.xpose.msra.mxu0 %v1439
        %1443 = vmatprep.subr.bf16.mxu0 0
        %1444 = vmatpush1.bf16.xpose.msra.mxu0 0
        %1445 = vmatprep.subr.bf16.mxu0 0
        %1446 = vmatpush1.bf16.xpose.msra.mxu0 0
        %1447 = vmatprep.subr.bf16.mxu0 0
        %1448 = vmatpush1.bf16.xpose.msra.mxu0 0
        %1449 = vmatprep.subr.bf16.mxu0 0
        %1450 = vmatpush1.bf16.xpose.msra.mxu0 0
        %1451 = vmatprep.subr.bf16.mxu0 0
        %1452 = vmatpush1.bf16.xpose.msra.mxu0 0
        %1453 = vmatprep.subr.bf16.mxu0 0
        %1454 = vmatpush1.bf16.xpose.msra.mxu0 0
        %1455 = vmatprep.subr.bf16.mxu0 0
        %1456 = vmatpush1.bf16.xpose.msra.mxu0 0
        %1457 = vmatprep.subr.bf16.mxu0 0
        %1458 = vmatpush1.bf16.xpose.msra.mxu0 0
        %1459 = vmatprep.subr.bf16.mxu0 0
        %1460 = vmatpush1.bf16.xpose.msra.mxu0 0
        %1461 = vmatprep.subr.bf16.mxu0 0
        %1462 = vmatpush1.bf16.xpose.msra.mxu0 0
        %1463 = vmatprep.subr.bf16.mxu0 0
        %1464 = vmatpush1.bf16.xpose.msra.mxu0 0
        %1465 = vmatprep.subr.bf16.mxu0 0
        %1466 = vmatpush1.bf16.xpose.msra.mxu0 0
        %1467 = vmatprep.subr.bf16.mxu0 0
        %1468 = vmatpush1.bf16.xpose.msra.mxu0 0
        %1469 = vmatprep.subr.bf16.mxu0 0
        %1470 = vmatpush1.bf16.xpose.msra.mxu0 0
        %1471 = vmatprep.subr.bf16.mxu0 0
        %1472 = vmatpush1.bf16.xpose.msra.mxu0 0
        %1473 = vmatprep.mubr.bf16.mxu0 0
        %1474 = vmatmul.mubr.bf16.gmra.mrb[0].mxu0 %v1436
        %v1475 = vpop.f32.mrb[0].mxu0
        %v1476 = vadd.f32 0.0, %v1475
        %v1477 = vpop.f32.mrb[0].mxu0
        %v1478 = vpop.f32.mrb[0].mxu0
        %v1479 = vpop.f32.mrb[0].mxu0
        %1480 = vdwg.mxu0
        %v1481 = vmul.f32 %v1476, 0.35355338
        %v1483 = vlaneseq
        %v1484 = vshrl.u32 %v1483, 7
        %v1485 = vsub.s32 0, %v1484
        %v1486 = vrot.slane %v1313, %v1485
        %v1488 = vadd.f32 %v1481, %v1486
        %v1489 = vsel %vm1434, %v1488, -inf
        %1490 = vmax.xlane.f32.xlu0 %v1489
        %v1491 = vpop.xlane.xlu0 %1490
        %v1492 = vsub.f32 %v1488, %v1491
        %v1493 = vmul.f32 %v1492, 1.442695
        %v1494 = vpow.pop %v1493
        %v1495 = vsel %vm1434, %v1494, 0.0
        %1496 = vadd.xlane.f32.xlu0 %v1495
        %v1497 = vpop.xlane.xlu0 %1496
        %v1498 = vrcp.pop %v1497
        %v1499 = vmul.f32 %v1494, %v1498
        %v1500 = vpack.c.bf16 %v1499, %v1499
        %1501 = vrot.lane.b32.xlu0 %v1430, 64
        %v1502 = vpop.permute.xlu0 %1501
        %v1504 = vsel %vm1434, %v1500, 0
        %vm1506 = vcmask 1043456
        %v1508 = vsel %vm1506, %v1502, 0
        %1510 = vmatprep.subr.bf16.mxu0 0
        %1511 = vmatpush1.bf16.msra.mxu0 %v1508
        %1512 = vmatprep.subr.bf16.mxu0 0
        %1513 = vmatpush1.bf16.msra.mxu0 0
        %1514 = vmatprep.subr.bf16.mxu0 0
        %1515 = vmatpush1.bf16.msra.mxu0 0
        %1516 = vmatprep.subr.bf16.mxu0 0
        %1517 = vmatpush1.bf16.msra.mxu0 0
        %1518 = vmatprep.subr.bf16.mxu0 0
        %1519 = vmatpush1.bf16.msra.mxu0 0
        %1520 = vmatprep.subr.bf16.mxu0 0
        %1521 = vmatpush1.bf16.msra.mxu0 0
        %1522 = vmatprep.subr.bf16.mxu0 0
        %1523 = vmatpush1.bf16.msra.mxu0 0
        %1524 = vmatprep.subr.bf16.mxu0 0
        %1525 = vmatpush1.bf16.msra.mxu0 0
        %1526 = vmatprep.subr.bf16.mxu0 0
        %1527 = vmatpush1.bf16.msra.mxu0 0
        %1528 = vmatprep.subr.bf16.mxu0 0
        %1529 = vmatpush1.bf16.msra.mxu0 0
        %1530 = vmatprep.subr.bf16.mxu0 0
        %1531 = vmatpush1.bf16.msra.mxu0 0
        %1532 = vmatprep.subr.bf16.mxu0 0
        %1533 = vmatpush1.bf16.msra.mxu0 0
        %1534 = vmatprep.subr.bf16.mxu0 0
        %1535 = vmatpush1.bf16.msra.mxu0 0
        %1536 = vmatprep.subr.bf16.mxu0 0
        %1537 = vmatpush1.bf16.msra.mxu0 0
        %1538 = vmatprep.subr.bf16.mxu0 0
        %1539 = vmatpush1.bf16.msra.mxu0 0
        %1540 = vmatprep.subr.bf16.mxu0 0
        %1541 = vmatpush1.bf16.msra.mxu0 0
        %1542 = vmatprep.mubr.bf16.mxu0 0
        %1543 = vmatmul.mubr.bf16.gmra.mrb[0].mxu0 %v1504
        %v1544 = vpop.f32.mrb[0].mxu0
        %v1545 = vadd.f32 0.0, %v1544
        %v1546 = vpop.f32.mrb[0].mxu0
        %v1547 = vpop.f32.mrb[0].mxu0
        %v1548 = vpop.f32.mrb[0].mxu0
        %1549 = vdwg.mxu0
        %1550 = vst.msk [vmem:[#allocation2] sm:$0xff] %vm1434, %v1545
        %1551 = vrot.lane.b32.xlu0 %v1430, 120
        %v1552 = vpop.permute.xlu0 %1551
        %1553 = vrot.lane.b32.xlu0 %v1430, 88
        %v1554 = vpop.permute.xlu0 %1553
        %v1556 = vsel %vm1434, %v1552, 0
        %v1559 = vsel %vm1434, %v1554, 0
        %1561 = vmatprep.subr.bf16.mxu0 0
        %1562 = vmatpush1.bf16.xpose.msra.mxu0 %v1559
        %1563 = vmatprep.subr.bf16.mxu0 0
        %1564 = vmatpush1.bf16.xpose.msra.mxu0 0
        %1565 = vmatprep.subr.bf16.mxu0 0
        %1566 = vmatpush1.bf16.xpose.msra.mxu0 0
        %1567 = vmatprep.subr.bf16.mxu0 0
        %1568 = vmatpush1.bf16.xpose.msra.mxu0 0
        %1569 = vmatprep.subr.bf16.mxu0 0
        %1570 = vmatpush1.bf16.xpose.msra.mxu0 0
        %1571 = vmatprep.subr.bf16.mxu0 0
        %1572 = vmatpush1.bf16.xpose.msra.mxu0 0
        %1573 = vmatprep.subr.bf16.mxu0 0
        %1574 = vmatpush1.bf16.xpose.msra.mxu0 0
        %1575 = vmatprep.subr.bf16.mxu0 0
        %1576 = vmatpush1.bf16.xpose.msra.mxu0 0
        %1577 = vmatprep.subr.bf16.mxu0 0
        %1578 = vmatpush1.bf16.xpose.msra.mxu0 0
        %1579 = vmatprep.subr.bf16.mxu0 0
        %1580 = vmatpush1.bf16.xpose.msra.mxu0 0
        %1581 = vmatprep.subr.bf16.mxu0 0
        %1582 = vmatpush1.bf16.xpose.msra.mxu0 0
        %1583 = vmatprep.subr.bf16.mxu0 0
        %1584 = vmatpush1.bf16.xpose.msra.mxu0 0
        %1585 = vmatprep.subr.bf16.mxu0 0
        %1586 = vmatpush1.bf16.xpose.msra.mxu0 0
        %1587 = vmatprep.subr.bf16.mxu0 0
        %1588 = vmatpush1.bf16.xpose.msra.mxu0 0
        %1589 = vmatprep.subr.bf16.mxu0 0
        %1590 = vmatpush1.bf16.xpose.msra.mxu0 0
        %1591 = vmatprep.subr.bf16.mxu0 0
        %1592 = vmatpush1.bf16.xpose.msra.mxu0 0
        %1593 = vmatprep.mubr.bf16.mxu0 0
        %1594 = vmatmul.mubr.bf16.gmra.mrb[0].mxu0 %v1556
        %v1595 = vpop.f32.mrb[0].mxu0
        %v1596 = vadd.f32 0.0, %v1595
        %v1597 = vpop.f32.mrb[0].mxu0
        %v1598 = vpop.f32.mrb[0].mxu0
        %v1599 = vpop.f32.mrb[0].mxu0
        %1600 = vdwg.mxu0
        %v1601 = vmul.f32 %v1596, 0.35355338
        %v1602 = vadd.f32 %v1601, %v1486
        %v1603 = vsel %vm1434, %v1602, -inf
        %1604 = vmax.xlane.f32.xlu0 %v1603
        %v1605 = vpop.xlane.xlu0 %1604
        %v1606 = vsub.f32 %v1602, %v1605
        %v1607 = vmul.f32 %v1606, 1.442695
        %v1608 = vpow.pop %v1607
        %v1609 = vsel %vm1434, %v1608, 0.0
        %1610 = vadd.xlane.f32.xlu0 %v1609
        %v1611 = vpop.xlane.xlu0 %1610
        %v1612 = vrcp.pop %v1611
        %v1613 = vmul.f32 %v1608, %v1612
        %v1614 = vpack.c.bf16 %v1613, %v1613
        %1615 = vrot.lane.b32.xlu0 %v1430, 56
        %v1616 = vpop.permute.xlu0 %1615
        %v1618 = vsel %vm1434, %v1614, 0
        %v1621 = vsel %vm1506, %v1616, 0
        %1623 = vmatprep.subr.bf16.mxu0 0
        %1624 = vmatpush1.bf16.msra.mxu0 %v1621
        %1625 = vmatprep.subr.bf16.mxu0 0
        %1626 = vmatpush1.bf16.msra.mxu0 0
        %1627 = vmatprep.subr.bf16.mxu0 0
        %1628 = vmatpush1.bf16.msra.mxu0 0
        %1629 = vmatprep.subr.bf16.mxu0 0
        %1630 = vmatpush1.bf16.msra.mxu0 0
        %1631 = vmatprep.subr.bf16.mxu0 0
        %1632 = vmatpush1.bf16.msra.mxu0 0
        %1633 = vmatprep.subr.bf16.mxu0 0
        %1634 = vmatpush1.bf16.msra.mxu0 0
        %1635 = vmatprep.subr.bf16.mxu0 0
        %1636 = vmatpush1.bf16.msra.mxu0 0
        %1637 = vmatprep.subr.bf16.mxu0 0
        %1638 = vmatpush1.bf16.msra.mxu0 0
        %1639 = vmatprep.subr.bf16.mxu0 0
        %1640 = vmatpush1.bf16.msra.mxu0 0
        %1641 = vmatprep.subr.bf16.mxu0 0
        %1642 = vmatpush1.bf16.msra.mxu0 0
        %1643 = vmatprep.subr.bf16.mxu0 0
        %1644 = vmatpush1.bf16.msra.mxu0 0
        %1645 = vmatprep.subr.bf16.mxu0 0
        %1646 = vmatpush1.bf16.msra.mxu0 0
        %1647 = vmatprep.subr.bf16.mxu0 0
        %1648 = vmatpush1.bf16.msra.mxu0 0
        %1649 = vmatprep.subr.bf16.mxu0 0
        %1650 = vmatpush1.bf16.msra.mxu0 0
        %1651 = vmatprep.subr.bf16.mxu0 0
        %1652 = vmatpush1.bf16.msra.mxu0 0
        %1653 = vmatprep.subr.bf16.mxu0 0
        %1654 = vmatpush1.bf16.msra.mxu0 0
        %1655 = vmatprep.mubr.bf16.mxu0 0
        %1656 = vmatmul.mubr.bf16.gmra.mrb[0].mxu0 %v1618
        %v1657 = vpop.f32.mrb[0].mxu0
        %v1658 = vadd.f32 0.0, %v1657
        %v1659 = vpop.f32.mrb[0].mxu0
        %v1660 = vpop.f32.mrb[0].mxu0
        %v1661 = vpop.f32.mrb[0].mxu0
        %1662 = vdwg.mxu0
        %1664 = vrot.lane.b32.xlu0 %v1658, 8
        %v1665 = vpop.permute.xlu0 %1664
        %vm1667 = vcmask 130112
        %1668 = vst.msk [vmem:[#allocation2] sm:$0xff] %vm1667, %v1665
        %1669 = vrot.lane.b32.xlu0 %v1430, 112
        %v1670 = vpop.permute.xlu0 %1669
        %1671 = vrot.lane.b32.xlu0 %v1430, 80
        %v1672 = vpop.permute.xlu0 %1671
        %v1674 = vsel %vm1434, %v1670, 0
        %v1677 = vsel %vm1434, %v1672, 0
        %1679 = vmatprep.subr.bf16.mxu0 0
        %1680 = vmatpush1.bf16.xpose.msra.mxu0 %v1677
        %1681 = vmatprep.subr.bf16.mxu0 0
        %1682 = vmatpush1.bf16.xpose.msra.mxu0 0
        %1683 = vmatprep.subr.bf16.mxu0 0
        %1684 = vmatpush1.bf16.xpose.msra.mxu0 0
        %1685 = vmatprep.subr.bf16.mxu0 0
        %1686 = vmatpush1.bf16.xpose.msra.mxu0 0
        %1687 = vmatprep.subr.bf16.mxu0 0
        %1688 = vmatpush1.bf16.xpose.msra.mxu0 0
        %1689 = vmatprep.subr.bf16.mxu0 0
        %1690 = vmatpush1.bf16.xpose.msra.mxu0 0
        %1691 = vmatprep.subr.bf16.mxu0 0
        %1692 = vmatpush1.bf16.xpose.msra.mxu0 0
        %1693 = vmatprep.subr.bf16.mxu0 0
        %1694 = vmatpush1.bf16.xpose.msra.mxu0 0
        %1695 = vmatprep.subr.bf16.mxu0 0
        %1696 = vmatpush1.bf16.xpose.msra.mxu0 0
        %1697 = vmatprep.subr.bf16.mxu0 0
        %1698 = vmatpush1.bf16.xpose.msra.mxu0 0
        %1699 = vmatprep.subr.bf16.mxu0 0
        %1700 = vmatpush1.bf16.xpose.msra.mxu0 0
        %1701 = vmatprep.subr.bf16.mxu0 0
        %1702 = vmatpush1.bf16.xpose.msra.mxu0 0
        %1703 = vmatprep.subr.bf16.mxu0 0
        %1704 = vmatpush1.bf16.xpose.msra.mxu0 0
        %1705 = vmatprep.subr.bf16.mxu0 0
        %1706 = vmatpush1.bf16.xpose.msra.mxu0 0
        %1707 = vmatprep.subr.bf16.mxu0 0
        %1708 = vmatpush1.bf16.xpose.msra.mxu0 0
        %1709 = vmatprep.subr.bf16.mxu0 0
        %1710 = vmatpush1.bf16.xpose.msra.mxu0 0
        %1711 = vmatprep.mubr.bf16.mxu0 0
        %1712 = vmatmul.mubr.bf16.gmra.mrb[0].mxu0 %v1674
        %v1713 = vpop.f32.mrb[0].mxu0
        %v1714 = vadd.f32 0.0, %v1713
        %v1715 = vpop.f32.mrb[0].mxu0
        %v1716 = vpop.f32.mrb[0].mxu0
        %v1717 = vpop.f32.mrb[0].mxu0
        %1718 = vdwg.mxu0
        %v1719 = vmul.f32 %v1714, 0.35355338
        %v1720 = vadd.f32 %v1719, %v1486
        %v1721 = vsel %vm1434, %v1720, -inf
        %1722 = vmax.xlane.f32.xlu0 %v1721
        %v1723 = vpop.xlane.xlu0 %1722
        %v1724 = vsub.f32 %v1720, %v1723
        %v1725 = vmul.f32 %v1724, 1.442695
        %v1726 = vpow.pop %v1725
        %v1727 = vsel %vm1434, %v1726, 0.0
        %1728 = vadd.xlane.f32.xlu0 %v1727
        %v1729 = vpop.xlane.xlu0 %1728
        %v1730 = vrcp.pop %v1729
        %v1731 = vmul.f32 %v1726, %v1730
        %v1732 = vpack.c.bf16 %v1731, %v1731
        %1733 = vrot.lane.b32.xlu0 %v1430, 48
        %v1734 = vpop.permute.xlu0 %1733
        %v1736 = vsel %vm1434, %v1732, 0
        %v1739 = vsel %vm1506, %v1734, 0
        %1741 = vmatprep.subr.bf16.mxu0 0
        %1742 = vmatpush1.bf16.msra.mxu0 %v1739
        %1743 = vmatprep.subr.bf16.mxu0 0
        %1744 = vmatpush1.bf16.msra.mxu0 0
        %1745 = vmatprep.subr.bf16.mxu0 0
        %1746 = vmatpush1.bf16.msra.mxu0 0
        %1747 = vmatprep.subr.bf16.mxu0 0
        %1748 = vmatpush1.bf16.msra.mxu0 0
        %1749 = vmatprep.subr.bf16.mxu0 0
        %1750 = vmatpush1.bf16.msra.mxu0 0
        %1751 = vmatprep.subr.bf16.mxu0 0
        %1752 = vmatpush1.bf16.msra.mxu0 0
        %1753 = vmatprep.subr.bf16.mxu0 0
        %1754 = vmatpush1.bf16.msra.mxu0 0
        %1755 = vmatprep.subr.bf16.mxu0 0
        %1756 = vmatpush1.bf16.msra.mxu0 0
        %1757 = vmatprep.subr.bf16.mxu0 0
        %1758 = vmatpush1.bf16.msra.mxu0 0
        %1759 = vmatprep.subr.bf16.mxu0 0
        %1760 = vmatpush1.bf16.msra.mxu0 0
        %1761 = vmatprep.subr.bf16.mxu0 0
        %1762 = vmatpush1.bf16.msra.mxu0 0
        %1763 = vmatprep.subr.bf16.mxu0 0
        %1764 = vmatpush1.bf16.msra.mxu0 0
        %1765 = vmatprep.subr.bf16.mxu0 0
        %1766 = vmatpush1.bf16.msra.mxu0 0
        %1767 = vmatprep.subr.bf16.mxu0 0
        %1768 = vmatpush1.bf16.msra.mxu0 0
        %1769 = vmatprep.subr.bf16.mxu0 0
        %1770 = vmatpush1.bf16.msra.mxu0 0
        %1771 = vmatprep.subr.bf16.mxu0 0
        %1772 = vmatpush1.bf16.msra.mxu0 0
        %1773 = vmatprep.mubr.bf16.mxu0 0
        %1774 = vmatmul.mubr.bf16.gmra.mrb[0].mxu0 %v1736
        %v1775 = vpop.f32.mrb[0].mxu0
        %v1776 = vadd.f32 0.0, %v1775
        %v1777 = vpop.f32.mrb[0].mxu0
        %v1778 = vpop.f32.mrb[0].mxu0
        %v1779 = vpop.f32.mrb[0].mxu0
        %1780 = vdwg.mxu0
        %1782 = vrot.lane.b32.xlu0 %v1776, 16
        %v1783 = vpop.permute.xlu0 %1782
        %vm1785 = vcmask 195712
        %1786 = vst.msk [vmem:[#allocation2] sm:$0xff] %vm1785, %v1783
        %1787 = vrot.lane.b32.xlu0 %v1430, 104
        %v1788 = vpop.permute.xlu0 %1787
        %1789 = vrot.lane.b32.xlu0 %v1430, 72
        %v1790 = vpop.permute.xlu0 %1789
        %v1792 = vsel %vm1434, %v1788, 0
        %v1795 = vsel %vm1434, %v1790, 0
        %1797 = vmatprep.subr.bf16.mxu0 0
        %1798 = vmatpush1.bf16.xpose.msra.mxu0 %v1795
        %1799 = vmatprep.subr.bf16.mxu0 0
        %1800 = vmatpush1.bf16.xpose.msra.mxu0 0
        %1801 = vmatprep.subr.bf16.mxu0 0
        %1802 = vmatpush1.bf16.xpose.msra.mxu0 0
        %1803 = vmatprep.subr.bf16.mxu0 0
        %1804 = vmatpush1.bf16.xpose.msra.mxu0 0
        %1805 = vmatprep.subr.bf16.mxu0 0
        %1806 = vmatpush1.bf16.xpose.msra.mxu0 0
        %1807 = vmatprep.subr.bf16.mxu0 0
        %1808 = vmatpush1.bf16.xpose.msra.mxu0 0
        %1809 = vmatprep.subr.bf16.mxu0 0
        %1810 = vmatpush1.bf16.xpose.msra.mxu0 0
        %1811 = vmatprep.subr.bf16.mxu0 0
        %1812 = vmatpush1.bf16.xpose.msra.mxu0 0
        %1813 = vmatprep.subr.bf16.mxu0 0
        %1814 = vmatpush1.bf16.xpose.msra.mxu0 0
        %1815 = vmatprep.subr.bf16.mxu0 0
        %1816 = vmatpush1.bf16.xpose.msra.mxu0 0
        %1817 = vmatprep.subr.bf16.mxu0 0
        %1818 = vmatpush1.bf16.xpose.msra.mxu0 0
        %1819 = vmatprep.subr.bf16.mxu0 0
        %1820 = vmatpush1.bf16.xpose.msra.mxu0 0
        %1821 = vmatprep.subr.bf16.mxu0 0
        %1822 = vmatpush1.bf16.xpose.msra.mxu0 0
        %1823 = vmatprep.subr.bf16.mxu0 0
        %1824 = vmatpush1.bf16.xpose.msra.mxu0 0
        %1825 = vmatprep.subr.bf16.mxu0 0
        %1826 = vmatpush1.bf16.xpose.msra.mxu0 0
        %1827 = vmatprep.subr.bf16.mxu0 0
        %1828 = vmatpush1.bf16.xpose.msra.mxu0 0
        %1829 = vmatprep.mubr.bf16.mxu0 0
        %1830 = vmatmul.mubr.bf16.gmra.mrb[0].mxu0 %v1792
        %v1831 = vpop.f32.mrb[0].mxu0
        %v1832 = vadd.f32 0.0, %v1831
        %v1833 = vpop.f32.mrb[0].mxu0
        %v1834 = vpop.f32.mrb[0].mxu0
        %v1835 = vpop.f32.mrb[0].mxu0
        %1836 = vdwg.mxu0
        %v1837 = vmul.f32 %v1832, 0.35355338
        %v1838 = vadd.f32 %v1837, %v1486
        %v1839 = vsel %vm1434, %v1838, -inf
        %1840 = vmax.xlane.f32.xlu0 %v1839
        %v1841 = vpop.xlane.xlu0 %1840
        %v1842 = vsub.f32 %v1838, %v1841
        %v1843 = vmul.f32 %v1842, 1.442695
        %v1844 = vpow.pop %v1843
        %v1845 = vsel %vm1434, %v1844, 0.0
        %1846 = vadd.xlane.f32.xlu0 %v1845
        %v1847 = vpop.xlane.xlu0 %1846
        %v1848 = vrcp.pop %v1847
        %v1849 = vmul.f32 %v1844, %v1848
        %v1850 = vpack.c.bf16 %v1849, %v1849
        %1851 = vrot.lane.b32.xlu0 %v1430, 40
        %v1852 = vpop.permute.xlu0 %1851
        %v1854 = vsel %vm1434, %v1850, 0
        %v1857 = vsel %vm1506, %v1852, 0
        %1859 = vmatprep.subr.bf16.mxu0 0
        %1860 = vmatpush1.bf16.msra.mxu0 %v1857
        %1861 = vmatprep.subr.bf16.mxu0 0
        %1862 = vmatpush1.bf16.msra.mxu0 0
        %1863 = vmatprep.subr.bf16.mxu0 0
        %1864 = vmatpush1.bf16.msra.mxu0 0
        %1865 = vmatprep.subr.bf16.mxu0 0
        %1866 = vmatpush1.bf16.msra.mxu0 0
        %1867 = vmatprep.subr.bf16.mxu0 0
        %1868 = vmatpush1.bf16.msra.mxu0 0
        %1869 = vmatprep.subr.bf16.mxu0 0
        %1870 = vmatpush1.bf16.msra.mxu0 0
        %1871 = vmatprep.subr.bf16.mxu0 0
        %1872 = vmatpush1.bf16.msra.mxu0 0
        %1873 = vmatprep.subr.bf16.mxu0 0
        %1874 = vmatpush1.bf16.msra.mxu0 0
        %1875 = vmatprep.subr.bf16.mxu0 0
        %1876 = vmatpush1.bf16.msra.mxu0 0
        %1877 = vmatprep.subr.bf16.mxu0 0
        %1878 = vmatpush1.bf16.msra.mxu0 0
        %1879 = vmatprep.subr.bf16.mxu0 0
        %1880 = vmatpush1.bf16.msra.mxu0 0
        %1881 = vmatprep.subr.bf16.mxu0 0
        %1882 = vmatpush1.bf16.msra.mxu0 0
        %1883 = vmatprep.subr.bf16.mxu0 0
        %1884 = vmatpush1.bf16.msra.mxu0 0
        %1885 = vmatprep.subr.bf16.mxu0 0
        %1886 = vmatpush1.bf16.msra.mxu0 0
        %1887 = vmatprep.subr.bf16.mxu0 0
        %1888 = vmatpush1.bf16.msra.mxu0 0
        %1889 = vmatprep.subr.bf16.mxu0 0
        %1890 = vmatpush1.bf16.msra.mxu0 0
        %1891 = vmatprep.mubr.bf16.mxu0 0
        %1892 = vmatmul.mubr.bf16.gmra.mrb[0].mxu0 %v1854
        %v1893 = vpop.f32.mrb[0].mxu0
        %v1894 = vadd.f32 0.0, %v1893
        %v1895 = vpop.f32.mrb[0].mxu0
        %v1896 = vpop.f32.mrb[0].mxu0
        %v1897 = vpop.f32.mrb[0].mxu0
        %1898 = vdwg.mxu0
        %1900 = vrot.lane.b32.xlu0 %v1894, 24
        %v1901 = vpop.permute.xlu0 %1900
        %vm1903 = vcmask 261312
        %1904 = vst.msk [vmem:[#allocation2] sm:$0xff] %vm1903, %v1901
        %v1905 = vld [vmem:[#allocation2] sm:$0xff]
        %v1906 = vpack.c.bf16 %v1905, %v1905
        %v1907 = vpack.c.bf16 %v1356, %v1355
        %v1908 = vpack.c.bf16 %v1358, %v1357
        %v1910 = vlaneseq
        %v1911 = vshrl.u32 %v1910, 7
        %v1912 = vsub.s32 0, %v1911
        %v1913 = vrot.slane %v1359, %v1912
        %v1916 = vsel %vm1321, %v1906, 0
        %1918 = vmatprep.subr.bf16.mxu0 0
        %1919 = vmatpush1.bf16.msra.mxu0 %v1907
        %1920 = vmatprep.subr.bf16.mxu0 0
        %1921 = vmatpush1.bf16.msra.mxu0 %v1908
        %1922 = vmatprep.subr.bf16.mxu0 0
        %1923 = vmatpush1.bf16.msra.mxu0 0
        %1924 = vmatprep.subr.bf16.mxu0 0
        %1925 = vmatpush1.bf16.msra.mxu0 0
        %1926 = vmatprep.subr.bf16.mxu0 0
        %1927 = vmatpush1.bf16.msra.mxu0 0
        %1928 = vmatprep.subr.bf16.mxu0 0
        %1929 = vmatpush1.bf16.msra.mxu0 0
        %1930 = vmatprep.subr.bf16.mxu0 0
        %1931 = vmatpush1.bf16.msra.mxu0 0
        %1932 = vmatprep.subr.bf16.mxu0 0
        %1933 = vmatpush1.bf16.msra.mxu0 0
        %1934 = vmatprep.subr.bf16.mxu0 0
        %1935 = vmatpush1.bf16.msra.mxu0 0
        %1936 = vmatprep.subr.bf16.mxu0 0
        %1937 = vmatpush1.bf16.msra.mxu0 0
        %1938 = vmatprep.subr.bf16.mxu0 0
        %1939 = vmatpush1.bf16.msra.mxu0 0
        %1940 = vmatprep.subr.bf16.mxu0 0
        %1941 = vmatpush1.bf16.msra.mxu0 0
        %1942 = vmatprep.subr.bf16.mxu0 0
        %1943 = vmatpush1.bf16.msra.mxu0 0
        %1944 = vmatprep.subr.bf16.mxu0 0
        %1945 = vmatpush1.bf16.msra.mxu0 0
        %1946 = vmatprep.subr.bf16.mxu0 0
        %1947 = vmatpush1.bf16.msra.mxu0 0
        %1948 = vmatprep.subr.bf16.mxu0 0
        %1949 = vmatpush1.bf16.msra.mxu0 0
        %1950 = vmatprep.mubr.bf16.mxu0 0
        %1951 = vmatmul.mubr.bf16.gmra.mrb[0].mxu0 %v1916
        %v1952 = vpop.f32.mrb[0].mxu0
        %v1953 = vadd.f32 %v1913, %v1952
        %v1954 = vpop.f32.mrb[0].mxu0
        %v1955 = vpop.f32.mrb[0].mxu0
        %v1956 = vpop.f32.mrb[0].mxu0
        %1957 = vdwg.mxu0
        %v1958 = vadd.f32 %v1953, %v1349
        %v1959 = vsel %vm1321, %v1958, 0.0
        %1960 = vadd.xlane.f32.xlu0 %v1959
        %v1961 = vpop.xlane.xlu0 %1960
        %v1962 = vmul.f32 %v1961, %v1325
        %v1963 = vsub.f32 %v1958, %v1962
        %v1964 = vmul.f32 %v1963, %v1963
        %v1965 = vsel %vm1321, %v1964, 0.0
        %1966 = vadd.xlane.f32.xlu0 %v1965
        %v1967 = vpop.xlane.xlu0 %1966
        %v1968 = vmul.f32 %v1967, %v1325
        %v1969 = vadd.f32 %v1968, 1e-12
        %v1970 = vrsqrt.pop %v1969
        %v1971 = vmul.f32 %v1963, %v1970
        %v1973 = vlaneseq
        %v1974 = vshrl.u32 %v1973, 7
        %v1975 = vsub.s32 0, %v1974
        %v1976 = vrot.slane %v1360, %v1975
        %v1978 = vmul.f32 %v1971, %v1976
        %v1980 = vlaneseq
        %v1981 = vshrl.u32 %v1980, 7
        %v1982 = vsub.s32 0, %v1981
        %v1983 = vrot.slane %v1361, %v1982
        %v1985 = vadd.f32 %v1978, %v1983
        %v1986 = vpack.c.bf16 %v1985, %v1985
        %v1987 = vpack.c.bf16 %v1363, %v1362
        %v1988 = vpack.c.bf16 %v1365, %v1364
        %v1990 = vlaneseq
        %v1991 = vshrl.u32 %v1990, 7
        %v1992 = vsub.s32 0, %v1991
        %v1993 = vrot.slane %v1366, %v1992
        %v1996 = vsel %vm1321, %v1986, 0
        %1998 = vmatprep.subr.bf16.mxu0 0
        %1999 = vmatpush1.bf16.msra.mxu0 %v1987
        %2000 = vmatprep.subr.bf16.mxu0 0
        %2001 = vmatpush1.bf16.msra.mxu0 %v1988
        %2002 = vmatprep.subr.bf16.mxu0 0
        %2003 = vmatpush1.bf16.msra.mxu0 0
        %2004 = vmatprep.subr.bf16.mxu0 0
        %2005 = vmatpush1.bf16.msra.mxu0 0
        %2006 = vmatprep.subr.bf16.mxu0 0
        %2007 = vmatpush1.bf16.msra.mxu0 0
        %2008 = vmatprep.subr.bf16.mxu0 0
        %2009 = vmatpush1.bf16.msra.mxu0 0
        %2010 = vmatprep.subr.bf16.mxu0 0
        %2011 = vmatpush1.bf16.msra.mxu0 0
        %2012 = vmatprep.subr.bf16.mxu0 0
        %2013 = vmatpush1.bf16.msra.mxu0 0
        %2014 = vmatprep.subr.bf16.mxu0 0
        %2015 = vmatpush1.bf16.msra.mxu0 0
        %2016 = vmatprep.subr.bf16.mxu0 0
        %2017 = vmatpush1.bf16.msra.mxu0 0
        %2018 = vmatprep.subr.bf16.mxu0 0
        %2019 = vmatpush1.bf16.msra.mxu0 0
        %2020 = vmatprep.subr.bf16.mxu0 0
        %2021 = vmatpush1.bf16.msra.mxu0 0
        %2022 = vmatprep.subr.bf16.mxu0 0
        %2023 = vmatpush1.bf16.msra.mxu0 0
        %2024 = vmatprep.subr.bf16.mxu0 0
        %2025 = vmatpush1.bf16.msra.mxu0 0
        %2026 = vmatprep.subr.bf16.mxu0 0
        %2027 = vmatpush1.bf16.msra.mxu0 0
        %2028 = vmatprep.subr.bf16.mxu0 0
        %2029 = vmatpush1.bf16.msra.mxu0 0
        %2030 = vmatprep.mubr.bf16.mxu0 0
        %2031 = vmatmul.mubr.bf16.gmra.mrb[0].mxu0 %v1996
        %v2032 = vpop.f32.mrb[0].mxu0
        %v2033 = vadd.f32 %v1993, %v2032
        %v2034 = vpop.f32.mrb[0].mxu0
        %v2035 = vpop.f32.mrb[0].mxu0
        %v2036 = vpop.f32.mrb[0].mxu0
        %2037 = vdwg.mxu0
        %v2038 = vmul.f32 %v2033, 0.5
        %v2039 = vmul.f32 %v2033, 0.70710677
        %v2040 = verf.f32.pop %v2039
        %v2041 = vadd.f32 %v2040, 1.0
        %v2042 = vmul.f32 %v2038, %v2041
        %v2043 = vpack.c.bf16 %v2042, %v2042
        %v2044 = vpack.c.bf16 %v1368, %v1367
        %v2045 = vpack.c.bf16 %v1370, %v1369
        %v2046 = vpack.c.bf16 %v1372, %v1371
        %v2047 = vpack.c.bf16 %v1374, %v1373
        %v2049 = vlaneseq
        %v2050 = vshrl.u32 %v2049, 7
        %v2051 = vsub.s32 0, %v2050
        %v2052 = vrot.slane %v1375, %v2051
        %vm2054 = vcmask 523264
        %v2056 = vsel %vm2054, %v2043, 0
        %2058 = vmatprep.subr.bf16.mxu0 0
        %2059 = vmatpush1.bf16.msra.mxu0 %v2044
        %2060 = vmatprep.subr.bf16.mxu0 0
        %2061 = vmatpush1.bf16.msra.mxu0 %v2045
        %2062 = vmatprep.subr.bf16.mxu0 0
        %2063 = vmatpush1.bf16.msra.mxu0 %v2046
        %2064 = vmatprep.subr.bf16.mxu0 0
        %2065 = vmatpush1.bf16.msra.mxu0 %v2047
        %2066 = vmatprep.subr.bf16.mxu0 0
        %2067 = vmatpush1.bf16.msra.mxu0 0
        %2068 = vmatprep.subr.bf16.mxu0 0
        %2069 = vmatpush1.bf16.msra.mxu0 0
        %2070 = vmatprep.subr.bf16.mxu0 0
        %2071 = vmatpush1.bf16.msra.mxu0 0
        %2072 = vmatprep.subr.bf16.mxu0 0
        %2073 = vmatpush1.bf16.msra.mxu0 0
        %2074 = vmatprep.subr.bf16.mxu0 0
        %2075 = vmatpush1.bf16.msra.mxu0 0
        %2076 = vmatprep.subr.bf16.mxu0 0
        %2077 = vmatpush1.bf16.msra.mxu0 0
        %2078 = vmatprep.subr.bf16.mxu0 0
        %2079 = vmatpush1.bf16.msra.mxu0 0
        %2080 = vmatprep.subr.bf16.mxu0 0
        %2081 = vmatpush1.bf16.msra.mxu0 0
        %2082 = vmatprep.subr.bf16.mxu0 0
        %2083 = vmatpush1.bf16.msra.mxu0 0
        %2084 = vmatprep.subr.bf16.mxu0 0
        %2085 = vmatpush1.bf16.msra.mxu0 0
        %2086 = vmatprep.subr.bf16.mxu0 0
        %2087 = vmatpush1.bf16.msra.mxu0 0
        %2088 = vmatprep.subr.bf16.mxu0 0
        %2089 = vmatpush1.bf16.msra.mxu0 0
        %2090 = vmatprep.mubr.bf16.mxu0 0
        %2091 = vmatmul.mubr.bf16.gmra.mrb[0].mxu0 %v2056
        %v2092 = vpop.f32.mrb[0].mxu0
        %v2093 = vadd.f32 %v2052, %v2092
        %v2094 = vpop.f32.mrb[0].mxu0
        %v2095 = vpop.f32.mrb[0].mxu0
        %v2096 = vpop.f32.mrb[0].mxu0
        %2097 = vdwg.mxu0
        %v2098 = vadd.f32 %v2093, %v1985
        %v2099 = vsel %vm1321, %v2098, 0.0
        %2100 = vadd.xlane.f32.xlu0 %v2099
        %v2101 = vpop.xlane.xlu0 %2100
        %v2102 = vmul.f32 %v2101, %v1325
        %v2103 = vsub.f32 %v2098, %v2102
        %v2104 = vmul.f32 %v2103, %v2103
        %v2105 = vsel %vm1321, %v2104, 0.0
        %2106 = vadd.xlane.f32.xlu0 %v2105
        %v2107 = vpop.xlane.xlu0 %2106
        %v2108 = vmul.f32 %v2107, %v1325
        %v2109 = vadd.f32 %v2108, 1e-12
        %v2110 = vrsqrt.pop %v2109
        %v2111 = vmul.f32 %v2103, %v2110
        %v2113 = vlaneseq
        %v2114 = vshrl.u32 %v2113, 7
        %v2115 = vsub.s32 0, %v2114
        %v2116 = vrot.slane %v1376, %v2115
        %v2118 = vmul.f32 %v2111, %v2116
        %v2120 = vlaneseq
        %v2121 = vshrl.u32 %v2120, 7
        %v2122 = vsub.s32 0, %v2121
        %v2123 = vrot.slane %v1377, %v2122
        %v2125 = vadd.f32 %v2118, %v2123
        %v2126 = vld [vmem:[%s37] sm:$0xff]
        %v2127 = vld [vmem:[%s37 + $0x8] sm:$0xff]
        %v2128 = vld [vmem:[%s37 + $0x10] sm:$0xff]
        %v2129 = vld [vmem:[%s37 + $0x18] sm:$0xff]
        %v2130 = vld [vmem:[%s39] sm:$0x1]
        %v2131 = vld [vmem:[%s41] sm:$0xff]
        %v2132 = vld [vmem:[%s41 + $0x8] sm:$0xff]
        %v2133 = vld [vmem:[%s41 + $0x10] sm:$0xff]
        %v2134 = vld [vmem:[%s41 + $0x18] sm:$0xff]
        %v2135 = vld [vmem:[%s43] sm:$0x1]
        %v2136 = vld [vmem:[#allocation26] sm:$0x1]
        %v2137 = vld [vmem:[#allocation27] sm:$0x1]
        %v2138 = vld [vmem:[%s49] sm:$0xff]
        %v2139 = vld [vmem:[%s49 + $0x8] sm:$0xff]
        %v2140 = vld [vmem:[%s49 + $0x10] sm:$0xff]
        %v2141 = vld [vmem:[%s49 + $0x18] sm:$0xff]
        %v2142 = vld [vmem:[#allocation29] sm:$0x1]
        %v2143 = vld [vmem:[%s53] sm:$0xff]
        %v2144 = vld [vmem:[%s53 + $0x8] sm:$0xff]
        %v2145 = vld [vmem:[%s53 + $0x10] sm:$0xff]
        %v2146 = vld [vmem:[%s53 + $0x18] sm:$0xff]
        %v2147 = vld [vmem:[%s53 + $0x20] sm:$0xff]
        %v2148 = vld [vmem:[%s53 + $0x28] sm:$0xff]
        %v2149 = vld [vmem:[%s53 + $0x30] sm:$0xff]
        %v2150 = vld [vmem:[%s53 + $0x38] sm:$0xff]
        %v2151 = vld [vmem:[%s55] sm:$0x1]
        %v2152 = vld [vmem:[%s57] sm:$0x1]
        %v2153 = vld [vmem:[%s59] sm:$0x1]
        %v2154 = vpack.c.bf16 %v2125, %v2125
        %v2155 = vpack.c.bf16 %v2127, %v2126
        %v2156 = vpack.c.bf16 %v2129, %v2128
        %v2158 = vlaneseq
        %v2159 = vshrl.u32 %v2158, 7
        %v2160 = vsub.s32 0, %v2159
        %v2161 = vrot.slane %v2130, %v2160
        %v2164 = vsel %vm1321, %v2154, 0
        %2166 = vmatprep.subr.bf16.mxu0 0
        %2167 = vmatpush1.bf16.msra.mxu0 %v2155
        %2168 = vmatprep.subr.bf16.mxu0 0
        %2169 = vmatpush1.bf16.msra.mxu0 %v2156
        %2170 = vmatprep.subr.bf16.mxu0 0
        %2171 = vmatpush1.bf16.msra.mxu0 0
        %2172 = vmatprep.subr.bf16.mxu0 0
        %2173 = vmatpush1.bf16.msra.mxu0 0
        %2174 = vmatprep.subr.bf16.mxu0 0
        %2175 = vmatpush1.bf16.msra.mxu0 0
        %2176 = vmatprep.subr.bf16.mxu0 0
        %2177 = vmatpush1.bf16.msra.mxu0 0
        %2178 = vmatprep.subr.bf16.mxu0 0
        %2179 = vmatpush1.bf16.msra.mxu0 0
        %2180 = vmatprep.subr.bf16.mxu0 0
        %2181 = vmatpush1.bf16.msra.mxu0 0
        %2182 = vmatprep.subr.bf16.mxu0 0
        %2183 = vmatpush1.bf16.msra.mxu0 0
        %2184 = vmatprep.subr.bf16.mxu0 0
        %2185 = vmatpush1.bf16.msra.mxu0 0
        %2186 = vmatprep.subr.bf16.mxu0 0
        %2187 = vmatpush1.bf16.msra.mxu0 0
        %2188 = vmatprep.subr.bf16.mxu0 0
        %2189 = vmatpush1.bf16.msra.mxu0 0
        %2190 = vmatprep.subr.bf16.mxu0 0
        %2191 = vmatpush1.bf16.msra.mxu0 0
        %2192 = vmatprep.subr.bf16.mxu0 0
        %2193 = vmatpush1.bf16.msra.mxu0 0
        %2194 = vmatprep.subr.bf16.mxu0 0
        %2195 = vmatpush1.bf16.msra.mxu0 0
        %2196 = vmatprep.subr.bf16.mxu0 0
        %2197 = vmatpush1.bf16.msra.mxu0 0
        %2198 = vmatprep.mubr.bf16.mxu0 0
        %2199 = vmatmul.mubr.bf16.gmra.mrb[0].mxu0 %v2164
        %v2200 = vpop.f32.mrb[0].mxu0
        %v2201 = vadd.f32 %v2161, %v2200
        %v2202 = vpop.f32.mrb[0].mxu0
        %v2203 = vpop.f32.mrb[0].mxu0
        %v2204 = vpop.f32.mrb[0].mxu0
        %2205 = vdwg.mxu0
        %v2206 = vpack.c.bf16 %v2201, %v2201
        %2208 = vrot.lane.b32.xlu0 %v2206, 96
        %v2209 = vpop.permute.xlu0 %2208
        %v2211 = vsel %vm1434, %v2206, 0
        %v2214 = vsel %vm1434, %v2209, 0
        %2216 = vmatprep.subr.bf16.mxu0 0
        %2217 = vmatpush1.bf16.xpose.msra.mxu0 %v2214
        %2218 = vmatprep.subr.bf16.mxu0 0
        %2219 = vmatpush1.bf16.xpose.msra.mxu0 0
        %2220 = vmatprep.subr.bf16.mxu0 0
        %2221 = vmatpush1.bf16.xpose.msra.mxu0 0
        %2222 = vmatprep.subr.bf16.mxu0 0
        %2223 = vmatpush1.bf16.xpose.msra.mxu0 0
        %2224 = vmatprep.subr.bf16.mxu0 0
        %2225 = vmatpush1.bf16.xpose.msra.mxu0 0
        %2226 = vmatprep.subr.bf16.mxu0 0
        %2227 = vmatpush1.bf16.xpose.msra.mxu0 0
        %2228 = vmatprep.subr.bf16.mxu0 0
        %2229 = vmatpush1.bf16.xpose.msra.mxu0 0
        %2230 = vmatprep.subr.bf16.mxu0 0
        %2231 = vmatpush1.bf16.xpose.msra.mxu0 0
        %2232 = vmatprep.subr.bf16.mxu0 0
        %2233 = vmatpush1.bf16.xpose.msra.mxu0 0
        %2234 = vmatprep.subr.bf16.mxu0 0
        %2235 = vmatpush1.bf16.xpose.msra.mxu0 0
        %2236 = vmatprep.subr.bf16.mxu0 0
        %2237 = vmatpush1.bf16.xpose.msra.mxu0 0
        %2238 = vmatprep.subr.bf16.mxu0 0
        %2239 = vmatpush1.bf16.xpose.msra.mxu0 0
        %2240 = vmatprep.subr.bf16.mxu0 0
        %2241 = vmatpush1.bf16.xpose.msra.mxu0 0
        %2242 = vmatprep.subr.bf16.mxu0 0
        %2243 = vmatpush1.bf16.xpose.msra.mxu0 0
        %2244 = vmatprep.subr.bf16.mxu0 0
        %2245 = vmatpush1.bf16.xpose.msra.mxu0 0
        %2246 = vmatprep.subr.bf16.mxu0 0
        %2247 = vmatpush1.bf16.xpose.msra.mxu0 0
        %2248 = vmatprep.mubr.bf16.mxu0 0
        %2249 = vmatmul.mubr.bf16.gmra.mrb[0].mxu0 %v2211
        %v2250 = vpop.f32.mrb[0].mxu0
        %v2251 = vadd.f32 0.0, %v2250
        %v2252 = vpop.f32.mrb[0].mxu0
        %v2253 = vpop.f32.mrb[0].mxu0
        %v2254 = vpop.f32.mrb[0].mxu0
        %2255 = vdwg.mxu0
        %v2256 = vmul.f32 %v2251, 0.35355338
        %v2257 = vadd.f32 %v2256, %v1486
        %v2258 = vsel %vm1434, %v2257, -inf
        %2259 = vmax.xlane.f32.xlu0 %v2258
        %v2260 = vpop.xlane.xlu0 %2259
        %v2261 = vsub.f32 %v2257, %v2260
        %v2262 = vmul.f32 %v2261, 1.442695
        %v2263 = vpow.pop %v2262
        %v2264 = vsel %vm1434, %v2263, 0.0
        %2265 = vadd.xlane.f32.xlu0 %v2264
        %v2266 = vpop.xlane.xlu0 %2265
        %v2267 = vrcp.pop %v2266
        %v2268 = vmul.f32 %v2263, %v2267
        %v2269 = vpack.c.bf16 %v2268, %v2268
        %2270 = vrot.lane.b32.xlu0 %v2206, 64
        %v2271 = vpop.permute.xlu0 %2270
        %v2273 = vsel %vm1434, %v2269, 0
        %v2276 = vsel %vm1506, %v2271, 0
        %2278 = vmatprep.subr.bf16.mxu0 0
        %2279 = vmatpush1.bf16.msra.mxu0 %v2276
        %2280 = vmatprep.subr.bf16.mxu0 0
        %2281 = vmatpush1.bf16.msra.mxu0 0
        %2282 = vmatprep.subr.bf16.mxu0 0
        %2283 = vmatpush1.bf16.msra.mxu0 0
        %2284 = vmatprep.subr.bf16.mxu0 0
        %2285 = vmatpush1.bf16.msra.mxu0 0
        %2286 = vmatprep.subr.bf16.mxu0 0
        %2287 = vmatpush1.bf16.msra.mxu0 0
        %2288 = vmatprep.subr.bf16.mxu0 0
        %2289 = vmatpush1.bf16.msra.mxu0 0
        %2290 = vmatprep.subr.bf16.mxu0 0
        %2291 = vmatpush1.bf16.msra.mxu0 0
        %2292 = vmatprep.subr.bf16.mxu0 0
        %2293 = vmatpush1.bf16.msra.mxu0 0
        %2294 = vmatprep.subr.bf16.mxu0 0
        %2295 = vmatpush1.bf16.msra.mxu0 0
        %2296 = vmatprep.subr.bf16.mxu0 0
        %2297 = vmatpush1.bf16.msra.mxu0 0
        %2298 = vmatprep.subr.bf16.mxu0 0
        %2299 = vmatpush1.bf16.msra.mxu0 0
        %2300 = vmatprep.subr.bf16.mxu0 0
        %2301 = vmatpush1.bf16.msra.mxu0 0
        %2302 = vmatprep.subr.bf16.mxu0 0
        %2303 = vmatpush1.bf16.msra.mxu0 0
        %2304 = vmatprep.subr.bf16.mxu0 0
        %2305 = vmatpush1.bf16.msra.mxu0 0
        %2306 = vmatprep.subr.bf16.mxu0 0
        %2307 = vmatpush1.bf16.msra.mxu0 0
        %2308 = vmatprep.subr.bf16.mxu0 0
        %2309 = vmatpush1.bf16.msra.mxu0 0
        %2310 = vmatprep.mubr.bf16.mxu0 0
        %2311 = vmatmul.mubr.bf16.gmra.mrb[0].mxu0 %v2273
        %v2312 = vpop.f32.mrb[0].mxu0
        %v2313 = vadd.f32 0.0, %v2312
        %v2314 = vpop.f32.mrb[0].mxu0
        %v2315 = vpop.f32.mrb[0].mxu0
        %v2316 = vpop.f32.mrb[0].mxu0
        %2317 = vdwg.mxu0
        %2318 = vst.msk [vmem:[#allocation2] sm:$0xff] %vm1434, %v2313
        %2319 = vrot.lane.b32.xlu0 %v2206, 120
        %v2320 = vpop.permute.xlu0 %2319
        %2321 = vrot.lane.b32.xlu0 %v2206, 88
        %v2322 = vpop.permute.xlu0 %2321
        %v2324 = vsel %vm1434, %v2320, 0
        %v2327 = vsel %vm1434, %v2322, 0
        %2329 = vmatprep.subr.bf16.mxu0 0
        %2330 = vmatpush1.bf16.xpose.msra.mxu0 %v2327
        %2331 = vmatprep.subr.bf16.mxu0 0
        %2332 = vmatpush1.bf16.xpose.msra.mxu0 0
        %2333 = vmatprep.subr.bf16.mxu0 0
        %2334 = vmatpush1.bf16.xpose.msra.mxu0 0
        %2335 = vmatprep.subr.bf16.mxu0 0
        %2336 = vmatpush1.bf16.xpose.msra.mxu0 0
        %2337 = vmatprep.subr.bf16.mxu0 0
        %2338 = vmatpush1.bf16.xpose.msra.mxu0 0
        %2339 = vmatprep.subr.bf16.mxu0 0
        %2340 = vmatpush1.bf16.xpose.msra.mxu0 0
        %2341 = vmatprep.subr.bf16.mxu0 0
        %2342 = vmatpush1.bf16.xpose.msra.mxu0 0
        %2343 = vmatprep.subr.bf16.mxu0 0
        %2344 = vmatpush1.bf16.xpose.msra.mxu0 0
        %2345 = vmatprep.subr.bf16.mxu0 0
        %2346 = vmatpush1.bf16.xpose.msra.mxu0 0
        %2347 = vmatprep.subr.bf16.mxu0 0
        %2348 = vmatpush1.bf16.xpose.msra.mxu0 0
        %2349 = vmatprep.subr.bf16.mxu0 0
        %2350 = vmatpush1.bf16.xpose.msra.mxu0 0
        %2351 = vmatprep.subr.bf16.mxu0 0
        %2352 = vmatpush1.bf16.xpose.msra.mxu0 0
        %2353 = vmatprep.subr.bf16.mxu0 0
        %2354 = vmatpush1.bf16.xpose.msra.mxu0 0
        %2355 = vmatprep.subr.bf16.mxu0 0
        %2356 = vmatpush1.bf16.xpose.msra.mxu0 0
        %2357 = vmatprep.subr.bf16.mxu0 0
        %2358 = vmatpush1.bf16.xpose.msra.mxu0 0
        %2359 = vmatprep.subr.bf16.mxu0 0
        %2360 = vmatpush1.bf16.xpose.msra.mxu0 0
        %2361 = vmatprep.mubr.bf16.mxu0 0
        %2362 = vmatmul.mubr.bf16.gmra.mrb[0].mxu0 %v2324
        %v2363 = vpop.f32.mrb[0].mxu0
        %v2364 = vadd.f32 0.0, %v2363
        %v2365 = vpop.f32.mrb[0].mxu0
        %v2366 = vpop.f32.mrb[0].mxu0
        %v2367 = vpop.f32.mrb[0].mxu0
        %2368 = vdwg.mxu0
        %v2369 = vmul.f32 %v2364, 0.35355338
        %v2370 = vadd.f32 %v2369, %v1486
        %v2371 = vsel %vm1434, %v2370, -inf
        %2372 = vmax.xlane.f32.xlu0 %v2371
        %v2373 = vpop.xlane.xlu0 %2372
        %v2374 = vsub.f32 %v2370, %v2373
        %v2375 = vmul.f32 %v2374, 1.442695
        %v2376 = vpow.pop %v2375
        %v2377 = vsel %vm1434, %v2376, 0.0
        %2378 = vadd.xlane.f32.xlu0 %v2377
        %v2379 = vpop.xlane.xlu0 %2378
        %v2380 = vrcp.pop %v2379
        %v2381 = vmul.f32 %v2376, %v2380
        %v2382 = vpack.c.bf16 %v2381, %v2381
        %2383 = vrot.lane.b32.xlu0 %v2206, 56
        %v2384 = vpop.permute.xlu0 %2383
        %v2386 = vsel %vm1434, %v2382, 0
        %v2389 = vsel %vm1506, %v2384, 0
        %2391 = vmatprep.subr.bf16.mxu0 0
        %2392 = vmatpush1.bf16.msra.mxu0 %v2389
        %2393 = vmatprep.subr.bf16.mxu0 0
        %2394 = vmatpush1.bf16.msra.mxu0 0
        %2395 = vmatprep.subr.bf16.mxu0 0
        %2396 = vmatpush1.bf16.msra.mxu0 0
        %2397 = vmatprep.subr.bf16.mxu0 0
        %2398 = vmatpush1.bf16.msra.mxu0 0
        %2399 = vmatprep.subr.bf16.mxu0 0
        %2400 = vmatpush1.bf16.msra.mxu0 0
        %2401 = vmatprep.subr.bf16.mxu0 0
        %2402 = vmatpush1.bf16.msra.mxu0 0
        %2403 = vmatprep.subr.bf16.mxu0 0
        %2404 = vmatpush1.bf16.msra.mxu0 0
        %2405 = vmatprep.subr.bf16.mxu0 0
        %2406 = vmatpush1.bf16.msra.mxu0 0
        %2407 = vmatprep.subr.bf16.mxu0 0
        %2408 = vmatpush1.bf16.msra.mxu0 0
        %2409 = vmatprep.subr.bf16.mxu0 0
        %2410 = vmatpush1.bf16.msra.mxu0 0
        %2411 = vmatprep.subr.bf16.mxu0 0
        %2412 = vmatpush1.bf16.msra.mxu0 0
        %2413 = vmatprep.subr.bf16.mxu0 0
        %2414 = vmatpush1.bf16.msra.mxu0 0
        %2415 = vmatprep.subr.bf16.mxu0 0
        %2416 = vmatpush1.bf16.msra.mxu0 0
        %2417 = vmatprep.subr.bf16.mxu0 0
        %2418 = vmatpush1.bf16.msra.mxu0 0
        %2419 = vmatprep.subr.bf16.mxu0 0
        %2420 = vmatpush1.bf16.msra.mxu0 0
        %2421 = vmatprep.subr.bf16.mxu0 0
        %2422 = vmatpush1.bf16.msra.mxu0 0
        %2423 = vmatprep.mubr.bf16.mxu0 0
        %2424 = vmatmul.mubr.bf16.gmra.mrb[0].mxu0 %v2386
        %v2425 = vpop.f32.mrb[0].mxu0
        %v2426 = vadd.f32 0.0, %v2425
        %v2427 = vpop.f32.mrb[0].mxu0
        %v2428 = vpop.f32.mrb[0].mxu0
        %v2429 = vpop.f32.mrb[0].mxu0
        %2430 = vdwg.mxu0
        %2432 = vrot.lane.b32.xlu0 %v2426, 8
        %v2433 = vpop.permute.xlu0 %2432
        %2435 = vst.msk [vmem:[#allocation2] sm:$0xff] %vm1667, %v2433
        %2436 = vrot.lane.b32.xlu0 %v2206, 112
        %v2437 = vpop.permute.xlu0 %2436
        %2438 = vrot.lane.b32.xlu0 %v2206, 80
        %v2439 = vpop.permute.xlu0 %2438
        %v2441 = vsel %vm1434, %v2437, 0
        %v2444 = vsel %vm1434, %v2439, 0
        %2446 = vmatprep.subr.bf16.mxu0 0
        %2447 = vmatpush1.bf16.xpose.msra.mxu0 %v2444
        %2448 = vmatprep.subr.bf16.mxu0 0
        %2449 = vmatpush1.bf16.xpose.msra.mxu0 0
        %2450 = vmatprep.subr.bf16.mxu0 0
        %2451 = vmatpush1.bf16.xpose.msra.mxu0 0
        %2452 = vmatprep.subr.bf16.mxu0 0
        %2453 = vmatpush1.bf16.xpose.msra.mxu0 0
        %2454 = vmatprep.subr.bf16.mxu0 0
        %2455 = vmatpush1.bf16.xpose.msra.mxu0 0
        %2456 = vmatprep.subr.bf16.mxu0 0
        %2457 = vmatpush1.bf16.xpose.msra.mxu0 0
        %2458 = vmatprep.subr.bf16.mxu0 0
        %2459 = vmatpush1.bf16.xpose.msra.mxu0 0
        %2460 = vmatprep.subr.bf16.mxu0 0
        %2461 = vmatpush1.bf16.xpose.msra.mxu0 0
        %2462 = vmatprep.subr.bf16.mxu0 0
        %2463 = vmatpush1.bf16.xpose.msra.mxu0 0
        %2464 = vmatprep.subr.bf16.mxu0 0
        %2465 = vmatpush1.bf16.xpose.msra.mxu0 0
        %2466 = vmatprep.subr.bf16.mxu0 0
        %2467 = vmatpush1.bf16.xpose.msra.mxu0 0
        %2468 = vmatprep.subr.bf16.mxu0 0
        %2469 = vmatpush1.bf16.xpose.msra.mxu0 0
        %2470 = vmatprep.subr.bf16.mxu0 0
        %2471 = vmatpush1.bf16.xpose.msra.mxu0 0
        %2472 = vmatprep.subr.bf16.mxu0 0
        %2473 = vmatpush1.bf16.xpose.msra.mxu0 0
        %2474 = vmatprep.subr.bf16.mxu0 0
        %2475 = vmatpush1.bf16.xpose.msra.mxu0 0
        %2476 = vmatprep.subr.bf16.mxu0 0
        %2477 = vmatpush1.bf16.xpose.msra.mxu0 0
        %2478 = vmatprep.mubr.bf16.mxu0 0
        %2479 = vmatmul.mubr.bf16.gmra.mrb[0].mxu0 %v2441
        %v2480 = vpop.f32.mrb[0].mxu0
        %v2481 = vadd.f32 0.0, %v2480
        %v2482 = vpop.f32.mrb[0].mxu0
        %v2483 = vpop.f32.mrb[0].mxu0
        %v2484 = vpop.f32.mrb[0].mxu0
        %2485 = vdwg.mxu0
        %v2486 = vmul.f32 %v2481, 0.35355338
        %v2487 = vadd.f32 %v2486, %v1486
        %v2488 = vsel %vm1434, %v2487, -inf
        %2489 = vmax.xlane.f32.xlu0 %v2488
        %v2490 = vpop.xlane.xlu0 %2489
        %v2491 = vsub.f32 %v2487, %v2490
        %v2492 = vmul.f32 %v2491, 1.442695
        %v2493 = vpow.pop %v2492
        %v2494 = vsel %vm1434, %v2493, 0.0
        %2495 = vadd.xlane.f32.xlu0 %v2494
        %v2496 = vpop.xlane.xlu0 %2495
        %v2497 = vrcp.pop %v2496
        %v2498 = vmul.f32 %v2493, %v2497
        %v2499 = vpack.c.bf16 %v2498, %v2498
        %2500 = vrot.lane.b32.xlu0 %v2206, 48
        %v2501 = vpop.permute.xlu0 %2500
        %v2503 = vsel %vm1434, %v2499, 0
        %v2506 = vsel %vm1506, %v2501, 0
        %2508 = vmatprep.subr.bf16.mxu0 0
        %2509 = vmatpush1.bf16.msra.mxu0 %v2506
        %2510 = vmatprep.subr.bf16.mxu0 0
        %2511 = vmatpush1.bf16.msra.mxu0 0
        %2512 = vmatprep.subr.bf16.mxu0 0
        %2513 = vmatpush1.bf16.msra.mxu0 0
        %2514 = vmatprep.subr.bf16.mxu0 0
        %2515 = vmatpush1.bf16.msra.mxu0 0
        %2516 = vmatprep.subr.bf16.mxu0 0
        %2517 = vmatpush1.bf16.msra.mxu0 0
        %2518 = vmatprep.subr.bf16.mxu0 0
        %2519 = vmatpush1.bf16.msra.mxu0 0
        %2520 = vmatprep.subr.bf16.mxu0 0
        %2521 = vmatpush1.bf16.msra.mxu0 0
        %2522 = vmatprep.subr.bf16.mxu0 0
        %2523 = vmatpush1.bf16.msra.mxu0 0
        %2524 = vmatprep.subr.bf16.mxu0 0
        %2525 = vmatpush1.bf16.msra.mxu0 0
        %2526 = vmatprep.subr.bf16.mxu0 0
        %2527 = vmatpush1.bf16.msra.mxu0 0
        %2528 = vmatprep.subr.bf16.mxu0 0
        %2529 = vmatpush1.bf16.msra.mxu0 0
        %2530 = vmatprep.subr.bf16.mxu0 0
        %2531 = vmatpush1.bf16.msra.mxu0 0
        %2532 = vmatprep.subr.bf16.mxu0 0
        %2533 = vmatpush1.bf16.msra.mxu0 0
        %2534 = vmatprep.subr.bf16.mxu0 0
        %2535 = vmatpush1.bf16.msra.mxu0 0
        %2536 = vmatprep.subr.bf16.mxu0 0
        %2537 = vmatpush1.bf16.msra.mxu0 0
        %2538 = vmatprep.subr.bf16.mxu0 0
        %2539 = vmatpush1.bf16.msra.mxu0 0
        %2540 = vmatprep.mubr.bf16.mxu0 0
        %2541 = vmatmul.mubr.bf16.gmra.mrb[0].mxu0 %v2503
        %v2542 = vpop.f32.mrb[0].mxu0
        %v2543 = vadd.f32 0.0, %v2542
        %v2544 = vpop.f32.mrb[0].mxu0
        %v2545 = vpop.f32.mrb[0].mxu0
        %v2546 = vpop.f32.mrb[0].mxu0
        %2547 = vdwg.mxu0
        %2549 = vrot.lane.b32.xlu0 %v2543, 16
        %v2550 = vpop.permute.xlu0 %2549
        %2552 = vst.msk [vmem:[#allocation2] sm:$0xff] %vm1785, %v2550
        %2553 = vrot.lane.b32.xlu0 %v2206, 104
        %v2554 = vpop.permute.xlu0 %2553
        %2555 = vrot.lane.b32.xlu0 %v2206, 72
        %v2556 = vpop.permute.xlu0 %2555
        %v2558 = vsel %vm1434, %v2554, 0
        %v2561 = vsel %vm1434, %v2556, 0
        %2563 = vmatprep.subr.bf16.mxu0 0
        %2564 = vmatpush1.bf16.xpose.msra.mxu0 %v2561
        %2565 = vmatprep.subr.bf16.mxu0 0
        %2566 = vmatpush1.bf16.xpose.msra.mxu0 0
        %2567 = vmatprep.subr.bf16.mxu0 0
        %2568 = vmatpush1.bf16.xpose.msra.mxu0 0
        %2569 = vmatprep.subr.bf16.mxu0 0
        %2570 = vmatpush1.bf16.xpose.msra.mxu0 0
        %2571 = vmatprep.subr.bf16.mxu0 0
        %2572 = vmatpush1.bf16.xpose.msra.mxu0 0
        %2573 = vmatprep.subr.bf16.mxu0 0
        %2574 = vmatpush1.bf16.xpose.msra.mxu0 0
        %2575 = vmatprep.subr.bf16.mxu0 0
        %2576 = vmatpush1.bf16.xpose.msra.mxu0 0
        %2577 = vmatprep.subr.bf16.mxu0 0
        %2578 = vmatpush1.bf16.xpose.msra.mxu0 0
        %2579 = vmatprep.subr.bf16.mxu0 0
        %2580 = vmatpush1.bf16.xpose.msra.mxu0 0
        %2581 = vmatprep.subr.bf16.mxu0 0
        %2582 = vmatpush1.bf16.xpose.msra.mxu0 0
        %2583 = vmatprep.subr.bf16.mxu0 0
        %2584 = vmatpush1.bf16.xpose.msra.mxu0 0
        %2585 = vmatprep.subr.bf16.mxu0 0
        %2586 = vmatpush1.bf16.xpose.msra.mxu0 0
        %2587 = vmatprep.subr.bf16.mxu0 0
        %2588 = vmatpush1.bf16.xpose.msra.mxu0 0
        %2589 = vmatprep.subr.bf16.mxu0 0
        %2590 = vmatpush1.bf16.xpose.msra.mxu0 0
        %2591 = vmatprep.subr.bf16.mxu0 0
        %2592 = vmatpush1.bf16.xpose.msra.mxu0 0
        %2593 = vmatprep.subr.bf16.mxu0 0
        %2594 = vmatpush1.bf16.xpose.msra.mxu0 0
        %2595 = vmatprep.mubr.bf16.mxu0 0
        %2596 = vmatmul.mubr.bf16.gmra.mrb[0].mxu0 %v2558
        %v2597 = vpop.f32.mrb[0].mxu0
        %v2598 = vadd.f32 0.0, %v2597
        %v2599 = vpop.f32.mrb[0].mxu0
        %v2600 = vpop.f32.mrb[0].mxu0
        %v2601 = vpop.f32.mrb[0].mxu0
        %2602 = vdwg.mxu0
        %v2603 = vmul.f32 %v2598, 0.35355338
        %v2604 = vadd.f32 %v2603, %v1486
        %v2605 = vsel %vm1434, %v2604, -inf
        %2606 = vmax.xlane.f32.xlu0 %v2605
        %v2607 = vpop.xlane.xlu0 %2606
        %v2608 = vsub.f32 %v2604, %v2607
        %v2609 = vmul.f32 %v2608, 1.442695
        %v2610 = vpow.pop %v2609
        %v2611 = vsel %vm1434, %v2610, 0.0
        %2612 = vadd.xlane.f32.xlu0 %v2611
        %v2613 = vpop.xlane.xlu0 %2612
        %v2614 = vrcp.pop %v2613
        %v2615 = vmul.f32 %v2610, %v2614
        %v2616 = vpack.c.bf16 %v2615, %v2615
        %2617 = vrot.lane.b32.xlu0 %v2206, 40
        %v2618 = vpop.permute.xlu0 %2617
        %v2620 = vsel %vm1434, %v2616, 0
        %v2623 = vsel %vm1506, %v2618, 0
        %2625 = vmatprep.subr.bf16.mxu0 0
        %2626 = vmatpush1.bf16.msra.mxu0 %v2623
        %2627 = vmatprep.subr.bf16.mxu0 0
        %2628 = vmatpush1.bf16.msra.mxu0 0
        %2629 = vmatprep.subr.bf16.mxu0 0
        %2630 = vmatpush1.bf16.msra.mxu0 0
        %2631 = vmatprep.subr.bf16.mxu0 0
        %2632 = vmatpush1.bf16.msra.mxu0 0
        %2633 = vmatprep.subr.bf16.mxu0 0
        %2634 = vmatpush1.bf16.msra.mxu0 0
        %2635 = vmatprep.subr.bf16.mxu0 0
        %2636 = vmatpush1.bf16.msra.mxu0 0
        %2637 = vmatprep.subr.bf16.mxu0 0
        %2638 = vmatpush1.bf16.msra.mxu0 0
        %2639 = vmatprep.subr.bf16.mxu0 0
        %2640 = vmatpush1.bf16.msra.mxu0 0
        %2641 = vmatprep.subr.bf16.mxu0 0
        %2642 = vmatpush1.bf16.msra.mxu0 0
        %2643 = vmatprep.subr.bf16.mxu0 0
        %2644 = vmatpush1.bf16.msra.mxu0 0
        %2645 = vmatprep.subr.bf16.mxu0 0
        %2646 = vmatpush1.bf16.msra.mxu0 0
        %2647 = vmatprep.subr.bf16.mxu0 0
        %2648 = vmatpush1.bf16.msra.mxu0 0
        %2649 = vmatprep.subr.bf16.mxu0 0
        %2650 = vmatpush1.bf16.msra.mxu0 0
        %2651 = vmatprep.subr.bf16.mxu0 0
        %2652 = vmatpush1.bf16.msra.mxu0 0
        %2653 = vmatprep.subr.bf16.mxu0 0
        %2654 = vmatpush1.bf16.msra.mxu0 0
        %2655 = vmatprep.subr.bf16.mxu0 0
        %2656 = vmatpush1.bf16.msra.mxu0 0
        %2657 = vmatprep.mubr.bf16.mxu0 0
        %2658 = vmatmul.mubr.bf16.gmra.mrb[0].mxu0 %v2620
        %v2659 = vpop.f32.mrb[0].mxu0
        %v2660 = vadd.f32 0.0, %v2659
        %v2661 = vpop.f32.mrb[0].mxu0
        %v2662 = vpop.f32.mrb[0].mxu0
        %v2663 = vpop.f32.mrb[0].mxu0
        %2664 = vdwg.mxu0
        %2666 = vrot.lane.b32.xlu0 %v2660, 24
        %v2667 = vpop.permute.xlu0 %2666
        %2669 = vst.msk [vmem:[#allocation2] sm:$0xff] %vm1903, %v2667
        %v2670 = vld [vmem:[#allocation2] sm:$0xff]
        %v2671 = vpack.c.bf16 %v2670, %v2670
        %v2672 = vpack.c.bf16 %v2132, %v2131
        %v2673 = vpack.c.bf16 %v2134, %v2133
        %v2675 = vlaneseq
        %v2676 = vshrl.u32 %v2675, 7
        %v2677 = vsub.s32 0, %v2676
        %v2678 = vrot.slane %v2135, %v2677
        %v2681 = vsel %vm1321, %v2671, 0
        %2683 = vmatprep.subr.bf16.mxu0 0
        %2684 = vmatpush1.bf16.msra.mxu0 %v2672
        %2685 = vmatprep.subr.bf16.mxu0 0
        %2686 = vmatpush1.bf16.msra.mxu0 %v2673
        %2687 = vmatprep.subr.bf16.mxu0 0
        %2688 = vmatpush1.bf16.msra.mxu0 0
        %2689 = vmatprep.subr.bf16.mxu0 0
        %2690 = vmatpush1.bf16.msra.mxu0 0
        %2691 = vmatprep.subr.bf16.mxu0 0
        %2692 = vmatpush1.bf16.msra.mxu0 0
        %2693 = vmatprep.subr.bf16.mxu0 0
        %2694 = vmatpush1.bf16.msra.mxu0 0
        %2695 = vmatprep.subr.bf16.mxu0 0
        %2696 = vmatpush1.bf16.msra.mxu0 0
        %2697 = vmatprep.subr.bf16.mxu0 0
        %2698 = vmatpush1.bf16.msra.mxu0 0
        %2699 = vmatprep.subr.bf16.mxu0 0
        %2700 = vmatpush1.bf16.msra.mxu0 0
        %2701 = vmatprep.subr.bf16.mxu0 0
        %2702 = vmatpush1.bf16.msra.mxu0 0
        %2703 = vmatprep.subr.bf16.mxu0 0
        %2704 = vmatpush1.bf16.msra.mxu0 0
        %2705 = vmatprep.subr.bf16.mxu0 0
        %2706 = vmatpush1.bf16.msra.mxu0 0
        %2707 = vmatprep.subr.bf16.mxu0 0
        %2708 = vmatpush1.bf16.msra.mxu0 0
        %2709 = vmatprep.subr.bf16.mxu0 0
        %2710 = vmatpush1.bf16.msra.mxu0 0
        %2711 = vmatprep.subr.bf16.mxu0 0
        %2712 = vmatpush1.bf16.msra.mxu0 0
        %2713 = vmatprep.subr.bf16.mxu0 0
        %2714 = vmatpush1.bf16.msra.mxu0 0
        %2715 = vmatprep.mubr.bf16.mxu0 0
        %2716 = vmatmul.mubr.bf16.gmra.mrb[0].mxu0 %v2681
        %v2717 = vpop.f32.mrb[0].mxu0
        %v2718 = vadd.f32 %v2678, %v2717
        %v2719 = vpop.f32.mrb[0].mxu0
        %v2720 = vpop.f32.mrb[0].mxu0
        %v2721 = vpop.f32.mrb[0].mxu0
        %2722 = vdwg.mxu0
        %v2723 = vadd.f32 %v2718, %v2125
        %v2724 = vsel %vm1321, %v2723, 0.0
        %2725 = vadd.xlane.f32.xlu0 %v2724
        %v2726 = vpop.xlane.xlu0 %2725
        %v2727 = vmul.f32 %v2726, %v1325
        %v2728 = vsub.f32 %v2723, %v2727
        %v2729 = vmul.f32 %v2728, %v2728
        %v2730 = vsel %vm1321, %v2729, 0.0
        %2731 = vadd.xlane.f32.xlu0 %v2730
        %v2732 = vpop.xlane.xlu0 %2731
        %v2733 = vmul.f32 %v2732, %v1325
        %v2734 = vadd.f32 %v2733, 1e-12
        %v2735 = vrsqrt.pop %v2734
        %v2736 = vmul.f32 %v2728, %v2735
        %v2738 = vlaneseq
        %v2739 = vshrl.u32 %v2738, 7
        %v2740 = vsub.s32 0, %v2739
        %v2741 = vrot.slane %v2136, %v2740
        %v2743 = vmul.f32 %v2736, %v2741
        %v2745 = vlaneseq
        %v2746 = vshrl.u32 %v2745, 7
        %v2747 = vsub.s32 0, %v2746
        %v2748 = vrot.slane %v2137, %v2747
        %v2750 = vadd.f32 %v2743, %v2748
        %v2751 = vpack.c.bf16 %v2750, %v2750
        %v2752 = vpack.c.bf16 %v2139, %v2138
        %v2753 = vpack.c.bf16 %v2141, %v2140
        %v2755 = vlaneseq
        %v2756 = vshrl.u32 %v2755, 7
        %v2757 = vsub.s32 0, %v2756
        %v2758 = vrot.slane %v2142, %v2757
        %v2761 = vsel %vm1321, %v2751, 0
        %2763 = vmatprep.subr.bf16.mxu0 0
        %2764 = vmatpush1.bf16.msra.mxu0 %v2752
        %2765 = vmatprep.subr.bf16.mxu0 0
        %2766 = vmatpush1.bf16.msra.mxu0 %v2753
        %2767 = vmatprep.subr.bf16.mxu0 0
        %2768 = vmatpush1.bf16.msra.mxu0 0
        %2769 = vmatprep.subr.bf16.mxu0 0
        %2770 = vmatpush1.bf16.msra.mxu0 0
        %2771 = vmatprep.subr.bf16.mxu0 0
        %2772 = vmatpush1.bf16.msra.mxu0 0
        %2773 = vmatprep.subr.bf16.mxu0 0
        %2774 = vmatpush1.bf16.msra.mxu0 0
        %2775 = vmatprep.subr.bf16.mxu0 0
        %2776 = vmatpush1.bf16.msra.mxu0 0
        %2777 = vmatprep.subr.bf16.mxu0 0
        %2778 = vmatpush1.bf16.msra.mxu0 0
        %2779 = vmatprep.subr.bf16.mxu0 0
        %2780 = vmatpush1.bf16.msra.mxu0 0
        %2781 = vmatprep.subr.bf16.mxu0 0
        %2782 = vmatpush1.bf16.msra.mxu0 0
        %2783 = vmatprep.subr.bf16.mxu0 0
        %2784 = vmatpush1.bf16.msra.mxu0 0
        %2785 = vmatprep.subr.bf16.mxu0 0
        %2786 = vmatpush1.bf16.msra.mxu0 0
        %2787 = vmatprep.subr.bf16.mxu0 0
        %2788 = vmatpush1.bf16.msra.mxu0 0
        %2789 = vmatprep.subr.bf16.mxu0 0
        %2790 = vmatpush1.bf16.msra.mxu0 0
        %2791 = vmatprep.subr.bf16.mxu0 0
        %2792 = vmatpush1.bf16.msra.mxu0 0
        %2793 = vmatprep.subr.bf16.mxu0 0
        %2794 = vmatpush1.bf16.msra.mxu0 0
        %2795 = vmatprep.mubr.bf16.mxu0 0
        %2796 = vmatmul.mubr.bf16.gmra.mrb[0].mxu0 %v2761
        %v2797 = vpop.f32.mrb[0].mxu0
        %v2798 = vadd.f32 %v2758, %v2797
        %v2799 = vpop.f32.mrb[0].mxu0
        %v2800 = vpop.f32.mrb[0].mxu0
        %v2801 = vpop.f32.mrb[0].mxu0
        %2802 = vdwg.mxu0
        %v2803 = vmul.f32 %v2798, 0.5
        %v2804 = vmul.f32 %v2798, 0.70710677
        %v2805 = verf.f32.pop %v2804
        %v2806 = vadd.f32 %v2805, 1.0
        %v2807 = vmul.f32 %v2803, %v2806
        %v2808 = vpack.c.bf16 %v2807, %v2807
        %v2809 = vpack.c.bf16 %v2144, %v2143
        %v2810 = vpack.c.bf16 %v2146, %v2145
        %v2811 = vpack.c.bf16 %v2148, %v2147
        %v2812 = vpack.c.bf16 %v2150, %v2149
        %v2814 = vlaneseq
        %v2815 = vshrl.u32 %v2814, 7
        %v2816 = vsub.s32 0, %v2815
        %v2817 = vrot.slane %v2151, %v2816
        %v2820 = vsel %vm2054, %v2808, 0
        %2822 = vmatprep.subr.bf16.mxu0 0
        %2823 = vmatpush1.bf16.msra.mxu0 %v2809
        %2824 = vmatprep.subr.bf16.mxu0 0
        %2825 = vmatpush1.bf16.msra.mxu0 %v2810
        %2826 = vmatprep.subr.bf16.mxu0 0
        %2827 = vmatpush1.bf16.msra.mxu0 %v2811
        %2828 = vmatprep.subr.bf16.mxu0 0
        %2829 = vmatpush1.bf16.msra.mxu0 %v2812
        %2830 = vmatprep.subr.bf16.mxu0 0
        %2831 = vmatpush1.bf16.msra.mxu0 0
        %2832 = vmatprep.subr.bf16.mxu0 0
        %2833 = vmatpush1.bf16.msra.mxu0 0
        %2834 = vmatprep.subr.bf16.mxu0 0
        %2835 = vmatpush1.bf16.msra.mxu0 0
        %2836 = vmatprep.subr.bf16.mxu0 0
        %2837 = vmatpush1.bf16.msra.mxu0 0
        %2838 = vmatprep.subr.bf16.mxu0 0
        %2839 = vmatpush1.bf16.msra.mxu0 0
        %2840 = vmatprep.subr.bf16.mxu0 0
        %2841 = vmatpush1.bf16.msra.mxu0 0
        %2842 = vmatprep.subr.bf16.mxu0 0
        %2843 = vmatpush1.bf16.msra.mxu0 0
        %2844 = vmatprep.subr.bf16.mxu0 0
        %2845 = vmatpush1.bf16.msra.mxu0 0
        %2846 = vmatprep.subr.bf16.mxu0 0
        %2847 = vmatpush1.bf16.msra.mxu0 0
        %2848 = vmatprep.subr.bf16.mxu0 0
        %2849 = vmatpush1.bf16.msra.mxu0 0
        %2850 = vmatprep.subr.bf16.mxu0 0
        %2851 = vmatpush1.bf16.msra.mxu0 0
        %2852 = vmatprep.subr.bf16.mxu0 0
        %2853 = vmatpush1.bf16.msra.mxu0 0
        %2854 = vmatprep.mubr.bf16.mxu0 0
        %2855 = vmatmul.mubr.bf16.gmra.mrb[0].mxu0 %v2820
        %v2856 = vpop.f32.mrb[0].mxu0
        %v2857 = vadd.f32 %v2817, %v2856
        %v2858 = vpop.f32.mrb[0].mxu0
        %v2859 = vpop.f32.mrb[0].mxu0
        %v2860 = vpop.f32.mrb[0].mxu0
        %2861 = vdwg.mxu0
        %v2862 = vadd.f32 %v2857, %v2750
        %v2863 = vsel %vm1321, %v2862, 0.0
        %2864 = vadd.xlane.f32.xlu0 %v2863
        %v2865 = vpop.xlane.xlu0 %2864
        %v2866 = vmul.f32 %v2865, %v1325
        %v2867 = vsub.f32 %v2862, %v2866
        %v2868 = vmul.f32 %v2867, %v2867
        %v2869 = vsel %vm1321, %v2868, 0.0
        %2870 = vadd.xlane.f32.xlu0 %v2869
        %v2871 = vpop.xlane.xlu0 %2870
        %v2872 = vmul.f32 %v2871, %v1325
        %v2873 = vadd.f32 %v2872, 1e-12
        %v2874 = vrsqrt.pop %v2873
        %v2875 = vmul.f32 %v2867, %v2874
        %v2877 = vlaneseq
        %v2878 = vshrl.u32 %v2877, 7
        %v2879 = vsub.s32 0, %v2878
        %v2880 = vrot.slane %v2152, %v2879
        %v2882 = vmul.f32 %v2875, %v2880
        %v2884 = vlaneseq
        %v2885 = vshrl.u32 %v2884, 7
        %v2886 = vsub.s32 0, %v2885
        %v2887 = vrot.slane %v2153, %v2886
        %v2889 = vadd.f32 %v2882, %v2887
        %v2890 = vpack.c.bf16 %v2889, %v2889
        %v2891 = vpack.c.bf16 %v1304, %v1303
        %v2892 = vpack.c.bf16 %v1306, %v1305
        %v2894 = vlaneseq
        %v2895 = vshrl.u32 %v2894, 7
        %v2896 = vsub.s32 0, %v2895
        %v2897 = vrot.slane %v1307, %v2896
        %v2900 = vsel %vm1321, %v2890, 0
        %2902 = vmatprep.subr.bf16.mxu0 0
        %2903 = vmatpush1.bf16.msra.mxu0 %v2891
        %2904 = vmatprep.subr.bf16.mxu0 0
        %2905 = vmatpush1.bf16.msra.mxu0 %v2892
        %2906 = vmatprep.subr.bf16.mxu0 0
        %2907 = vmatpush1.bf16.msra.mxu0 0
        %2908 = vmatprep.subr.bf16.mxu0 0
        %2909 = vmatpush1.bf16.msra.mxu0 0
        %2910 = vmatprep.subr.bf16.mxu0 0
        %2911 = vmatpush1.bf16.msra.mxu0 0
        %2912 = vmatprep.subr.bf16.mxu0 0
        %2913 = vmatpush1.bf16.msra.mxu0 0
        %2914 = vmatprep.subr.bf16.mxu0 0
        %2915 = vmatpush1.bf16.msra.mxu0 0
        %2916 = vmatprep.subr.bf16.mxu0 0
        %2917 = vmatpush1.bf16.msra.mxu0 0
        %2918 = vmatprep.subr.bf16.mxu0 0
        %2919 = vmatpush1.bf16.msra.mxu0 0
        %2920 = vmatprep.subr.bf16.mxu0 0
        %2921 = vmatpush1.bf16.msra.mxu0 0
        %2922 = vmatprep.subr.bf16.mxu0 0
        %2923 = vmatpush1.bf16.msra.mxu0 0
        %2924 = vmatprep.subr.bf16.mxu0 0
        %2925 = vmatpush1.bf16.msra.mxu0 0
        %2926 = vmatprep.subr.bf16.mxu0 0
        %2927 = vmatpush1.bf16.msra.mxu0 0
        %2928 = vmatprep.subr.bf16.mxu0 0
        %2929 = vmatpush1.bf16.msra.mxu0 0
        %2930 = vmatprep.subr.bf16.mxu0 0
        %2931 = vmatpush1.bf16.msra.mxu0 0
        %2932 = vmatprep.subr.bf16.mxu0 0
        %2933 = vmatpush1.bf16.msra.mxu0 0
        %2934 = vmatprep.mubr.bf16.mxu0 0
        %2935 = vmatmul.mubr.bf16.gmra.mrb[0].mxu0 %v2900
        %v2936 = vpop.f32.mrb[0].mxu0
        %v2937 = vadd.f32 %v2897, %v2936
        %v2938 = vpop.f32.mrb[0].mxu0
        %v2939 = vpop.f32.mrb[0].mxu0
        %v2940 = vpop.f32.mrb[0].mxu0
        %2941 = vdwg.mxu0
        %v2942 = vtanh.pop %v2937
        %v2943 = vpack.c.bf16 %v2942, %v2942
        %v2944 = vpack.c.bf16 %v1309, %v1308
        %v2945 = vpack.c.bf16 %v1311, %v1310
        %v2947 = vlaneseq
        %v2948 = vshrl.u32 %v2947, 7
        %v2949 = vsub.s32 0, %v2948
        %v2950 = vrot.slane %v1312, %v2949
        %v2953 = vsel %vm1321, %v2943, 0
        %2955 = vmatprep.subr.bf16.mxu0 0
        %2956 = vmatpush1.bf16.msra.mxu0 %v2944
        %2957 = vmatprep.subr.bf16.mxu0 0
        %2958 = vmatpush1.bf16.msra.mxu0 %v2945
        %2959 = vmatprep.subr.bf16.mxu0 0
        %2960 = vmatpush1.bf16.msra.mxu0 0
        %2961 = vmatprep.subr.bf16.mxu0 0
        %2962 = vmatpush1.bf16.msra.mxu0 0
        %2963 = vmatprep.subr.bf16.mxu0 0
        %2964 = vmatpush1.bf16.msra.mxu0 0
        %2965 = vmatprep.subr.bf16.mxu0 0
        %2966 = vmatpush1.bf16.msra.mxu0 0
        %2967 = vmatprep.subr.bf16.mxu0 0
        %2968 = vmatpush1.bf16.msra.mxu0 0
        %2969 = vmatprep.subr.bf16.mxu0 0
        %2970 = vmatpush1.bf16.msra.mxu0 0
        %2971 = vmatprep.subr.bf16.mxu0 0
        %2972 = vmatpush1.bf16.msra.mxu0 0
        %2973 = vmatprep.subr.bf16.mxu0 0
        %2974 = vmatpush1.bf16.msra.mxu0 0
        %2975 = vmatprep.subr.bf16.mxu0 0
        %2976 = vmatpush1.bf16.msra.mxu0 0
        %2977 = vmatprep.subr.bf16.mxu0 0
        %2978 = vmatpush1.bf16.msra.mxu0 0
        %2979 = vmatprep.subr.bf16.mxu0 0
        %2980 = vmatpush1.bf16.msra.mxu0 0
        %2981 = vmatprep.subr.bf16.mxu0 0
        %2982 = vmatpush1.bf16.msra.mxu0 0
        %2983 = vmatprep.subr.bf16.mxu0 0
        %2984 = vmatpush1.bf16.msra.mxu0 0
        %2985 = vmatprep.subr.bf16.mxu0 0
        %2986 = vmatpush1.bf16.msra.mxu0 0
        %2987 = vmatprep.mubr.bf16.mxu0 0
        %2988 = vmatmul.mubr.bf16.gmra.mrb[0].mxu0 %v2953
        %v2989 = vpop.f32.mrb[0].mxu0
        %v2990 = vadd.f32 %v2950, %v2989
        %v2991 = vpop.f32.mrb[0].mxu0
        %v2992 = vpop.f32.mrb[0].mxu0
        %v2993 = vpop.f32.mrb[0].mxu0
        %2994 = vdwg.mxu0
        %2995 = vst [vmem:[%s1301] sm:$0x1] %v2990
        %s2996 = sand.u32 %s835, 1
        %s2997 = scalar_lea.sflag [#allocation5], %s2996
        %s2998 = sand.u32 %s835, 1
        %s2999 = scalar_lea.vmem [#allocation30], %s2998
        // Predicated region
        $region225: #{tpu_custom_call.1} parent=155 // pred_check
          %p3000 = pneg %p845
        $region226: #{tpu_custom_call.1} parent=155 // pred_check_branch
          %3002 = sbr.rel (%p3000) target = $region228
        $region227: #{tpu_custom_call.1} parent=155 // pred_region
          %s3004 = ssub.s32 16, 16
          %3005 = vsyncadd %s2997, %s3004
          %s3006 = smul.addr %s98, 16
          %s3007 = scalar_lea.hbm %s69, %s3006
          %s3009 = sshll.u32 %s2999, 4
          %s3010 = int_to_ptr.vmem [resolvable:$true] %s3009
          %3012 = dma.vmem_to_hbm [thread:$0]  %s3010, 16, %s3007, %s2997
        $region228: #{tpu_custom_call.1} parent=155 // pred_fallthru
          _
      $region156: #{tpu_custom_call.1} parent=5 // pred_fallthru
        _
      %p3013 = scmp.le.s32.totalorder 2, %s93
      // Predicated region
      $region229: #{tpu_custom_call.1} parent=5 // pred_check
        %p3014 = pneg %p3013
      $region230: #{tpu_custom_call.1} parent=5 // pred_check_branch
        %3016 = sbr.rel (%p3014) target = $region232
      $region231: #{tpu_custom_call.1} parent=5 // pred_region
        %s3017 = ssub.s32 %s93, 2
        // Predicated region
        $region233: #{tpu_custom_call.1} parent=231 // pred_check
          %p3018 = pneg %p851
        $region234: #{tpu_custom_call.1} parent=231 // pred_check_branch
          %3020 = sbr.rel (%p3018) target = $region236
        $region235: #{tpu_custom_call.1} parent=231 // pred_region
          %s3021 = sand.u32 %s836, 1
          %s3022 = scalar_lea.sflag [#allocation5], %s3021
          %s3023 = sand.u32 %s836, 1
          %s3024 = scalar_lea.vmem [#allocation30], %s3023
          %3025 = dma.done %s3022, 16
        $region236: #{tpu_custom_call.1} parent=231 // pred_fallthru
          _
      $region232: #{tpu_custom_call.1} parent=5 // pred_fallthru
        _
    $region6: #{tpu_custom_call.1} parent=1 // loop_footer
      %s97 = sadd.s32 1, %s93
    $region7: #{tpu_custom_call.1} parent=1 // loop_footer_branch
      %92 = sbr.rel target = $region3
    $region8: #{tpu_custom_call.1} parent=1 // loop_exit
      _
    %3026 = vsyncpa [#allocation4], 1
    %s3027 = scalar_lea.sflag [#allocation4], 1
    %3028 = vsyncpa %s3027, 1
    %3029 = vsyncpa [#allocation7], 1
    %s3030 = scalar_lea.sflag [#allocation7], 1
    %3031 = vsyncpa %s3030, 1
    %3032 = vsyncpa [#allocation10], 1
    %s3033 = scalar_lea.sflag [#allocation10], 1
    %3034 = vsyncpa %s3033, 1
    %3035 = vsyncpa [#allocation13], 1
    %3036 = vsyncpa [#allocation16], 1
    %3037 = vsyncpa [#allocation19], 1
    %3038 = vsyncpa [#allocation22], 1
    %3039 = vsyncpa [#allocation25], 1
    %3040 = vsyncpa [#allocation28], 1
    %3041 = vsyncpa [#allocation5], 1
    %s3042 = scalar_lea.sflag [#allocation5], 1
    %3043 = vsyncpa %s3042, 1

</llo_original>
